<compile_context>
chip_gen: v7x
topology: tpu7x:2x2x1
jax: 0.10.0
libtpu: 0.0.40
codegen_flags: <defaults>
</compile_context>

<pallas_src>
import jax
import jax.numpy as jnp
from jax import lax
from jax.experimental import pallas as pl
from jax.experimental.pallas import tpu as pltpu

# ---------------- small, module-consistent shapes ----------------
B = 2            # batch
B_PAD = 8        # batch padded to the 8-sublane tile
T = 8            # max_len (= attention step_dim)
TB = T * B_PAD   # time-major padded rows, row = t*B_PAD + b
E = 32           # embed_size
H = 16           # hidden_size
F = 2 * H        # bidirectional feature dim (hidden_size * 2)
VOCAB = 100      # num_vocab (small synthetic vocabulary)
F32 = jnp.float32


def _vmem():
    return pl.BlockSpec(memory_space=pltpu.MemorySpace.VMEM)


# =================== single fused forward kernel ===================
def fused_forward_kernel(ids_ref, perm_ref, emb_ref,
                         lwih_ref, lwhh_ref, lb_ref,
                         gwih_ref, gwhh_ref, gbih_ref, gbhh_ref,
                         attw_ref, attb_ref,
                         w1_ref, b1_ref, scale_ref, shift_ref,
                         w2_ref, b2_ref,
                         out_ref,
                         hl_scr, hg_scr):
    # ---------------- embedding (one-hot matmul gather) ----------------
    ids = ids_ref[...]                                            # [TB, 1], row = t*8 + b
    vocab_iota = lax.broadcasted_iota(jnp.int32, (TB, VOCAB), 1)
    onehot = (ids == vocab_iota).astype(F32)                      # [TB, VOCAB]
    x_emb = jnp.dot(onehot, emb_ref[...], preferred_element_type=F32)      # [TB, E]
    # TODO(synk): at the real 150k vocab keep the table in HBM
    # (BlockSpec(memory_space=pl.ANY)) and DMA-gather the T*B rows instead.

    # time-reversed copy of the input rows (feeds the backward-direction gates)
    perm = perm_ref[...]                                          # [TB, TB] block reversal
    x_rev = jnp.dot(perm, x_emb, preferred_element_type=F32)
    x_cat = jnp.concatenate([x_emb, x_rev], axis=1)               # [TB, 2E]

    # ---------------- biLSTM, fwd+bwd fused per step ----------------
    # fused gate columns: [i_f i_b | f_f f_b | o_f o_b | g_f g_b] = 8H = 128 lanes
    lwhh = lwhh_ref[...]                                          # [2H, 8H]
    gxl = jnp.dot(x_cat, lwih_ref[...],
                  preferred_element_type=F32) + lb_ref[...]       # [TB, 8H]

    hl = jnp.zeros((B_PAD, F), F32)                               # [h_f | h_b]
    cl = jnp.zeros((B_PAD, F), F32)
    for t in range(T):                                            # fully unrolled, aligned rows
        r0 = t * B_PAD
        gates = gxl[r0:r0 + B_PAD, :] + jnp.dot(hl, lwhh, preferred_element_type=F32)
        s = jax.nn.sigmoid(gates[:, 0:6 * H])     # ONE sigmoid: i,f,o of BOTH directions
        g = jnp.tanh(gates[:, 6 * H:8 * H])       # ONE tanh: g of BOTH directions
        cl = s[:, 2 * H:4 * H] * cl + s[:, 0:2 * H] * g
        hl = s[:, 4 * H:6 * H] * jnp.tanh(cl)
        hl_scr[r0:r0 + B_PAD, :] = hl             # step-order slab: [h_f(t) | h_b(T-1-t)]

    # rebuild natural time order / reversed order with one permutation matmul
    hl_step = hl_scr[...]                                         # [TB, F]
    q = jnp.dot(perm, hl_step, preferred_element_type=F32)
    lane = lax.broadcasted_iota(jnp.int32, (TB, F), 1)
    is_fwd = lane < H
    hl_nat = jnp.where(is_fwd, hl_step, q)        # [h_f(t) | h_b(t)]     (time t at block t)
    hl_rev = jnp.where(is_fwd, q, hl_step)        # hl_nat with time reversed

    # ---------------- biGRU, fwd+bwd fused per step ----------------
    # fused gate columns: [r_f r_b | z_f z_b | n_f n_b] = 6H = 96 lanes
    gwhh = gwhh_ref[...]                                          # [2H, 6H]
    gbhh = gbhh_ref[...]                                          # [1, 6H]
    xg_cat = jnp.concatenate([hl_nat, hl_rev], axis=1)            # [TB, 4H]
    gxg = jnp.dot(xg_cat, gwih_ref[...],
                  preferred_element_type=F32) + gbih_ref[...]     # [TB, 6H]

    hg = jnp.zeros((B_PAD, F), F32)
    for t in range(T):
        r0 = t * B_PAD
        grec = jnp.dot(hg, gwhh, preferred_element_type=F32) + gbhh
        gx = gxg[r0:r0 + B_PAD, :]
        rz = jax.nn.sigmoid(gx[:, 0:4 * H] + grec[:, 0:4 * H])    # ONE sigmoid (r,z both dirs)
        n = jnp.tanh(gx[:, 4 * H:6 * H] + rz[:, 0:2 * H] * grec[:, 4 * H:6 * H])
        z = rz[:, 2 * H:4 * H]
        hg = (1.0 - z) * n + z * hg
        hg_scr[r0:r0 + B_PAD, :] = hg

    hg_step = hg_scr[...]
    qg = jnp.dot(perm, hg_step, preferred_element_type=F32)
    hg_nat = jnp.where(is_fwd, hg_step, qg)

    # -------- both attentions via one MXU matmul, then avg/max pooling --------
    slab = jnp.concatenate([hl_nat, hg_nat], axis=1)              # [TB, 4H]
    e = jnp.tanh(jnp.dot(slab, attw_ref[...],
                         preferred_element_type=F32) + attb_ref[...])      # [TB, 2]
    a_un = jnp.exp(e)                             # tanh-bounded scores -> exp is safe
    totals = a_un[0:B_PAD, :]
    for t in range(1, T):
        totals = totals + a_un[t * B_PAD:(t + 1) * B_PAD, :]
    inv = pl.reciprocal(totals, approx=True)                      # [B_PAD, 2]
    a = a_un * jnp.concatenate([inv] * T, axis=0) + 1e-10         # a/sum(a) + 1e-10

    wsum = jnp.concatenate([hl_nat * a[:, 0:1], hg_nat * a[:, 1:2]], axis=1)   # [TB, 4H]
    attn = wsum[0:B_PAD, :]
    ssum = hg_nat[0:B_PAD, :]
    mx = hg_nat[0:B_PAD, :]
    for t in range(1, T):
        r0 = t * B_PAD
        attn = attn + wsum[r0:r0 + B_PAD, :]
        blk = hg_nat[r0:r0 + B_PAD, :]
        ssum = ssum + blk
        mx = jnp.maximum(mx, blk)

    # [attn_lstm | attn_gru | avg | max] -> [B_PAD, 8H] = 128 lanes (lane-dense)
    conc = jnp.concatenate([attn, ssum * (1.0 / T), mx], axis=1)

    # linear -> ReLU -> BatchNorm1d (eval, folded) -> linear out
    # TODO(synk): Dropout / Dropout2d are identity in eval mode and omitted.
    h1 = jnp.maximum(
        jnp.dot(conc, w1_ref[...], preferred_element_type=F32) + b1_ref[...], 0.0)
    hbn = h1 * scale_ref[...] + shift_ref[...]
    out_ref[...] = jnp.dot(hbn, w2_ref[...], preferred_element_type=F32) + b2_ref[...]


# =================== wrapper (single pallas_call) ===================
@jax.jit
def forward(x_ids, kp):
    # pad batch to the 8-sublane tile, lay rows out time-major (row = t*8 + b)
    ids = jnp.zeros((B_PAD, T), jnp.int32).at[:B, :].set(x_ids.astype(jnp.int32))
    ids_tm = ids.T.reshape(TB, 1)
    args = (ids_tm, kp['perm'], kp['emb'],
            kp['lstm_wih'], kp['lstm_whh'], kp['lstm_b'],
            kp['gru_wih'], kp['gru_whh'], kp['gru_bih'], kp['gru_bhh'],
            kp['att_w'], kp['att_b'],
            kp['w1'], kp['b1'], kp['bn_scale'], kp['bn_shift'],
            kp['w2'], kp['b2'])
    out = pl.pallas_call(
        fused_forward_kernel,
        out_shape=jax.ShapeDtypeStruct((B_PAD, 1), F32),
        in_specs=[_vmem()] * len(args),
        out_specs=_vmem(),
        scratch_shapes=[pltpu.VMEM((TB, F), F32),      # LSTM step-order hidden slab
                        pltpu.VMEM((TB, F), F32)],     # GRU  step-order hidden slab
        # TODO(synk): for large deployed batches add a grid over batch tiles with
        # dimension_semantics=("parallel",) so both v7x TensorCores are used.
    )(*args)
    return out[:B]


# =================== PyTorch-layout -> fused kernel layout ===================
def pack_params(raw):
    """Repack PyTorch-layout weights into the kernel's fused fwd|bwd layouts."""
    # ---- LSTM: columns [i_f i_b | f_f f_b | o_f o_b | g_f g_b] ----
    def lstm_parts(p):
        return p['w_ih'].T, p['w_hh'].T, (p['b_ih'] + p['b_hh'])[None, :]
    wf, uf, bf = lstm_parts(raw['lstm_f'])       # [E,4H], [H,4H], [1,4H] (gate order i,f,g,o)
    wb, ub, bb = lstm_parts(raw['lstm_b'])

    def fuse4(mf, mb):
        i_f, f_f, g_f, o_f = jnp.split(mf, 4, axis=-1)
        i_b, f_b, g_b, o_b = jnp.split(mb, 4, axis=-1)
        return jnp.concatenate([i_f, i_b, f_f, f_b, o_f, o_b, g_f, g_b], axis=-1)

    zE = jnp.zeros_like(wf)
    zH = jnp.zeros_like(uf)
    lstm_wih = fuse4(jnp.concatenate([wf, zE], 0), jnp.concatenate([zE, wb], 0))   # [2E, 8H]
    lstm_whh = fuse4(jnp.concatenate([uf, zH], 0), jnp.concatenate([zH, ub], 0))   # [2H, 8H]
    lstm_b = fuse4(bf, bb)                                                         # [1, 8H]

    # ---- GRU: columns [r_f r_b | z_f z_b | n_f n_b] ----
    def gru_parts(p):
        return p['w_ih'].T, p['w_hh'].T, p['b_ih'][None, :], p['b_hh'][None, :]
    gwf, guf, gbif, gbhf = gru_parts(raw['gru_f'])   # [2H,3H], [H,3H], [1,3H], [1,3H]
    gwb, gub, gbib, gbhb = gru_parts(raw['gru_b'])

    def fuse3(mf, mb):
        r_f, z_f, n_f = jnp.split(mf, 3, axis=-1)
        r_b, z_b, n_b = jnp.split(mb, 3, axis=-1)
        return jnp.concatenate([r_f, r_b, z_f, z_b, n_f, n_b], axis=-1)

    zF = jnp.zeros_like(gwf)
    zHg = jnp.zeros_like(guf)
    gru_wih = fuse3(jnp.concatenate([gwf, zF], 0), jnp.concatenate([zF, gwb], 0))   # [4H, 6H]
    gru_whh = fuse3(jnp.concatenate([guf, zHg], 0), jnp.concatenate([zHg, gub], 0))  # [2H, 6H]
    gru_bih = fuse3(gbif, gbib)                                                      # [1, 6H]
    gru_bhh = fuse3(gbhf, gbhb)                                                      # [1, 6H]

    # ---- both attentions as one block-diagonal [2F, 2] weight + per-row bias ----
    att_w = jnp.zeros((2 * F, 2), F32)
    att_w = att_w.at[0:F, 0].set(raw['attl_w'][:, 0])
    att_w = att_w.at[F:2 * F, 1].set(raw['attg_w'][:, 0])
    att_b = jnp.stack([jnp.repeat(raw['attl_b'], B_PAD),
                       jnp.repeat(raw['attg_b'], B_PAD)], axis=1)     # [TB, 2]

    # ---- block time-reversal permutation: row t*8+b -> row (T-1-t)*8+b ----
    row = jnp.arange(TB)
    rev = (T - 1 - row // B_PAD) * B_PAD + row % B_PAD
    perm = jnp.zeros((TB, TB), F32).at[row, rev].set(1.0)

    # ---- eval BatchNorm folded to scale/shift ----
    eps = 1e-5
    bn_scale = raw['bn_gamma'] / jnp.sqrt(raw['bn_var'] + eps)
    bn_shift = raw['bn_beta'] - raw['bn_mean'] * bn_scale

    return dict(perm=perm, emb=raw['emb'],
                lstm_wih=lstm_wih, lstm_whh=lstm_whh, lstm_b=lstm_b,
                gru_wih=gru_wih, gru_whh=gru_whh, gru_bih=gru_bih, gru_bhh=gru_bhh,
                att_w=att_w, att_b=att_b,
                w1=raw['w1'], b1=raw['b1'], bn_scale=bn_scale, bn_shift=bn_shift,
                w2=raw['w2'], b2=raw['b2'])


# =================== pure-JAX reference (PyTorch semantics) ===================
def reference_forward(x_ids, raw):
    x = raw['emb'][x_ids]                                  # [B, T, E]

    def lstm_dir(seq, p):
        h = jnp.zeros((seq.shape[0], H), F32)
        c = jnp.zeros((seq.shape[0], H), F32)
        outs = []
        for t in range(T):
            gates = seq[:, t] @ p['w_ih'].T + p['b_ih'] + h @ p['w_hh'].T + p['b_hh']
            i = jax.nn.sigmoid(gates[:, 0:H])
            f = jax.nn.sigmoid(gates[:, H:2 * H])
            g = jnp.tanh(gates[:, 2 * H:3 * H])
            o = jax.nn.sigmoid(gates[:, 3 * H:4 * H])
            c = f * c + i * g
            h = o * jnp.tanh(c)
            outs.append(h)
        return jnp.stack(outs, axis=1)

    h_lstm = jnp.concatenate(
        [lstm_dir(x, raw['lstm_f']),
         lstm_dir(x[:, ::-1], raw['lstm_b'])[:, ::-1]], axis=-1)       # [B, T, 2H]

    def gru_dir(seq, p):
        h = jnp.zeros((seq.shape[0], H), F32)
        outs = []
        for t in range(T):
            gi = seq[:, t] @ p['w_ih'].T + p['b_ih']
            gh = h @ p['w_hh'].T + p['b_hh']
            r = jax.nn.sigmoid(gi[:, 0:H] + gh[:, 0:H])
            z = jax.nn.sigmoid(gi[:, H:2 * H] + gh[:, H:2 * H])
            n = jnp.tanh(gi[:, 2 * H:3 * H] + r * gh[:, 2 * H:3 * H])
            h = (1.0 - z) * n + z * h
            outs.append(h)
        return jnp.stack(outs, axis=1)

    h_gru = jnp.concatenate(
        [gru_dir(h_lstm, raw['gru_f']),
         gru_dir(h_lstm[:, ::-1], raw['gru_b'])[:, ::-1]], axis=-1)    # [B, T, 2H]

    def attention(hx, w, b):
        e = jnp.tanh(jnp.squeeze(hx @ w, -1) + b[None, :])   # [B, T]
        a = jnp.exp(e)
        a = a / jnp.sum(a, axis=1, keepdims=True) + 1e-10
        return jnp.sum(hx * a[..., None], axis=1)            # [B, 2H]

    attn_l = attention(h_lstm, raw['attl_w'], raw['attl_b'])
    attn_g = attention(h_gru, raw['attg_w'], raw['attg_b'])
    avg = jnp.mean(h_gru, axis=1)
    mx = jnp.max(h_gru, axis=1)
    conc = jnp.concatenate([attn_l, attn_g, avg, mx], axis=1)          # [B, 8H]

    h1 = jnp.maximum(conc @ raw['w1'] + raw['b1'], 0.0)
    eps = 1e-5
    hbn = (h1 - raw['bn_mean']) / jnp.sqrt(raw['bn_var'] + eps) * raw['bn_gamma'] + raw['bn_beta']
    return hbn @ raw['w2'] + raw['b2']


if __name__ == "__main__":
    key = jax.random.PRNGKey(0)
    ks = iter(jax.random.split(key, 64))

    def rnd(shape, s=0.1):
        return jax.random.normal(next(ks), shape, dtype=F32) * s

    # PyTorch-layout parameters (gate orders i,f,g,o / r,z,n), packed below.
    raw = dict(
        emb=rnd((VOCAB, E), 0.5),          # frozen embedding (stand-in for mean(glove, para))
        lstm_f=dict(w_ih=rnd((4 * H, E)), w_hh=rnd((4 * H, H)),
                    b_ih=rnd((4 * H,), 0.05), b_hh=rnd((4 * H,), 0.05)),
        lstm_b=dict(w_ih=rnd((4 * H, E)), w_hh=rnd((4 * H, H)),
                    b_ih=rnd((4 * H,), 0.05), b_hh=rnd((4 * H,), 0.05)),
        gru_f=dict(w_ih=rnd((3 * H, F)), w_hh=rnd((3 * H, H)),
                   b_ih=rnd((3 * H,), 0.05), b_hh=rnd((3 * H,), 0.05)),
        gru_b=dict(w_ih=rnd((3 * H, F)), w_hh=rnd((3 * H, H)),
                   b_ih=rnd((3 * H,), 0.05), b_hh=rnd((3 * H,), 0.05)),
        attl_w=rnd((F, 1), 0.2), attl_b=rnd((T,), 0.05),
        attg_w=rnd((F, 1), 0.2), attg_b=rnd((T,), 0.05),
        w1=rnd((8 * H, 16)), b1=rnd((1, 16), 0.05),
        bn_gamma=1.0 + rnd((1, 16), 0.1), bn_beta=rnd((1, 16), 0.1),
        bn_mean=rnd((1, 16), 0.05), bn_var=1.0 + jnp.abs(rnd((1, 16), 0.1)),
        w2=rnd((16, 1)), b2=rnd((1, 1), 0.05),
    )
    kp = pack_params(raw)
    x_ids = jax.random.randint(next(ks), (B, T), 0, VOCAB, dtype=jnp.int32)

    out = forward(x_ids, kp)
    out = jax.block_until_ready(out)
    assert out.shape == (B, 1) and out.dtype == F32

    # pure-JAX reference check (guards the fused fwd/bwd gate repacking)
    with jax.default_matmul_precision("float32"):
        ref = jax.block_until_ready(jax.jit(reference_forward)(x_ids, raw))
    err = float(jnp.max(jnp.abs(out - ref)))
    assert err < 5e-3, f"kernel vs reference mismatch: max abs err = {err}"
    print("KERNEL_OK")
</pallas_src>

<mosaic_0001>
module attributes {stable_mosaic.version = 11 : i64} {
  func.func @fused_forward_kernel(%arg0: memref<64x1xi32, #tpu.memory_space<vmem>>, %arg1: memref<64x64xf32, #tpu.memory_space<vmem>>, %arg2: memref<100x32xf32, #tpu.memory_space<vmem>>, %arg3: memref<64x128xf32, #tpu.memory_space<vmem>>, %arg4: memref<32x128xf32, #tpu.memory_space<vmem>>, %arg5: memref<1x128xf32, #tpu.memory_space<vmem>>, %arg6: memref<64x96xf32, #tpu.memory_space<vmem>>, %arg7: memref<32x96xf32, #tpu.memory_space<vmem>>, %arg8: memref<1x96xf32, #tpu.memory_space<vmem>>, %arg9: memref<1x96xf32, #tpu.memory_space<vmem>>, %arg10: memref<64x2xf32, #tpu.memory_space<vmem>>, %arg11: memref<64x2xf32, #tpu.memory_space<vmem>>, %arg12: memref<128x16xf32, #tpu.memory_space<vmem>>, %arg13: memref<1x16xf32, #tpu.memory_space<vmem>>, %arg14: memref<1x16xf32, #tpu.memory_space<vmem>>, %arg15: memref<1x16xf32, #tpu.memory_space<vmem>>, %arg16: memref<16x1xf32, #tpu.memory_space<vmem>>, %arg17: memref<1x1xf32, #tpu.memory_space<vmem>>, %arg18: memref<8x1xf32, #tpu.memory_space<vmem>>, %arg19: memref<64x32xf32, #tpu.memory_space<vmem>>, %arg20: memref<64x32xf32, #tpu.memory_space<vmem>>) attributes {dimension_semantics = [], scalar_prefetch = 0 : i64, scratch_operands = 2 : i64, tpu.core_type = #tpu.core_type<tc>} {
    %c0 = arith.constant 0 : index
    %c0_0 = arith.constant 0 : index
    %0 = vector.load %arg0[%c0, %c0_0] : memref<64x1xi32, #tpu.memory_space<vmem>>, vector<64x1xi32>
    %1 = tpu.iota {dimensions = array<i32: 1>} : vector<64x100xi32>
    %2 = vector.broadcast %0 : vector<64x1xi32> to vector<64x100xi32>
    %3 = arith.cmpi eq, %2, %1 : vector<64x100xi32>
    %4 = arith.extui %3 : vector<64x100xi1> to vector<64x100xi32>
    %5 = arith.sitofp %4 : vector<64x100xi32> to vector<64x100xf32>
    %c0_1 = arith.constant 0 : index
    %c0_2 = arith.constant 0 : index
    %6 = vector.load %arg2[%c0_1, %c0_2] : memref<100x32xf32, #tpu.memory_space<vmem>>, vector<100x32xf32>
    %cst = arith.constant dense<0.000000e+00> : vector<64x32xf32>
    %7 = tpu.matmul %5, %6, %cst {dimension_numbers = #tpu.dot_dimension_numbers<[1], [0], [0], [1], [0, 0, 1, 1], [], []>} : vector<64x100xf32>, vector<100x32xf32>, vector<64x32xf32> -> vector<64x32xf32>
    %c0_3 = arith.constant 0 : index
    %c0_4 = arith.constant 0 : index
    %8 = vector.load %arg1[%c0_3, %c0_4] : memref<64x64xf32, #tpu.memory_space<vmem>>, vector<64x64xf32>
    %cst_5 = arith.constant dense<0.000000e+00> : vector<64x32xf32>
    %9 = tpu.matmul %8, %7, %cst_5 {dimension_numbers = #tpu.dot_dimension_numbers<[1], [0], [0], [1], [0, 0, 1, 1], [], []>} : vector<64x64xf32>, vector<64x32xf32>, vector<64x32xf32> -> vector<64x32xf32>
    %10 = tpu.concatenate %7, %9 in 1 : vector<64x32xf32>, vector<64x32xf32> -> vector<64x64xf32>
    %c0_6 = arith.constant 0 : index
    %c0_7 = arith.constant 0 : index
    %11 = vector.load %arg4[%c0_6, %c0_7] : memref<32x128xf32, #tpu.memory_space<vmem>>, vector<32x128xf32>
    %c0_8 = arith.constant 0 : index
    %c0_9 = arith.constant 0 : index
    %12 = vector.load %arg3[%c0_8, %c0_9] : memref<64x128xf32, #tpu.memory_space<vmem>>, vector<64x128xf32>
    %cst_10 = arith.constant dense<0.000000e+00> : vector<64x128xf32>
    %13 = tpu.matmul %10, %12, %cst_10 {dimension_numbers = #tpu.dot_dimension_numbers<[1], [0], [0], [1], [0, 0, 1, 1], [], []>} : vector<64x64xf32>, vector<64x128xf32>, vector<64x128xf32> -> vector<64x128xf32>
    %c0_11 = arith.constant 0 : index
    %c0_12 = arith.constant 0 : index
    %14 = vector.load %arg5[%c0_11, %c0_12] : memref<1x128xf32, #tpu.memory_space<vmem>>, vector<1x128xf32>
    %15 = vector.broadcast %14 : vector<1x128xf32> to vector<64x128xf32>
    %16 = arith.addf %13, %15 : vector<64x128xf32>
    %cst_13 = arith.constant 0.000000e+00 : f32
    %17 = vector.broadcast %cst_13 : f32 to vector<8x32xf32>
    %cst_14 = arith.constant 0.000000e+00 : f32
    %18 = vector.broadcast %cst_14 : f32 to vector<8x32xf32>
    %19 = vector.extract_strided_slice %16 {offsets = [0, 0], sizes = [8, 128], strides = [1, 1]} : vector<64x128xf32> to vector<8x128xf32>
    %cst_15 = arith.constant dense<0.000000e+00> : vector<8x128xf32>
    %20 = tpu.matmul %17, %11, %cst_15 {dimension_numbers = #tpu.dot_dimension_numbers<[1], [0], [0], [1], [0, 0, 1, 1], [], []>} : vector<8x32xf32>, vector<32x128xf32>, vector<8x128xf32> -> vector<8x128xf32>
    %21 = arith.addf %19, %20 : vector<8x128xf32>
    %22 = vector.extract_strided_slice %21 {offsets = [0, 0], sizes = [8, 96], strides = [1, 1]} : vector<8x128xf32> to vector<8x96xf32>
    %23 = arith.negf %22 : vector<8x96xf32>
    %24 = math.exp %23 : vector<8x96xf32>
    %cst_16 = arith.constant 1.000000e+00 : f32
    %25 = vector.broadcast %cst_16 : f32 to vector<8x96xf32>
    %26 = arith.addf %25, %24 : vector<8x96xf32>
    %27 = arith.divf %25, %26 : vector<8x96xf32>
    %28 = vector.extract_strided_slice %21 {offsets = [0, 96], sizes = [8, 32], strides = [1, 1]} : vector<8x128xf32> to vector<8x32xf32>
    %29 = math.tanh %28 : vector<8x32xf32>
    %30 = vector.extract_strided_slice %27 {offsets = [0, 32], sizes = [8, 32], strides = [1, 1]} : vector<8x96xf32> to vector<8x32xf32>
    %31 = arith.mulf %30, %18 : vector<8x32xf32>
    %32 = vector.extract_strided_slice %27 {offsets = [0, 0], sizes = [8, 32], strides = [1, 1]} : vector<8x96xf32> to vector<8x32xf32>
    %33 = arith.mulf %32, %29 : vector<8x32xf32>
    %34 = arith.addf %31, %33 : vector<8x32xf32>
    %35 = vector.extract_strided_slice %27 {offsets = [0, 64], sizes = [8, 32], strides = [1, 1]} : vector<8x96xf32> to vector<8x32xf32>
    %36 = math.tanh %34 : vector<8x32xf32>
    %37 = arith.mulf %35, %36 : vector<8x32xf32>
    %c0_17 = arith.constant 0 : index
    %c0_18 = arith.constant 0 : index
    %38 = vector.load %arg19[%c0_17, %c0_18] : memref<64x32xf32, #tpu.memory_space<vmem>>, vector<8x32xf32>
    tpu.vector_store %arg19[%c0_17, %c0_18], %37 {strides = array<i32>} : memref<64x32xf32, #tpu.memory_space<vmem>>, vector<8x32xf32>,
    %39 = vector.extract_strided_slice %16 {offsets = [8, 0], sizes = [8, 128], strides = [1, 1]} : vector<64x128xf32> to vector<8x128xf32>
    %cst_19 = arith.constant dense<0.000000e+00> : vector<8x128xf32>
    %40 = tpu.matmul %37, %11, %cst_19 {dimension_numbers = #tpu.dot_dimension_numbers<[1], [0], [0], [1], [0, 0, 1, 1], [], []>} : vector<8x32xf32>, vector<32x128xf32>, vector<8x128xf32> -> vector<8x128xf32>
    %41 = arith.addf %39, %40 : vector<8x128xf32>
    %42 = vector.extract_strided_slice %41 {offsets = [0, 0], sizes = [8, 96], strides = [1, 1]} : vector<8x128xf32> to vector<8x96xf32>
    %43 = arith.negf %42 : vector<8x96xf32>
    %44 = math.exp %43 : vector<8x96xf32>
    %cst_20 = arith.constant 1.000000e+00 : f32
    %45 = vector.broadcast %cst_20 : f32 to vector<8x96xf32>
    %46 = arith.addf %45, %44 : vector<8x96xf32>
    %47 = arith.divf %45, %46 : vector<8x96xf32>
    %48 = vector.extract_strided_slice %41 {offsets = [0, 96], sizes = [8, 32], strides = [1, 1]} : vector<8x128xf32> to vector<8x32xf32>
    %49 = math.tanh %48 : vector<8x32xf32>
    %50 = vector.extract_strided_slice %47 {offsets = [0, 32], sizes = [8, 32], strides = [1, 1]} : vector<8x96xf32> to vector<8x32xf32>
    %51 = arith.mulf %50, %34 : vector<8x32xf32>
    %52 = vector.extract_strided_slice %47 {offsets = [0, 0], sizes = [8, 32], strides = [1, 1]} : vector<8x96xf32> to vector<8x32xf32>
    %53 = arith.mulf %52, %49 : vector<8x32xf32>
    %54 = arith.addf %51, %53 : vector<8x32xf32>
    %55 = vector.extract_strided_slice %47 {offsets = [0, 64], sizes = [8, 32], strides = [1, 1]} : vector<8x96xf32> to vector<8x32xf32>
    %56 = math.tanh %54 : vector<8x32xf32>
    %57 = arith.mulf %55, %56 : vector<8x32xf32>
    %c8 = arith.constant 8 : index
    %c0_21 = arith.constant 0 : index
    %58 = vector.load %arg19[%c8, %c0_21] : memref<64x32xf32, #tpu.memory_space<vmem>>, vector<8x32xf32>
    tpu.vector_store %arg19[%c8, %c0_21], %57 {strides = array<i32>} : memref<64x32xf32, #tpu.memory_space<vmem>>, vector<8x32xf32>,
    %59 = vector.extract_strided_slice %16 {offsets = [16, 0], sizes = [8, 128], strides = [1, 1]} : vector<64x128xf32> to vector<8x128xf32>
    %cst_22 = arith.constant dense<0.000000e+00> : vector<8x128xf32>
    %60 = tpu.matmul %57, %11, %cst_22 {dimension_numbers = #tpu.dot_dimension_numbers<[1], [0], [0], [1], [0, 0, 1, 1], [], []>} : vector<8x32xf32>, vector<32x128xf32>, vector<8x128xf32> -> vector<8x128xf32>
    %61 = arith.addf %59, %60 : vector<8x128xf32>
    %62 = vector.extract_strided_slice %61 {offsets = [0, 0], sizes = [8, 96], strides = [1, 1]} : vector<8x128xf32> to vector<8x96xf32>
    %63 = arith.negf %62 : vector<8x96xf32>
    %64 = math.exp %63 : vector<8x96xf32>
    %cst_23 = arith.constant 1.000000e+00 : f32
    %65 = vector.broadcast %cst_23 : f32 to vector<8x96xf32>
    %66 = arith.addf %65, %64 : vector<8x96xf32>
    %67 = arith.divf %65, %66 : vector<8x96xf32>
    %68 = vector.extract_strided_slice %61 {offsets = [0, 96], sizes = [8, 32], strides = [1, 1]} : vector<8x128xf32> to vector<8x32xf32>
    %69 = math.tanh %68 : vector<8x32xf32>
    %70 = vector.extract_strided_slice %67 {offsets = [0, 32], sizes = [8, 32], strides = [1, 1]} : vector<8x96xf32> to vector<8x32xf32>
    %71 = arith.mulf %70, %54 : vector<8x32xf32>
    %72 = vector.extract_strided_slice %67 {offsets = [0, 0], sizes = [8, 32], strides = [1, 1]} : vector<8x96xf32> to vector<8x32xf32>
    %73 = arith.mulf %72, %69 : vector<8x32xf32>
    %74 = arith.addf %71, %73 : vector<8x32xf32>
    %75 = vector.extract_strided_slice %67 {offsets = [0, 64], sizes = [8, 32], strides = [1, 1]} : vector<8x96xf32> to vector<8x32xf32>
    %76 = math.tanh %74 : vector<8x32xf32>
    %77 = arith.mulf %75, %76 : vector<8x32xf32>
    %c16 = arith.constant 16 : index
    %c0_24 = arith.constant 0 : index
    %78 = vector.load %arg19[%c16, %c0_24] : memref<64x32xf32, #tpu.memory_space<vmem>>, vector<8x32xf32>
    tpu.vector_store %arg19[%c16, %c0_24], %77 {strides = array<i32>} : memref<64x32xf32, #tpu.memory_space<vmem>>, vector<8x32xf32>,
    %79 = vector.extract_strided_slice %16 {offsets = [24, 0], sizes = [8, 128], strides = [1, 1]} : vector<64x128xf32> to vector<8x128xf32>
    %cst_25 = arith.constant dense<0.000000e+00> : vector<8x128xf32>
    %80 = tpu.matmul %77, %11, %cst_25 {dimension_numbers = #tpu.dot_dimension_numbers<[1], [0], [0], [1], [0, 0, 1, 1], [], []>} : vector<8x32xf32>, vector<32x128xf32>, vector<8x128xf32> -> vector<8x128xf32>
    %81 = arith.addf %79, %80 : vector<8x128xf32>
    %82 = vector.extract_strided_slice %81 {offsets = [0, 0], sizes = [8, 96], strides = [1, 1]} : vector<8x128xf32> to vector<8x96xf32>
    %83 = arith.negf %82 : vector<8x96xf32>
    %84 = math.exp %83 : vector<8x96xf32>
    %cst_26 = arith.constant 1.000000e+00 : f32
    %85 = vector.broadcast %cst_26 : f32 to vector<8x96xf32>
    %86 = arith.addf %85, %84 : vector<8x96xf32>
    %87 = arith.divf %85, %86 : vector<8x96xf32>
    %88 = vector.extract_strided_slice %81 {offsets = [0, 96], sizes = [8, 32], strides = [1, 1]} : vector<8x128xf32> to vector<8x32xf32>
    %89 = math.tanh %88 : vector<8x32xf32>
    %90 = vector.extract_strided_slice %87 {offsets = [0, 32], sizes = [8, 32], strides = [1, 1]} : vector<8x96xf32> to vector<8x32xf32>
    %91 = arith.mulf %90, %74 : vector<8x32xf32>
    %92 = vector.extract_strided_slice %87 {offsets = [0, 0], sizes = [8, 32], strides = [1, 1]} : vector<8x96xf32> to vector<8x32xf32>
    %93 = arith.mulf %92, %89 : vector<8x32xf32>
    %94 = arith.addf %91, %93 : vector<8x32xf32>
    %95 = vector.extract_strided_slice %87 {offsets = [0, 64], sizes = [8, 32], strides = [1, 1]} : vector<8x96xf32> to vector<8x32xf32>
    %96 = math.tanh %94 : vector<8x32xf32>
    %97 = arith.mulf %95, %96 : vector<8x32xf32>
    %c24 = arith.constant 24 : index
    %c0_27 = arith.constant 0 : index
    %98 = vector.load %arg19[%c24, %c0_27] : memref<64x32xf32, #tpu.memory_space<vmem>>, vector<8x32xf32>
    tpu.vector_store %arg19[%c24, %c0_27], %97 {strides = array<i32>} : memref<64x32xf32, #tpu.memory_space<vmem>>, vector<8x32xf32>,
    %99 = vector.extract_strided_slice %16 {offsets = [32, 0], sizes = [8, 128], strides = [1, 1]} : vector<64x128xf32> to vector<8x128xf32>
    %cst_28 = arith.constant dense<0.000000e+00> : vector<8x128xf32>
    %100 = tpu.matmul %97, %11, %cst_28 {dimension_numbers = #tpu.dot_dimension_numbers<[1], [0], [0], [1], [0, 0, 1, 1], [], []>} : vector<8x32xf32>, vector<32x128xf32>, vector<8x128xf32> -> vector<8x128xf32>
    %101 = arith.addf %99, %100 : vector<8x128xf32>
    %102 = vector.extract_strided_slice %101 {offsets = [0, 0], sizes = [8, 96], strides = [1, 1]} : vector<8x128xf32> to vector<8x96xf32>
    %103 = arith.negf %102 : vector<8x96xf32>
    %104 = math.exp %103 : vector<8x96xf32>
    %cst_29 = arith.constant 1.000000e+00 : f32
    %105 = vector.broadcast %cst_29 : f32 to vector<8x96xf32>
    %106 = arith.addf %105, %104 : vector<8x96xf32>
    %107 = arith.divf %105, %106 : vector<8x96xf32>
    %108 = vector.extract_strided_slice %101 {offsets = [0, 96], sizes = [8, 32], strides = [1, 1]} : vector<8x128xf32> to vector<8x32xf32>
    %109 = math.tanh %108 : vector<8x32xf32>
    %110 = vector.extract_strided_slice %107 {offsets = [0, 32], sizes = [8, 32], strides = [1, 1]} : vector<8x96xf32> to vector<8x32xf32>
    %111 = arith.mulf %110, %94 : vector<8x32xf32>
    %112 = vector.extract_strided_slice %107 {offsets = [0, 0], sizes = [8, 32], strides = [1, 1]} : vector<8x96xf32> to vector<8x32xf32>
    %113 = arith.mulf %112, %109 : vector<8x32xf32>
    %114 = arith.addf %111, %113 : vector<8x32xf32>
    %115 = vector.extract_strided_slice %107 {offsets = [0, 64], sizes = [8, 32], strides = [1, 1]} : vector<8x96xf32> to vector<8x32xf32>
    %116 = math.tanh %114 : vector<8x32xf32>
    %117 = arith.mulf %115, %116 : vector<8x32xf32>
    %c32 = arith.constant 32 : index
    %c0_30 = arith.constant 0 : index
    %118 = vector.load %arg19[%c32, %c0_30] : memref<64x32xf32, #tpu.memory_space<vmem>>, vector<8x32xf32>
    tpu.vector_store %arg19[%c32, %c0_30], %117 {strides = array<i32>} : memref<64x32xf32, #tpu.memory_space<vmem>>, vector<8x32xf32>,
    %119 = vector.extract_strided_slice %16 {offsets = [40, 0], sizes = [8, 128], strides = [1, 1]} : vector<64x128xf32> to vector<8x128xf32>
    %cst_31 = arith.constant dense<0.000000e+00> : vector<8x128xf32>
    %120 = tpu.matmul %117, %11, %cst_31 {dimension_numbers = #tpu.dot_dimension_numbers<[1], [0], [0], [1], [0, 0, 1, 1], [], []>} : vector<8x32xf32>, vector<32x128xf32>, vector<8x128xf32> -> vector<8x128xf32>
    %121 = arith.addf %119, %120 : vector<8x128xf32>
    %122 = vector.extract_strided_slice %121 {offsets = [0, 0], sizes = [8, 96], strides = [1, 1]} : vector<8x128xf32> to vector<8x96xf32>
    %123 = arith.negf %122 : vector<8x96xf32>
    %124 = math.exp %123 : vector<8x96xf32>
    %cst_32 = arith.constant 1.000000e+00 : f32
    %125 = vector.broadcast %cst_32 : f32 to vector<8x96xf32>
    %126 = arith.addf %125, %124 : vector<8x96xf32>
    %127 = arith.divf %125, %126 : vector<8x96xf32>
    %128 = vector.extract_strided_slice %121 {offsets = [0, 96], sizes = [8, 32], strides = [1, 1]} : vector<8x128xf32> to vector<8x32xf32>
    %129 = math.tanh %128 : vector<8x32xf32>
    %130 = vector.extract_strided_slice %127 {offsets = [0, 32], sizes = [8, 32], strides = [1, 1]} : vector<8x96xf32> to vector<8x32xf32>
    %131 = arith.mulf %130, %114 : vector<8x32xf32>
    %132 = vector.extract_strided_slice %127 {offsets = [0, 0], sizes = [8, 32], strides = [1, 1]} : vector<8x96xf32> to vector<8x32xf32>
    %133 = arith.mulf %132, %129 : vector<8x32xf32>
    %134 = arith.addf %131, %133 : vector<8x32xf32>
    %135 = vector.extract_strided_slice %127 {offsets = [0, 64], sizes = [8, 32], strides = [1, 1]} : vector<8x96xf32> to vector<8x32xf32>
    %136 = math.tanh %134 : vector<8x32xf32>
    %137 = arith.mulf %135, %136 : vector<8x32xf32>
    %c40 = arith.constant 40 : index
    %c0_33 = arith.constant 0 : index
    %138 = vector.load %arg19[%c40, %c0_33] : memref<64x32xf32, #tpu.memory_space<vmem>>, vector<8x32xf32>
    tpu.vector_store %arg19[%c40, %c0_33], %137 {strides = array<i32>} : memref<64x32xf32, #tpu.memory_space<vmem>>, vector<8x32xf32>,
    %139 = vector.extract_strided_slice %16 {offsets = [48, 0], sizes = [8, 128], strides = [1, 1]} : vector<64x128xf32> to vector<8x128xf32>
    %cst_34 = arith.constant dense<0.000000e+00> : vector<8x128xf32>
    %140 = tpu.matmul %137, %11, %cst_34 {dimension_numbers = #tpu.dot_dimension_numbers<[1], [0], [0], [1], [0, 0, 1, 1], [], []>} : vector<8x32xf32>, vector<32x128xf32>, vector<8x128xf32> -> vector<8x128xf32>
    %141 = arith.addf %139, %140 : vector<8x128xf32>
    %142 = vector.extract_strided_slice %141 {offsets = [0, 0], sizes = [8, 96], strides = [1, 1]} : vector<8x128xf32> to vector<8x96xf32>
    %143 = arith.negf %142 : vector<8x96xf32>
    %144 = math.exp %143 : vector<8x96xf32>
    %cst_35 = arith.constant 1.000000e+00 : f32
    %145 = vector.broadcast %cst_35 : f32 to vector<8x96xf32>
    %146 = arith.addf %145, %144 : vector<8x96xf32>
    %147 = arith.divf %145, %146 : vector<8x96xf32>
    %148 = vector.extract_strided_slice %141 {offsets = [0, 96], sizes = [8, 32], strides = [1, 1]} : vector<8x128xf32> to vector<8x32xf32>
    %149 = math.tanh %148 : vector<8x32xf32>
    %150 = vector.extract_strided_slice %147 {offsets = [0, 32], sizes = [8, 32], strides = [1, 1]} : vector<8x96xf32> to vector<8x32xf32>
    %151 = arith.mulf %150, %134 : vector<8x32xf32>
    %152 = vector.extract_strided_slice %147 {offsets = [0, 0], sizes = [8, 32], strides = [1, 1]} : vector<8x96xf32> to vector<8x32xf32>
    %153 = arith.mulf %152, %149 : vector<8x32xf32>
    %154 = arith.addf %151, %153 : vector<8x32xf32>
    %155 = vector.extract_strided_slice %147 {offsets = [0, 64], sizes = [8, 32], strides = [1, 1]} : vector<8x96xf32> to vector<8x32xf32>
    %156 = math.tanh %154 : vector<8x32xf32>
    %157 = arith.mulf %155, %156 : vector<8x32xf32>
    %c48 = arith.constant 48 : index
    %c0_36 = arith.constant 0 : index
    %158 = vector.load %arg19[%c48, %c0_36] : memref<64x32xf32, #tpu.memory_space<vmem>>, vector<8x32xf32>
    tpu.vector_store %arg19[%c48, %c0_36], %157 {strides = array<i32>} : memref<64x32xf32, #tpu.memory_space<vmem>>, vector<8x32xf32>,
    %159 = vector.extract_strided_slice %16 {offsets = [56, 0], sizes = [8, 128], strides = [1, 1]} : vector<64x128xf32> to vector<8x128xf32>
    %cst_37 = arith.constant dense<0.000000e+00> : vector<8x128xf32>
    %160 = tpu.matmul %157, %11, %cst_37 {dimension_numbers = #tpu.dot_dimension_numbers<[1], [0], [0], [1], [0, 0, 1, 1], [], []>} : vector<8x32xf32>, vector<32x128xf32>, vector<8x128xf32> -> vector<8x128xf32>
    %161 = arith.addf %159, %160 : vector<8x128xf32>
    %162 = vector.extract_strided_slice %161 {offsets = [0, 0], sizes = [8, 96], strides = [1, 1]} : vector<8x128xf32> to vector<8x96xf32>
    %163 = arith.negf %162 : vector<8x96xf32>
    %164 = math.exp %163 : vector<8x96xf32>
    %cst_38 = arith.constant 1.000000e+00 : f32
    %165 = vector.broadcast %cst_38 : f32 to vector<8x96xf32>
    %166 = arith.addf %165, %164 : vector<8x96xf32>
    %167 = arith.divf %165, %166 : vector<8x96xf32>
    %168 = vector.extract_strided_slice %161 {offsets = [0, 96], sizes = [8, 32], strides = [1, 1]} : vector<8x128xf32> to vector<8x32xf32>
    %169 = math.tanh %168 : vector<8x32xf32>
    %170 = vector.extract_strided_slice %167 {offsets = [0, 32], sizes = [8, 32], strides = [1, 1]} : vector<8x96xf32> to vector<8x32xf32>
    %171 = arith.mulf %170, %154 : vector<8x32xf32>
    %172 = vector.extract_strided_slice %167 {offsets = [0, 0], sizes = [8, 32], strides = [1, 1]} : vector<8x96xf32> to vector<8x32xf32>
    %173 = arith.mulf %172, %169 : vector<8x32xf32>
    %174 = arith.addf %171, %173 : vector<8x32xf32>
    %175 = vector.extract_strided_slice %167 {offsets = [0, 64], sizes = [8, 32], strides = [1, 1]} : vector<8x96xf32> to vector<8x32xf32>
    %176 = math.tanh %174 : vector<8x32xf32>
    %177 = arith.mulf %175, %176 : vector<8x32xf32>
    %c56 = arith.constant 56 : index
    %c0_39 = arith.constant 0 : index
    %178 = vector.load %arg19[%c56, %c0_39] : memref<64x32xf32, #tpu.memory_space<vmem>>, vector<8x32xf32>
    tpu.vector_store %arg19[%c56, %c0_39], %177 {strides = array<i32>} : memref<64x32xf32, #tpu.memory_space<vmem>>, vector<8x32xf32>,
    %c0_40 = arith.constant 0 : index
    %c0_41 = arith.constant 0 : index
    %179 = vector.load %arg19[%c0_40, %c0_41] : memref<64x32xf32, #tpu.memory_space<vmem>>, vector<64x32xf32>
    %cst_42 = arith.constant dense<0.000000e+00> : vector<64x32xf32>
    %180 = tpu.matmul %8, %179, %cst_42 {dimension_numbers = #tpu.dot_dimension_numbers<[1], [0], [0], [1], [0, 0, 1, 1], [], []>} : vector<64x64xf32>, vector<64x32xf32>, vector<64x32xf32> -> vector<64x32xf32>
    %181 = tpu.iota {dimensions = array<i32: 1>} : vector<64x32xi32>
    %c16_i32 = arith.constant 16 : i32
    %182 = vector.broadcast %c16_i32 : i32 to vector<64x32xi32>
    %183 = arith.cmpi slt, %181, %182 : vector<64x32xi32>
    %184 = arith.select %183, %179, %180 : vector<64x32xi1>, vector<64x32xf32>
    %185 = arith.select %183, %180, %179 : vector<64x32xi1>, vector<64x32xf32>
    %c0_43 = arith.constant 0 : index
    %c0_44 = arith.constant 0 : index
    %186 = vector.load %arg7[%c0_43, %c0_44] : memref<32x96xf32, #tpu.memory_space<vmem>>, vector<32x96xf32>
    %c0_45 = arith.constant 0 : index
    %c0_46 = arith.constant 0 : index
    %187 = vector.load %arg9[%c0_45, %c0_46] : memref<1x96xf32, #tpu.memory_space<vmem>>, vector<1x96xf32>
    %188 = tpu.concatenate %184, %185 in 1 : vector<64x32xf32>, vector<64x32xf32> -> vector<64x64xf32>
    %c0_47 = arith.constant 0 : index
    %c0_48 = arith.constant 0 : index
    %189 = vector.load %arg6[%c0_47, %c0_48] : memref<64x96xf32, #tpu.memory_space<vmem>>, vector<64x96xf32>
    %cst_49 = arith.constant dense<0.000000e+00> : vector<64x96xf32>
    %190 = tpu.matmul %188, %189, %cst_49 {dimension_numbers = #tpu.dot_dimension_numbers<[1], [0], [0], [1], [0, 0, 1, 1], [], []>} : vector<64x64xf32>, vector<64x96xf32>, vector<64x96xf32> -> vector<64x96xf32>
    %c0_50 = arith.constant 0 : index
    %c0_51 = arith.constant 0 : index
    %191 = vector.load %arg8[%c0_50, %c0_51] : memref<1x96xf32, #tpu.memory_space<vmem>>, vector<1x96xf32>
    %192 = vector.broadcast %191 : vector<1x96xf32> to vector<64x96xf32>
    %193 = arith.addf %190, %192 : vector<64x96xf32>
    %cst_52 = arith.constant 0.000000e+00 : f32
    %194 = vector.broadcast %cst_52 : f32 to vector<8x32xf32>
    %cst_53 = arith.constant dense<0.000000e+00> : vector<8x96xf32>
    %195 = tpu.matmul %194, %186, %cst_53 {dimension_numbers = #tpu.dot_dimension_numbers<[1], [0], [0], [1], [0, 0, 1, 1], [], []>} : vector<8x32xf32>, vector<32x96xf32>, vector<8x96xf32> -> vector<8x96xf32>
    %196 = vector.broadcast %187 : vector<1x96xf32> to vector<8x96xf32>
    %197 = arith.addf %195, %196 : vector<8x96xf32>
    %198 = vector.extract_strided_slice %193 {offsets = [0, 0], sizes = [8, 96], strides = [1, 1]} : vector<64x96xf32> to vector<8x96xf32>
    %199 = vector.extract_strided_slice %198 {offsets = [0, 0], sizes = [8, 64], strides = [1, 1]} : vector<8x96xf32> to vector<8x64xf32>
    %200 = vector.extract_strided_slice %197 {offsets = [0, 0], sizes = [8, 64], strides = [1, 1]} : vector<8x96xf32> to vector<8x64xf32>
    %201 = arith.addf %199, %200 : vector<8x64xf32>
    %202 = arith.negf %201 : vector<8x64xf32>
    %203 = math.exp %202 : vector<8x64xf32>
    %cst_54 = arith.constant 1.000000e+00 : f32
    %204 = vector.broadcast %cst_54 : f32 to vector<8x64xf32>
    %205 = arith.addf %204, %203 : vector<8x64xf32>
    %206 = arith.divf %204, %205 : vector<8x64xf32>
    %207 = vector.extract_strided_slice %198 {offsets = [0, 64], sizes = [8, 32], strides = [1, 1]} : vector<8x96xf32> to vector<8x32xf32>
    %208 = vector.extract_strided_slice %206 {offsets = [0, 0], sizes = [8, 32], strides = [1, 1]} : vector<8x64xf32> to vector<8x32xf32>
    %209 = vector.extract_strided_slice %197 {offsets = [0, 64], sizes = [8, 32], strides = [1, 1]} : vector<8x96xf32> to vector<8x32xf32>
    %210 = arith.mulf %208, %209 : vector<8x32xf32>
    %211 = arith.addf %207, %210 : vector<8x32xf32>
    %212 = math.tanh %211 : vector<8x32xf32>
    %213 = vector.extract_strided_slice %206 {offsets = [0, 32], sizes = [8, 32], strides = [1, 1]} : vector<8x64xf32> to vector<8x32xf32>
    %cst_55 = arith.constant 1.000000e+00 : f32
    %214 = vector.broadcast %cst_55 : f32 to vector<8x32xf32>
    %215 = arith.subf %214, %213 : vector<8x32xf32>
    %216 = arith.mulf %215, %212 : vector<8x32xf32>
    %217 = arith.mulf %213, %194 : vector<8x32xf32>
    %218 = arith.addf %216, %217 : vector<8x32xf32>
    %c0_56 = arith.constant 0 : index
    %c0_57 = arith.constant 0 : index
    %219 = vector.load %arg20[%c0_56, %c0_57] : memref<64x32xf32, #tpu.memory_space<vmem>>, vector<8x32xf32>
    tpu.vector_store %arg20[%c0_56, %c0_57], %218 {strides = array<i32>} : memref<64x32xf32, #tpu.memory_space<vmem>>, vector<8x32xf32>,
    %cst_58 = arith.constant dense<0.000000e+00> : vector<8x96xf32>
    %220 = tpu.matmul %218, %186, %cst_58 {dimension_numbers = #tpu.dot_dimension_numbers<[1], [0], [0], [1], [0, 0, 1, 1], [], []>} : vector<8x32xf32>, vector<32x96xf32>, vector<8x96xf32> -> vector<8x96xf32>
    %221 = vector.broadcast %187 : vector<1x96xf32> to vector<8x96xf32>
    %222 = arith.addf %220, %221 : vector<8x96xf32>
    %223 = vector.extract_strided_slice %193 {offsets = [8, 0], sizes = [8, 96], strides = [1, 1]} : vector<64x96xf32> to vector<8x96xf32>
    %224 = vector.extract_strided_slice %223 {offsets = [0, 0], sizes = [8, 64], strides = [1, 1]} : vector<8x96xf32> to vector<8x64xf32>
    %225 = vector.extract_strided_slice %222 {offsets = [0, 0], sizes = [8, 64], strides = [1, 1]} : vector<8x96xf32> to vector<8x64xf32>
    %226 = arith.addf %224, %225 : vector<8x64xf32>
    %227 = arith.negf %226 : vector<8x64xf32>
    %228 = math.exp %227 : vector<8x64xf32>
    %cst_59 = arith.constant 1.000000e+00 : f32
    %229 = vector.broadcast %cst_59 : f32 to vector<8x64xf32>
    %230 = arith.addf %229, %228 : vector<8x64xf32>
    %231 = arith.divf %229, %230 : vector<8x64xf32>
    %232 = vector.extract_strided_slice %223 {offsets = [0, 64], sizes = [8, 32], strides = [1, 1]} : vector<8x96xf32> to vector<8x32xf32>
    %233 = vector.extract_strided_slice %231 {offsets = [0, 0], sizes = [8, 32], strides = [1, 1]} : vector<8x64xf32> to vector<8x32xf32>
    %234 = vector.extract_strided_slice %222 {offsets = [0, 64], sizes = [8, 32], strides = [1, 1]} : vector<8x96xf32> to vector<8x32xf32>
    %235 = arith.mulf %233, %234 : vector<8x32xf32>
    %236 = arith.addf %232, %235 : vector<8x32xf32>
    %237 = math.tanh %236 : vector<8x32xf32>
    %238 = vector.extract_strided_slice %231 {offsets = [0, 32], sizes = [8, 32], strides = [1, 1]} : vector<8x64xf32> to vector<8x32xf32>
    %cst_60 = arith.constant 1.000000e+00 : f32
    %239 = vector.broadcast %cst_60 : f32 to vector<8x32xf32>
    %240 = arith.subf %239, %238 : vector<8x32xf32>
    %241 = arith.mulf %240, %237 : vector<8x32xf32>
    %242 = arith.mulf %238, %218 : vector<8x32xf32>
    %243 = arith.addf %241, %242 : vector<8x32xf32>
    %c8_61 = arith.constant 8 : index
    %c0_62 = arith.constant 0 : index
    %244 = vector.load %arg20[%c8_61, %c0_62] : memref<64x32xf32, #tpu.memory_space<vmem>>, vector<8x32xf32>
    tpu.vector_store %arg20[%c8_61, %c0_62], %243 {strides = array<i32>} : memref<64x32xf32, #tpu.memory_space<vmem>>, vector<8x32xf32>,
    %cst_63 = arith.constant dense<0.000000e+00> : vector<8x96xf32>
    %245 = tpu.matmul %243, %186, %cst_63 {dimension_numbers = #tpu.dot_dimension_numbers<[1], [0], [0], [1], [0, 0, 1, 1], [], []>} : vector<8x32xf32>, vector<32x96xf32>, vector<8x96xf32> -> vector<8x96xf32>
    %246 = vector.broadcast %187 : vector<1x96xf32> to vector<8x96xf32>
    %247 = arith.addf %245, %246 : vector<8x96xf32>
    %248 = vector.extract_strided_slice %193 {offsets = [16, 0], sizes = [8, 96], strides = [1, 1]} : vector<64x96xf32> to vector<8x96xf32>
    %249 = vector.extract_strided_slice %248 {offsets = [0, 0], sizes = [8, 64], strides = [1, 1]} : vector<8x96xf32> to vector<8x64xf32>
    %250 = vector.extract_strided_slice %247 {offsets = [0, 0], sizes = [8, 64], strides = [1, 1]} : vector<8x96xf32> to vector<8x64xf32>
    %251 = arith.addf %249, %250 : vector<8x64xf32>
    %252 = arith.negf %251 : vector<8x64xf32>
    %253 = math.exp %252 : vector<8x64xf32>
    %cst_64 = arith.constant 1.000000e+00 : f32
    %254 = vector.broadcast %cst_64 : f32 to vector<8x64xf32>
    %255 = arith.addf %254, %253 : vector<8x64xf32>
    %256 = arith.divf %254, %255 : vector<8x64xf32>
    %257 = vector.extract_strided_slice %248 {offsets = [0, 64], sizes = [8, 32], strides = [1, 1]} : vector<8x96xf32> to vector<8x32xf32>
    %258 = vector.extract_strided_slice %256 {offsets = [0, 0], sizes = [8, 32], strides = [1, 1]} : vector<8x64xf32> to vector<8x32xf32>
    %259 = vector.extract_strided_slice %247 {offsets = [0, 64], sizes = [8, 32], strides = [1, 1]} : vector<8x96xf32> to vector<8x32xf32>
    %260 = arith.mulf %258, %259 : vector<8x32xf32>
    %261 = arith.addf %257, %260 : vector<8x32xf32>
    %262 = math.tanh %261 : vector<8x32xf32>
    %263 = vector.extract_strided_slice %256 {offsets = [0, 32], sizes = [8, 32], strides = [1, 1]} : vector<8x64xf32> to vector<8x32xf32>
    %cst_65 = arith.constant 1.000000e+00 : f32
    %264 = vector.broadcast %cst_65 : f32 to vector<8x32xf32>
    %265 = arith.subf %264, %263 : vector<8x32xf32>
    %266 = arith.mulf %265, %262 : vector<8x32xf32>
    %267 = arith.mulf %263, %243 : vector<8x32xf32>
    %268 = arith.addf %266, %267 : vector<8x32xf32>
    %c16_66 = arith.constant 16 : index
    %c0_67 = arith.constant 0 : index
    %269 = vector.load %arg20[%c16_66, %c0_67] : memref<64x32xf32, #tpu.memory_space<vmem>>, vector<8x32xf32>
    tpu.vector_store %arg20[%c16_66, %c0_67], %268 {strides = array<i32>} : memref<64x32xf32, #tpu.memory_space<vmem>>, vector<8x32xf32>,
    %cst_68 = arith.constant dense<0.000000e+00> : vector<8x96xf32>
    %270 = tpu.matmul %268, %186, %cst_68 {dimension_numbers = #tpu.dot_dimension_numbers<[1], [0], [0], [1], [0, 0, 1, 1], [], []>} : vector<8x32xf32>, vector<32x96xf32>, vector<8x96xf32> -> vector<8x96xf32>
    %271 = vector.broadcast %187 : vector<1x96xf32> to vector<8x96xf32>
    %272 = arith.addf %270, %271 : vector<8x96xf32>
    %273 = vector.extract_strided_slice %193 {offsets = [24, 0], sizes = [8, 96], strides = [1, 1]} : vector<64x96xf32> to vector<8x96xf32>
    %274 = vector.extract_strided_slice %273 {offsets = [0, 0], sizes = [8, 64], strides = [1, 1]} : vector<8x96xf32> to vector<8x64xf32>
    %275 = vector.extract_strided_slice %272 {offsets = [0, 0], sizes = [8, 64], strides = [1, 1]} : vector<8x96xf32> to vector<8x64xf32>
    %276 = arith.addf %274, %275 : vector<8x64xf32>
    %277 = arith.negf %276 : vector<8x64xf32>
    %278 = math.exp %277 : vector<8x64xf32>
    %cst_69 = arith.constant 1.000000e+00 : f32
    %279 = vector.broadcast %cst_69 : f32 to vector<8x64xf32>
    %280 = arith.addf %279, %278 : vector<8x64xf32>
    %281 = arith.divf %279, %280 : vector<8x64xf32>
    %282 = vector.extract_strided_slice %273 {offsets = [0, 64], sizes = [8, 32], strides = [1, 1]} : vector<8x96xf32> to vector<8x32xf32>
    %283 = vector.extract_strided_slice %281 {offsets = [0, 0], sizes = [8, 32], strides = [1, 1]} : vector<8x64xf32> to vector<8x32xf32>
    %284 = vector.extract_strided_slice %272 {offsets = [0, 64], sizes = [8, 32], strides = [1, 1]} : vector<8x96xf32> to vector<8x32xf32>
    %285 = arith.mulf %283, %284 : vector<8x32xf32>
    %286 = arith.addf %282, %285 : vector<8x32xf32>
    %287 = math.tanh %286 : vector<8x32xf32>
    %288 = vector.extract_strided_slice %281 {offsets = [0, 32], sizes = [8, 32], strides = [1, 1]} : vector<8x64xf32> to vector<8x32xf32>
    %cst_70 = arith.constant 1.000000e+00 : f32
    %289 = vector.broadcast %cst_70 : f32 to vector<8x32xf32>
    %290 = arith.subf %289, %288 : vector<8x32xf32>
    %291 = arith.mulf %290, %287 : vector<8x32xf32>
    %292 = arith.mulf %288, %268 : vector<8x32xf32>
    %293 = arith.addf %291, %292 : vector<8x32xf32>
    %c24_71 = arith.constant 24 : index
    %c0_72 = arith.constant 0 : index
    %294 = vector.load %arg20[%c24_71, %c0_72] : memref<64x32xf32, #tpu.memory_space<vmem>>, vector<8x32xf32>
    tpu.vector_store %arg20[%c24_71, %c0_72], %293 {strides = array<i32>} : memref<64x32xf32, #tpu.memory_space<vmem>>, vector<8x32xf32>,
    %cst_73 = arith.constant dense<0.000000e+00> : vector<8x96xf32>
    %295 = tpu.matmul %293, %186, %cst_73 {dimension_numbers = #tpu.dot_dimension_numbers<[1], [0], [0], [1], [0, 0, 1, 1], [], []>} : vector<8x32xf32>, vector<32x96xf32>, vector<8x96xf32> -> vector<8x96xf32>
    %296 = vector.broadcast %187 : vector<1x96xf32> to vector<8x96xf32>
    %297 = arith.addf %295, %296 : vector<8x96xf32>
    %298 = vector.extract_strided_slice %193 {offsets = [32, 0], sizes = [8, 96], strides = [1, 1]} : vector<64x96xf32> to vector<8x96xf32>
    %299 = vector.extract_strided_slice %298 {offsets = [0, 0], sizes = [8, 64], strides = [1, 1]} : vector<8x96xf32> to vector<8x64xf32>
    %300 = vector.extract_strided_slice %297 {offsets = [0, 0], sizes = [8, 64], strides = [1, 1]} : vector<8x96xf32> to vector<8x64xf32>
    %301 = arith.addf %299, %300 : vector<8x64xf32>
    %302 = arith.negf %301 : vector<8x64xf32>
    %303 = math.exp %302 : vector<8x64xf32>
    %cst_74 = arith.constant 1.000000e+00 : f32
    %304 = vector.broadcast %cst_74 : f32 to vector<8x64xf32>
    %305 = arith.addf %304, %303 : vector<8x64xf32>
    %306 = arith.divf %304, %305 : vector<8x64xf32>
    %307 = vector.extract_strided_slice %298 {offsets = [0, 64], sizes = [8, 32], strides = [1, 1]} : vector<8x96xf32> to vector<8x32xf32>
    %308 = vector.extract_strided_slice %306 {offsets = [0, 0], sizes = [8, 32], strides = [1, 1]} : vector<8x64xf32> to vector<8x32xf32>
    %309 = vector.extract_strided_slice %297 {offsets = [0, 64], sizes = [8, 32], strides = [1, 1]} : vector<8x96xf32> to vector<8x32xf32>
    %310 = arith.mulf %308, %309 : vector<8x32xf32>
    %311 = arith.addf %307, %310 : vector<8x32xf32>
    %312 = math.tanh %311 : vector<8x32xf32>
    %313 = vector.extract_strided_slice %306 {offsets = [0, 32], sizes = [8, 32], strides = [1, 1]} : vector<8x64xf32> to vector<8x32xf32>
    %cst_75 = arith.constant 1.000000e+00 : f32
    %314 = vector.broadcast %cst_75 : f32 to vector<8x32xf32>
    %315 = arith.subf %314, %313 : vector<8x32xf32>
    %316 = arith.mulf %315, %312 : vector<8x32xf32>
    %317 = arith.mulf %313, %293 : vector<8x32xf32>
    %318 = arith.addf %316, %317 : vector<8x32xf32>
    %c32_76 = arith.constant 32 : index
    %c0_77 = arith.constant 0 : index
    %319 = vector.load %arg20[%c32_76, %c0_77] : memref<64x32xf32, #tpu.memory_space<vmem>>, vector<8x32xf32>
    tpu.vector_store %arg20[%c32_76, %c0_77], %318 {strides = array<i32>} : memref<64x32xf32, #tpu.memory_space<vmem>>, vector<8x32xf32>,
    %cst_78 = arith.constant dense<0.000000e+00> : vector<8x96xf32>
    %320 = tpu.matmul %318, %186, %cst_78 {dimension_numbers = #tpu.dot_dimension_numbers<[1], [0], [0], [1], [0, 0, 1, 1], [], []>} : vector<8x32xf32>, vector<32x96xf32>, vector<8x96xf32> -> vector<8x96xf32>
    %321 = vector.broadcast %187 : vector<1x96xf32> to vector<8x96xf32>
    %322 = arith.addf %320, %321 : vector<8x96xf32>
    %323 = vector.extract_strided_slice %193 {offsets = [40, 0], sizes = [8, 96], strides = [1, 1]} : vector<64x96xf32> to vector<8x96xf32>
    %324 = vector.extract_strided_slice %323 {offsets = [0, 0], sizes = [8, 64], strides = [1, 1]} : vector<8x96xf32> to vector<8x64xf32>
    %325 = vector.extract_strided_slice %322 {offsets = [0, 0], sizes = [8, 64], strides = [1, 1]} : vector<8x96xf32> to vector<8x64xf32>
    %326 = arith.addf %324, %325 : vector<8x64xf32>
    %327 = arith.negf %326 : vector<8x64xf32>
    %328 = math.exp %327 : vector<8x64xf32>
    %cst_79 = arith.constant 1.000000e+00 : f32
    %329 = vector.broadcast %cst_79 : f32 to vector<8x64xf32>
    %330 = arith.addf %329, %328 : vector<8x64xf32>
    %331 = arith.divf %329, %330 : vector<8x64xf32>
    %332 = vector.extract_strided_slice %323 {offsets = [0, 64], sizes = [8, 32], strides = [1, 1]} : vector<8x96xf32> to vector<8x32xf32>
    %333 = vector.extract_strided_slice %331 {offsets = [0, 0], sizes = [8, 32], strides = [1, 1]} : vector<8x64xf32> to vector<8x32xf32>
    %334 = vector.extract_strided_slice %322 {offsets = [0, 64], sizes = [8, 32], strides = [1, 1]} : vector<8x96xf32> to vector<8x32xf32>
    %335 = arith.mulf %333, %334 : vector<8x32xf32>
    %336 = arith.addf %332, %335 : vector<8x32xf32>
    %337 = math.tanh %336 : vector<8x32xf32>
    %338 = vector.extract_strided_slice %331 {offsets = [0, 32], sizes = [8, 32], strides = [1, 1]} : vector<8x64xf32> to vector<8x32xf32>
    %cst_80 = arith.constant 1.000000e+00 : f32
    %339 = vector.broadcast %cst_80 : f32 to vector<8x32xf32>
    %340 = arith.subf %339, %338 : vector<8x32xf32>
    %341 = arith.mulf %340, %337 : vector<8x32xf32>
    %342 = arith.mulf %338, %318 : vector<8x32xf32>
    %343 = arith.addf %341, %342 : vector<8x32xf32>
    %c40_81 = arith.constant 40 : index
    %c0_82 = arith.constant 0 : index
    %344 = vector.load %arg20[%c40_81, %c0_82] : memref<64x32xf32, #tpu.memory_space<vmem>>, vector<8x32xf32>
    tpu.vector_store %arg20[%c40_81, %c0_82], %343 {strides = array<i32>} : memref<64x32xf32, #tpu.memory_space<vmem>>, vector<8x32xf32>,
    %cst_83 = arith.constant dense<0.000000e+00> : vector<8x96xf32>
    %345 = tpu.matmul %343, %186, %cst_83 {dimension_numbers = #tpu.dot_dimension_numbers<[1], [0], [0], [1], [0, 0, 1, 1], [], []>} : vector<8x32xf32>, vector<32x96xf32>, vector<8x96xf32> -> vector<8x96xf32>
    %346 = vector.broadcast %187 : vector<1x96xf32> to vector<8x96xf32>
    %347 = arith.addf %345, %346 : vector<8x96xf32>
    %348 = vector.extract_strided_slice %193 {offsets = [48, 0], sizes = [8, 96], strides = [1, 1]} : vector<64x96xf32> to vector<8x96xf32>
    %349 = vector.extract_strided_slice %348 {offsets = [0, 0], sizes = [8, 64], strides = [1, 1]} : vector<8x96xf32> to vector<8x64xf32>
    %350 = vector.extract_strided_slice %347 {offsets = [0, 0], sizes = [8, 64], strides = [1, 1]} : vector<8x96xf32> to vector<8x64xf32>
    %351 = arith.addf %349, %350 : vector<8x64xf32>
    %352 = arith.negf %351 : vector<8x64xf32>
    %353 = math.exp %352 : vector<8x64xf32>
    %cst_84 = arith.constant 1.000000e+00 : f32
    %354 = vector.broadcast %cst_84 : f32 to vector<8x64xf32>
    %355 = arith.addf %354, %353 : vector<8x64xf32>
    %356 = arith.divf %354, %355 : vector<8x64xf32>
    %357 = vector.extract_strided_slice %348 {offsets = [0, 64], sizes = [8, 32], strides = [1, 1]} : vector<8x96xf32> to vector<8x32xf32>
    %358 = vector.extract_strided_slice %356 {offsets = [0, 0], sizes = [8, 32], strides = [1, 1]} : vector<8x64xf32> to vector<8x32xf32>
    %359 = vector.extract_strided_slice %347 {offsets = [0, 64], sizes = [8, 32], strides = [1, 1]} : vector<8x96xf32> to vector<8x32xf32>
    %360 = arith.mulf %358, %359 : vector<8x32xf32>
    %361 = arith.addf %357, %360 : vector<8x32xf32>
    %362 = math.tanh %361 : vector<8x32xf32>
    %363 = vector.extract_strided_slice %356 {offsets = [0, 32], sizes = [8, 32], strides = [1, 1]} : vector<8x64xf32> to vector<8x32xf32>
    %cst_85 = arith.constant 1.000000e+00 : f32
    %364 = vector.broadcast %cst_85 : f32 to vector<8x32xf32>
    %365 = arith.subf %364, %363 : vector<8x32xf32>
    %366 = arith.mulf %365, %362 : vector<8x32xf32>
    %367 = arith.mulf %363, %343 : vector<8x32xf32>
    %368 = arith.addf %366, %367 : vector<8x32xf32>
    %c48_86 = arith.constant 48 : index
    %c0_87 = arith.constant 0 : index
    %369 = vector.load %arg20[%c48_86, %c0_87] : memref<64x32xf32, #tpu.memory_space<vmem>>, vector<8x32xf32>
    tpu.vector_store %arg20[%c48_86, %c0_87], %368 {strides = array<i32>} : memref<64x32xf32, #tpu.memory_space<vmem>>, vector<8x32xf32>,
    %cst_88 = arith.constant dense<0.000000e+00> : vector<8x96xf32>
    %370 = tpu.matmul %368, %186, %cst_88 {dimension_numbers = #tpu.dot_dimension_numbers<[1], [0], [0], [1], [0, 0, 1, 1], [], []>} : vector<8x32xf32>, vector<32x96xf32>, vector<8x96xf32> -> vector<8x96xf32>
    %371 = vector.broadcast %187 : vector<1x96xf32> to vector<8x96xf32>
    %372 = arith.addf %370, %371 : vector<8x96xf32>
    %373 = vector.extract_strided_slice %193 {offsets = [56, 0], sizes = [8, 96], strides = [1, 1]} : vector<64x96xf32> to vector<8x96xf32>
    %374 = vector.extract_strided_slice %373 {offsets = [0, 0], sizes = [8, 64], strides = [1, 1]} : vector<8x96xf32> to vector<8x64xf32>
    %375 = vector.extract_strided_slice %372 {offsets = [0, 0], sizes = [8, 64], strides = [1, 1]} : vector<8x96xf32> to vector<8x64xf32>
    %376 = arith.addf %374, %375 : vector<8x64xf32>
    %377 = arith.negf %376 : vector<8x64xf32>
    %378 = math.exp %377 : vector<8x64xf32>
    %cst_89 = arith.constant 1.000000e+00 : f32
    %379 = vector.broadcast %cst_89 : f32 to vector<8x64xf32>
    %380 = arith.addf %379, %378 : vector<8x64xf32>
    %381 = arith.divf %379, %380 : vector<8x64xf32>
    %382 = vector.extract_strided_slice %373 {offsets = [0, 64], sizes = [8, 32], strides = [1, 1]} : vector<8x96xf32> to vector<8x32xf32>
    %383 = vector.extract_strided_slice %381 {offsets = [0, 0], sizes = [8, 32], strides = [1, 1]} : vector<8x64xf32> to vector<8x32xf32>
    %384 = vector.extract_strided_slice %372 {offsets = [0, 64], sizes = [8, 32], strides = [1, 1]} : vector<8x96xf32> to vector<8x32xf32>
    %385 = arith.mulf %383, %384 : vector<8x32xf32>
    %386 = arith.addf %382, %385 : vector<8x32xf32>
    %387 = math.tanh %386 : vector<8x32xf32>
    %388 = vector.extract_strided_slice %381 {offsets = [0, 32], sizes = [8, 32], strides = [1, 1]} : vector<8x64xf32> to vector<8x32xf32>
    %cst_90 = arith.constant 1.000000e+00 : f32
    %389 = vector.broadcast %cst_90 : f32 to vector<8x32xf32>
    %390 = arith.subf %389, %388 : vector<8x32xf32>
    %391 = arith.mulf %390, %387 : vector<8x32xf32>
    %392 = arith.mulf %388, %368 : vector<8x32xf32>
    %393 = arith.addf %391, %392 : vector<8x32xf32>
    %c56_91 = arith.constant 56 : index
    %c0_92 = arith.constant 0 : index
    %394 = vector.load %arg20[%c56_91, %c0_92] : memref<64x32xf32, #tpu.memory_space<vmem>>, vector<8x32xf32>
    tpu.vector_store %arg20[%c56_91, %c0_92], %393 {strides = array<i32>} : memref<64x32xf32, #tpu.memory_space<vmem>>, vector<8x32xf32>,
    %c0_93 = arith.constant 0 : index
    %c0_94 = arith.constant 0 : index
    %395 = vector.load %arg20[%c0_93, %c0_94] : memref<64x32xf32, #tpu.memory_space<vmem>>, vector<64x32xf32>
    %cst_95 = arith.constant dense<0.000000e+00> : vector<64x32xf32>
    %396 = tpu.matmul %8, %395, %cst_95 {dimension_numbers = #tpu.dot_dimension_numbers<[1], [0], [0], [1], [0, 0, 1, 1], [], []>} : vector<64x64xf32>, vector<64x32xf32>, vector<64x32xf32> -> vector<64x32xf32>
    %397 = arith.select %183, %395, %396 : vector<64x32xi1>, vector<64x32xf32>
    %398 = tpu.concatenate %184, %397 in 1 : vector<64x32xf32>, vector<64x32xf32> -> vector<64x64xf32>
    %c0_96 = arith.constant 0 : index
    %c0_97 = arith.constant 0 : index
    %399 = vector.load %arg10[%c0_96, %c0_97] : memref<64x2xf32, #tpu.memory_space<vmem>>, vector<64x2xf32>
    %cst_98 = arith.constant dense<0.000000e+00> : vector<64x2xf32>
    %400 = tpu.matmul %398, %399, %cst_98 {dimension_numbers = #tpu.dot_dimension_numbers<[1], [0], [0], [1], [0, 0, 1, 1], [], []>} : vector<64x64xf32>, vector<64x2xf32>, vector<64x2xf32> -> vector<64x2xf32>
    %c0_99 = arith.constant 0 : index
    %c0_100 = arith.constant 0 : index
    %401 = vector.load %arg11[%c0_99, %c0_100] : memref<64x2xf32, #tpu.memory_space<vmem>>, vector<64x2xf32>
    %402 = arith.addf %400, %401 : vector<64x2xf32>
    %403 = math.tanh %402 : vector<64x2xf32>
    %404 = math.exp %403 : vector<64x2xf32>
    %405 = vector.extract_strided_slice %404 {offsets = [0, 0], sizes = [8, 2], strides = [1, 1]} : vector<64x2xf32> to vector<8x2xf32>
    %406 = vector.extract_strided_slice %404 {offsets = [8, 0], sizes = [8, 2], strides = [1, 1]} : vector<64x2xf32> to vector<8x2xf32>
    %407 = arith.addf %405, %406 : vector<8x2xf32>
    %408 = vector.extract_strided_slice %404 {offsets = [16, 0], sizes = [8, 2], strides = [1, 1]} : vector<64x2xf32> to vector<8x2xf32>
    %409 = arith.addf %407, %408 : vector<8x2xf32>
    %410 = vector.extract_strided_slice %404 {offsets = [24, 0], sizes = [8, 2], strides = [1, 1]} : vector<64x2xf32> to vector<8x2xf32>
    %411 = arith.addf %409, %410 : vector<8x2xf32>
    %412 = vector.extract_strided_slice %404 {offsets = [32, 0], sizes = [8, 2], strides = [1, 1]} : vector<64x2xf32> to vector<8x2xf32>
    %413 = arith.addf %411, %412 : vector<8x2xf32>
    %414 = vector.extract_strided_slice %404 {offsets = [40, 0], sizes = [8, 2], strides = [1, 1]} : vector<64x2xf32> to vector<8x2xf32>
    %415 = arith.addf %413, %414 : vector<8x2xf32>
    %416 = vector.extract_strided_slice %404 {offsets = [48, 0], sizes = [8, 2], strides = [1, 1]} : vector<64x2xf32> to vector<8x2xf32>
    %417 = arith.addf %415, %416 : vector<8x2xf32>
    %418 = vector.extract_strided_slice %404 {offsets = [56, 0], sizes = [8, 2], strides = [1, 1]} : vector<64x2xf32> to vector<8x2xf32>
    %419 = arith.addf %417, %418 : vector<8x2xf32>
    %420 = tpu.reciprocal %419 {approx = true} : vector<8x2xf32> -> vector<8x2xf32>
    %421 = tpu.concatenate %420, %420, %420, %420, %420, %420, %420, %420 in 0 : vector<8x2xf32>, vector<8x2xf32>, vector<8x2xf32>, vector<8x2xf32>, vector<8x2xf32>, vector<8x2xf32>, vector<8x2xf32>, vector<8x2xf32> -> vector<64x2xf32>
    %422 = arith.mulf %404, %421 : vector<64x2xf32>
    %cst_101 = arith.constant 1.000000e-10 : f32
    %423 = vector.broadcast %cst_101 : f32 to vector<64x2xf32>
    %424 = arith.addf %422, %423 : vector<64x2xf32>
    %425 = vector.extract_strided_slice %424 {offsets = [0, 0], sizes = [64, 1], strides = [1, 1]} : vector<64x2xf32> to vector<64x1xf32>
    %426 = vector.broadcast %425 : vector<64x1xf32> to vector<64x32xf32>
    %427 = arith.mulf %184, %426 : vector<64x32xf32>
    %428 = vector.extract_strided_slice %424 {offsets = [0, 1], sizes = [64, 1], strides = [1, 1]} : vector<64x2xf32> to vector<64x1xf32>
    %429 = vector.broadcast %428 : vector<64x1xf32> to vector<64x32xf32>
    %430 = arith.mulf %397, %429 : vector<64x32xf32>
    %431 = tpu.concatenate %427, %430 in 1 : vector<64x32xf32>, vector<64x32xf32> -> vector<64x64xf32>
    %432 = vector.extract_strided_slice %431 {offsets = [0, 0], sizes = [8, 64], strides = [1, 1]} : vector<64x64xf32> to vector<8x64xf32>
    %433 = vector.extract_strided_slice %397 {offsets = [0, 0], sizes = [8, 32], strides = [1, 1]} : vector<64x32xf32> to vector<8x32xf32>
    %434 = vector.extract_strided_slice %397 {offsets = [0, 0], sizes = [8, 32], strides = [1, 1]} : vector<64x32xf32> to vector<8x32xf32>
    %435 = vector.extract_strided_slice %431 {offsets = [8, 0], sizes = [8, 64], strides = [1, 1]} : vector<64x64xf32> to vector<8x64xf32>
    %436 = arith.addf %432, %435 : vector<8x64xf32>
    %437 = vector.extract_strided_slice %397 {offsets = [8, 0], sizes = [8, 32], strides = [1, 1]} : vector<64x32xf32> to vector<8x32xf32>
    %438 = arith.addf %433, %437 : vector<8x32xf32>
    %439 = arith.maximumf %434, %437 : vector<8x32xf32>
    %440 = vector.extract_strided_slice %431 {offsets = [16, 0], sizes = [8, 64], strides = [1, 1]} : vector<64x64xf32> to vector<8x64xf32>
    %441 = arith.addf %436, %440 : vector<8x64xf32>
    %442 = vector.extract_strided_slice %397 {offsets = [16, 0], sizes = [8, 32], strides = [1, 1]} : vector<64x32xf32> to vector<8x32xf32>
    %443 = arith.addf %438, %442 : vector<8x32xf32>
    %444 = arith.maximumf %439, %442 : vector<8x32xf32>
    %445 = vector.extract_strided_slice %431 {offsets = [24, 0], sizes = [8, 64], strides = [1, 1]} : vector<64x64xf32> to vector<8x64xf32>
    %446 = arith.addf %441, %445 : vector<8x64xf32>
    %447 = vector.extract_strided_slice %397 {offsets = [24, 0], sizes = [8, 32], strides = [1, 1]} : vector<64x32xf32> to vector<8x32xf32>
    %448 = arith.addf %443, %447 : vector<8x32xf32>
    %449 = arith.maximumf %444, %447 : vector<8x32xf32>
    %450 = vector.extract_strided_slice %431 {offsets = [32, 0], sizes = [8, 64], strides = [1, 1]} : vector<64x64xf32> to vector<8x64xf32>
    %451 = arith.addf %446, %450 : vector<8x64xf32>
    %452 = vector.extract_strided_slice %397 {offsets = [32, 0], sizes = [8, 32], strides = [1, 1]} : vector<64x32xf32> to vector<8x32xf32>
    %453 = arith.addf %448, %452 : vector<8x32xf32>
    %454 = arith.maximumf %449, %452 : vector<8x32xf32>
    %455 = vector.extract_strided_slice %431 {offsets = [40, 0], sizes = [8, 64], strides = [1, 1]} : vector<64x64xf32> to vector<8x64xf32>
    %456 = arith.addf %451, %455 : vector<8x64xf32>
    %457 = vector.extract_strided_slice %397 {offsets = [40, 0], sizes = [8, 32], strides = [1, 1]} : vector<64x32xf32> to vector<8x32xf32>
    %458 = arith.addf %453, %457 : vector<8x32xf32>
    %459 = arith.maximumf %454, %457 : vector<8x32xf32>
    %460 = vector.extract_strided_slice %431 {offsets = [48, 0], sizes = [8, 64], strides = [1, 1]} : vector<64x64xf32> to vector<8x64xf32>
    %461 = arith.addf %456, %460 : vector<8x64xf32>
    %462 = vector.extract_strided_slice %397 {offsets = [48, 0], sizes = [8, 32], strides = [1, 1]} : vector<64x32xf32> to vector<8x32xf32>
    %463 = arith.addf %458, %462 : vector<8x32xf32>
    %464 = arith.maximumf %459, %462 : vector<8x32xf32>
    %465 = vector.extract_strided_slice %431 {offsets = [56, 0], sizes = [8, 64], strides = [1, 1]} : vector<64x64xf32> to vector<8x64xf32>
    %466 = arith.addf %461, %465 : vector<8x64xf32>
    %467 = vector.extract_strided_slice %397 {offsets = [56, 0], sizes = [8, 32], strides = [1, 1]} : vector<64x32xf32> to vector<8x32xf32>
    %468 = arith.addf %463, %467 : vector<8x32xf32>
    %469 = arith.maximumf %464, %467 : vector<8x32xf32>
    %cst_102 = arith.constant 1.250000e-01 : f32
    %470 = vector.broadcast %cst_102 : f32 to vector<8x32xf32>
    %471 = arith.mulf %468, %470 : vector<8x32xf32>
    %472 = tpu.concatenate %466, %471, %469 in 1 : vector<8x64xf32>, vector<8x32xf32>, vector<8x32xf32> -> vector<8x128xf32>
    %c0_103 = arith.constant 0 : index
    %c0_104 = arith.constant 0 : index
    %473 = vector.load %arg12[%c0_103, %c0_104] : memref<128x16xf32, #tpu.memory_space<vmem>>, vector<128x16xf32>
    %cst_105 = arith.constant dense<0.000000e+00> : vector<8x16xf32>
    %474 = tpu.matmul %472, %473, %cst_105 {dimension_numbers = #tpu.dot_dimension_numbers<[1], [0], [0], [1], [0, 0, 1, 1], [], []>} : vector<8x128xf32>, vector<128x16xf32>, vector<8x16xf32> -> vector<8x16xf32>
    %c0_106 = arith.constant 0 : index
    %c0_107 = arith.constant 0 : index
    %475 = vector.load %arg13[%c0_106, %c0_107] : memref<1x16xf32, #tpu.memory_space<vmem>>, vector<1x16xf32>
    %476 = vector.broadcast %475 : vector<1x16xf32> to vector<8x16xf32>
    %477 = arith.addf %474, %476 : vector<8x16xf32>
    %cst_108 = arith.constant 0.000000e+00 : f32
    %478 = vector.broadcast %cst_108 : f32 to vector<8x16xf32>
    %479 = arith.maximumf %477, %478 : vector<8x16xf32>
    %c0_109 = arith.constant 0 : index
    %c0_110 = arith.constant 0 : index
    %480 = vector.load %arg14[%c0_109, %c0_110] : memref<1x16xf32, #tpu.memory_space<vmem>>, vector<1x16xf32>
    %481 = vector.broadcast %480 : vector<1x16xf32> to vector<8x16xf32>
    %482 = arith.mulf %479, %481 : vector<8x16xf32>
    %c0_111 = arith.constant 0 : index
    %c0_112 = arith.constant 0 : index
    %483 = vector.load %arg15[%c0_111, %c0_112] : memref<1x16xf32, #tpu.memory_space<vmem>>, vector<1x16xf32>
    %484 = vector.broadcast %483 : vector<1x16xf32> to vector<8x16xf32>
    %485 = arith.addf %482, %484 : vector<8x16xf32>
    %c0_113 = arith.constant 0 : index
    %c0_114 = arith.constant 0 : index
    %486 = vector.load %arg16[%c0_113, %c0_114] : memref<16x1xf32, #tpu.memory_space<vmem>>, vector<16x1xf32>
    %cst_115 = arith.constant dense<0.000000e+00> : vector<8x1xf32>
    %487 = tpu.matmul %485, %486, %cst_115 {dimension_numbers = #tpu.dot_dimension_numbers<[1], [0], [0], [1], [0, 0, 1, 1], [], []>} : vector<8x16xf32>, vector<16x1xf32>, vector<8x1xf32> -> vector<8x1xf32>
    %c0_116 = arith.constant 0 : index
    %c0_117 = arith.constant 0 : index
    %488 = vector.load %arg17[%c0_116, %c0_117] : memref<1x1xf32, #tpu.memory_space<vmem>>, vector<1x1xf32>
    %489 = vector.broadcast %488 : vector<1x1xf32> to vector<8x1xf32>
    %490 = arith.addf %487, %489 : vector<8x1xf32>
    %c0_118 = arith.constant 0 : index
    %c0_119 = arith.constant 0 : index
    %491 = vector.load %arg18[%c0_118, %c0_119] : memref<8x1xf32, #tpu.memory_space<vmem>>, vector<8x1xf32>
    tpu.vector_store %arg18[%c0_118, %c0_119], %490 {strides = array<i32>} : memref<8x1xf32, #tpu.memory_space<vmem>>, vector<8x1xf32>,
    return
  }
}

</mosaic_0001>

<llo_original>
// kernel: forward.1
$region0: #{forward.1}
  #allocation0 [shape = 'u32[]', space=smem, size = 0x4, offset = 0x4, fixed_abs, tag = 'smem constant byte address 0x4 - core index']
  #allocation1 [shape = 'u32[144,128]{1,0:T(1,128)}', space=vmem, size = 0x12000, scoped, tag = 'internal scratch']
  #allocation2 [shape = 'f32[64,32]{1,0:T(8,128)}', space=vmem, size = 0x8000, scoped, tag = 'scratch operand']
  #allocation3 [shape = 'f32[64,32]{1,0:T(8,128)}', space=vmem, size = 0x8000, scoped, tag = 'scratch operand']
  #allocation4 [shape = 'f32[1,1]{1,0:T(1,128)S(1)}', space=vmem, size = 0x200, scoped, tag = 'scoped memory for forward.1']
  %s0 = inlined_call_operand.vmem [shape: s32[64,1], index: 0, kind: input, shape index: {}]
  %s1 = inlined_call_operand.vmem [shape: f32[64,64], index: 1, kind: input, shape index: {}]
  %s2 = inlined_call_operand.vmem [shape: f32[100,32], index: 2, kind: input, shape index: {}]
  %s3 = inlined_call_operand.vmem [shape: f32[64,128], index: 3, kind: input, shape index: {}]
  %s4 = inlined_call_operand.vmem [shape: f32[32,128], index: 4, kind: input, shape index: {}]
  %s5 = inlined_call_operand.vmem [shape: f32[1,128], index: 5, kind: input, shape index: {}]
  %s6 = inlined_call_operand.vmem [shape: f32[64,96], index: 6, kind: input, shape index: {}]
  %s7 = inlined_call_operand.vmem [shape: f32[32,96], index: 7, kind: input, shape index: {}]
  %s8 = inlined_call_operand.vmem [shape: f32[1,96], index: 8, kind: input, shape index: {}]
  %s9 = inlined_call_operand.vmem [shape: f32[1,96], index: 9, kind: input, shape index: {}]
  %s10 = inlined_call_operand.vmem [shape: f32[64,2], index: 10, kind: input, shape index: {}]
  %s11 = inlined_call_operand.vmem [shape: f32[64,2], index: 11, kind: input, shape index: {}]
  %s12 = inlined_call_operand.vmem [shape: f32[128,16], index: 12, kind: input, shape index: {}]
  %s13 = inlined_call_operand.vmem [shape: f32[1,16], index: 13, kind: input, shape index: {}]
  %s14 = inlined_call_operand.vmem [shape: f32[1,16], index: 14, kind: input, shape index: {}]
  %s15 = inlined_call_operand.vmem [shape: f32[1,16], index: 15, kind: input, shape index: {}]
  %s16 = inlined_call_operand.vmem [shape: f32[16,1], index: 16, kind: input, shape index: {}]
  %s17 = inlined_call_operand.<no memory space> [shape: f32[1,1], index: 17, kind: input, shape index: {}]
  %s18 = inlined_call_operand.vmem [shape: f32[8,1], index: 18, kind: output, shape index: {}]
  %s19 = sld [smem:[#allocation0]]
  $region82: #{forward.1} parent=0
    _
  %s21 = ssub.s32 1, %s19
  %s22 = scalar_select 0, %s21, %s19
  %v23 = vstv %s17
  %24 = vst [vmem:[#allocation4] sm:$0x1] %v23
  // Predicated region
  $region2: #{forward.1} parent=0 // pred_check
    _
  $region3: #{forward.1} parent=0 // pred_check_branch
    %26 = sbr.rel (0) target = $region5
  $region4: #{forward.1} parent=0 // pred_region
    _
  $region5: #{forward.1} parent=0 // pred_fallthru
    _
  // Predicated region
  $region6: #{forward.1} parent=0 // pred_check
    _
  $region7: #{forward.1} parent=0 // pred_check_branch
    %28 = sbr.rel (0) target = $region9
  $region8: #{forward.1} parent=0 // pred_region
    _
  $region9: #{forward.1} parent=0 // pred_fallthru
    _
  // Predicated region
  $region10: #{forward.1} parent=0 // pred_check
    _
  $region11: #{forward.1} parent=0 // pred_check_branch
    %30 = sbr.rel (0) target = $region13
  $region12: #{forward.1} parent=0 // pred_region
    _
  $region13: #{forward.1} parent=0 // pred_fallthru
    _
  // Predicated region
  $region14: #{forward.1} parent=0 // pred_check
    _
  $region15: #{forward.1} parent=0 // pred_check_branch
    %32 = sbr.rel (0) target = $region17
  $region16: #{forward.1} parent=0 // pred_region
    _
  $region17: #{forward.1} parent=0 // pred_fallthru
    _
  // Predicated region
  $region18: #{forward.1} parent=0 // pred_check
    _
  $region19: #{forward.1} parent=0 // pred_check_branch
    %34 = sbr.rel (0) target = $region21
  $region20: #{forward.1} parent=0 // pred_region
    _
  $region21: #{forward.1} parent=0 // pred_fallthru
    _
  // Predicated region
  $region22: #{forward.1} parent=0 // pred_check
    _
  $region23: #{forward.1} parent=0 // pred_check_branch
    %36 = sbr.rel (0) target = $region25
  $region24: #{forward.1} parent=0 // pred_region
    _
  $region25: #{forward.1} parent=0 // pred_fallthru
    _
  // Predicated region
  $region26: #{forward.1} parent=0 // pred_check
    _
  $region27: #{forward.1} parent=0 // pred_check_branch
    %38 = sbr.rel (0) target = $region29
  $region28: #{forward.1} parent=0 // pred_region
    _
  $region29: #{forward.1} parent=0 // pred_fallthru
    _
  // Predicated region
  $region30: #{forward.1} parent=0 // pred_check
    _
  $region31: #{forward.1} parent=0 // pred_check_branch
    %40 = sbr.rel (0) target = $region33
  $region32: #{forward.1} parent=0 // pred_region
    _
  $region33: #{forward.1} parent=0 // pred_fallthru
    _
  // Predicated region
  $region34: #{forward.1} parent=0 // pred_check
    _
  $region35: #{forward.1} parent=0 // pred_check_branch
    %42 = sbr.rel (0) target = $region37
  $region36: #{forward.1} parent=0 // pred_region
    _
  $region37: #{forward.1} parent=0 // pred_fallthru
    _
  // Predicated region
  $region38: #{forward.1} parent=0 // pred_check
    _
  $region39: #{forward.1} parent=0 // pred_check_branch
    %44 = sbr.rel (0) target = $region41
  $region40: #{forward.1} parent=0 // pred_region
    _
  $region41: #{forward.1} parent=0 // pred_fallthru
    _
  // Predicated region
  $region42: #{forward.1} parent=0 // pred_check
    _
  $region43: #{forward.1} parent=0 // pred_check_branch
    %46 = sbr.rel (0) target = $region45
  $region44: #{forward.1} parent=0 // pred_region
    _
  $region45: #{forward.1} parent=0 // pred_fallthru
    _
  // Predicated region
  $region46: #{forward.1} parent=0 // pred_check
    _
  $region47: #{forward.1} parent=0 // pred_check_branch
    %48 = sbr.rel (0) target = $region49
  $region48: #{forward.1} parent=0 // pred_region
    _
  $region49: #{forward.1} parent=0 // pred_fallthru
    _
  // Predicated region
  $region50: #{forward.1} parent=0 // pred_check
    _
  $region51: #{forward.1} parent=0 // pred_check_branch
    %50 = sbr.rel (0) target = $region53
  $region52: #{forward.1} parent=0 // pred_region
    _
  $region53: #{forward.1} parent=0 // pred_fallthru
    _
  // Predicated region
  $region54: #{forward.1} parent=0 // pred_check
    _
  $region55: #{forward.1} parent=0 // pred_check_branch
    %52 = sbr.rel (0) target = $region57
  $region56: #{forward.1} parent=0 // pred_region
    _
  $region57: #{forward.1} parent=0 // pred_fallthru
    _
  // Predicated region
  $region58: #{forward.1} parent=0 // pred_check
    _
  $region59: #{forward.1} parent=0 // pred_check_branch
    %54 = sbr.rel (0) target = $region61
  $region60: #{forward.1} parent=0 // pred_region
    _
  $region61: #{forward.1} parent=0 // pred_fallthru
    _
  // Predicated region
  $region62: #{forward.1} parent=0 // pred_check
    _
  $region63: #{forward.1} parent=0 // pred_check_branch
    %56 = sbr.rel (0) target = $region65
  $region64: #{forward.1} parent=0 // pred_region
    _
  $region65: #{forward.1} parent=0 // pred_fallthru
    _
  // Predicated region
  $region66: #{forward.1} parent=0 // pred_check
    _
  $region67: #{forward.1} parent=0 // pred_check_branch
    %58 = sbr.rel (0) target = $region69
  $region68: #{forward.1} parent=0 // pred_region
    _
  $region69: #{forward.1} parent=0 // pred_fallthru
    _
  // Predicated region
  $region70: #{forward.1} parent=0 // pred_check
    _
  $region71: #{forward.1} parent=0 // pred_check_branch
    %60 = sbr.rel (0) target = $region73
  $region72: #{forward.1} parent=0 // pred_region
    _
  $region73: #{forward.1} parent=0 // pred_fallthru
    _
  %v61 = vld [vmem:[%s0] sm:$0xff]
  %v62 = vld [vmem:[%s0 + $0x8] sm:$0xff]
  %v63 = vld [vmem:[%s0 + $0x10] sm:$0xff]
  %v64 = vld [vmem:[%s0 + $0x18] sm:$0xff]
  %v65 = vld [vmem:[%s0 + $0x20] sm:$0xff]
  %v66 = vld [vmem:[%s0 + $0x28] sm:$0xff]
  %v67 = vld [vmem:[%s0 + $0x30] sm:$0xff]
  %v68 = vld [vmem:[%s0 + $0x38] sm:$0xff]
  %v69 = vlaneseq
  %v70 = vand.u32 %v69, 127
  %71 = vset.pattern.permute.xlu0 0
  %72 = vperm.xlu0 %71, %v61
  %v73 = vpop.permute.xlu0 %72
  %74 = vset.pattern.permute.xlu0 0
  %75 = vperm.xlu0 %74, %v62
  %v76 = vpop.permute.xlu0 %75
  %77 = vset.pattern.permute.xlu0 0
  %78 = vperm.xlu0 %77, %v63
  %v79 = vpop.permute.xlu0 %78
  %80 = vset.pattern.permute.xlu0 0
  %81 = vperm.xlu0 %80, %v64
  %v82 = vpop.permute.xlu0 %81
  %83 = vset.pattern.permute.xlu0 0
  %84 = vperm.xlu0 %83, %v65
  %v85 = vpop.permute.xlu0 %84
  %86 = vset.pattern.permute.xlu0 0
  %87 = vperm.xlu0 %86, %v66
  %v88 = vpop.permute.xlu0 %87
  %89 = vset.pattern.permute.xlu0 0
  %90 = vperm.xlu0 %89, %v67
  %v91 = vpop.permute.xlu0 %90
  %92 = vset.pattern.permute.xlu0 0
  %93 = vperm.xlu0 %92, %v68
  %v94 = vpop.permute.xlu0 %93
  %vm95 = vcmp.eq.s32.totalorder %v73, %v70
  %vm96 = vcmp.eq.s32.totalorder %v76, %v70
  %vm97 = vcmp.eq.s32.totalorder %v79, %v70
  %vm98 = vcmp.eq.s32.totalorder %v82, %v70
  %vm99 = vcmp.eq.s32.totalorder %v85, %v70
  %vm100 = vcmp.eq.s32.totalorder %v88, %v70
  %vm101 = vcmp.eq.s32.totalorder %v91, %v70
  %vm102 = vcmp.eq.s32.totalorder %v94, %v70
  %v103 = vsel %vm95, 1, 0
  %v104 = vsel %vm96, 1, 0
  %v105 = vsel %vm97, 1, 0
  %v106 = vsel %vm98, 1, 0
  %v107 = vsel %vm99, 1, 0
  %v108 = vsel %vm100, 1, 0
  %v109 = vsel %vm101, 1, 0
  %v110 = vsel %vm102, 1, 0
  %v111 = vcvt.s32.f32 %v103
  %v112 = vcvt.s32.f32 %v104
  %v113 = vcvt.s32.f32 %v105
  %v114 = vcvt.s32.f32 %v106
  %v115 = vcvt.s32.f32 %v107
  %v116 = vcvt.s32.f32 %v108
  %v117 = vcvt.s32.f32 %v109
  %v118 = vcvt.s32.f32 %v110
  %v119 = vld [vmem:[%s2] sm:$0xff]
  %v120 = vld [vmem:[%s2 + $0x8] sm:$0xff]
  %v121 = vld [vmem:[%s2 + $0x10] sm:$0xff]
  %v122 = vld [vmem:[%s2 + $0x18] sm:$0xff]
  %v123 = vld [vmem:[%s2 + $0x20] sm:$0xff]
  %v124 = vld [vmem:[%s2 + $0x28] sm:$0xff]
  %v125 = vld [vmem:[%s2 + $0x30] sm:$0xff]
  %v126 = vld [vmem:[%s2 + $0x38] sm:$0xff]
  %v127 = vld [vmem:[%s2 + $0x40] sm:$0xff]
  %v128 = vld [vmem:[%s2 + $0x48] sm:$0xff]
  %v129 = vld [vmem:[%s2 + $0x50] sm:$0xff]
  %v130 = vld [vmem:[%s2 + $0x58] sm:$0xff]
  %v131 = vld [vmem:[%s2 + $0x60] sm:$0xf]
  %vm132 = vcmask 818176
  %v134 = vsel %vm132, %v111, 0
  %v137 = vsel %vm132, %v112, 0
  %v140 = vsel %vm132, %v113, 0
  %v143 = vsel %vm132, %v114, 0
  %v146 = vsel %vm132, %v115, 0
  %v149 = vsel %vm132, %v116, 0
  %v152 = vsel %vm132, %v117, 0
  %v155 = vsel %vm132, %v118, 0
  %vm157 = vcmask 1043456
  %v159 = vsel %vm157, %v131, 0
  %161 = vmatprep.subr.mxu0 0.0
  %162 = vmatpush1.msra.mxu0 %v119
  %163 = vmatprep.subr.mxu0 0.0
  %164 = vmatpush1.msra.mxu0 %v120
  %165 = vmatprep.subr.mxu0 0.0
  %166 = vmatpush1.msra.mxu0 %v121
  %167 = vmatprep.subr.mxu0 0.0
  %168 = vmatpush1.msra.mxu0 %v122
  %169 = vmatprep.subr.mxu0 0.0
  %170 = vmatpush1.msra.mxu0 %v123
  %171 = vmatprep.subr.mxu0 0.0
  %172 = vmatpush1.msra.mxu0 %v124
  %173 = vmatprep.subr.mxu0 0.0
  %174 = vmatpush1.msra.mxu0 %v125
  %175 = vmatprep.subr.mxu0 0.0
  %176 = vmatpush1.msra.mxu0 %v126
  %177 = vmatprep.subr.mxu0 0.0
  %178 = vmatpush1.msra.mxu0 %v127
  %179 = vmatprep.subr.mxu0 0.0
  %180 = vmatpush1.msra.mxu0 %v128
  %181 = vmatprep.subr.mxu0 0.0
  %182 = vmatpush1.msra.mxu0 %v129
  %183 = vmatprep.subr.mxu0 0.0
  %184 = vmatpush1.msra.mxu0 %v130
  %185 = vmatprep.subr.mxu0 0.0
  %186 = vmatpush1.msra.mxu0 %v159
  %187 = vmatprep.subr.mxu0 0.0
  %188 = vmatpush1.msra.mxu0 0.0
  %189 = vmatprep.subr.mxu0 0.0
  %190 = vmatpush1.msra.mxu0 0.0
  %191 = vmatprep.subr.mxu0 0.0
  %192 = vmatpush1.msra.mxu0 0.0
  %193 = vmatprep.subr.mxu0 0.0
  %194 = vmatpush1.msra.mxu0 0.0
  %195 = vmatprep.subr.mxu0 0.0
  %196 = vmatpush1.msra.mxu0 0.0
  %197 = vmatprep.subr.mxu0 0.0
  %198 = vmatpush1.msra.mxu0 0.0
  %199 = vmatprep.subr.mxu0 0.0
  %200 = vmatpush1.msra.mxu0 0.0
  %201 = vmatprep.subr.mxu0 0.0
  %202 = vmatpush1.msra.mxu0 0.0
  %203 = vmatprep.subr.mxu0 0.0
  %204 = vmatpush1.msra.mxu0 0.0
  %205 = vmatprep.subr.mxu0 0.0
  %206 = vmatpush1.msra.mxu0 0.0
  %207 = vmatprep.subr.mxu0 0.0
  %208 = vmatpush1.msra.mxu0 0.0
  %209 = vmatprep.subr.mxu0 0.0
  %210 = vmatpush1.msra.mxu0 0.0
  %211 = vmatprep.subr.mxu0 0.0
  %212 = vmatpush1.msra.mxu0 0.0
  %213 = vmatprep.subr.mxu0 0.0
  %214 = vmatpush1.msra.mxu0 0.0
  %215 = vmatprep.subr.mxu0 0.0
  %216 = vmatpush1.msra.mxu0 0.0
  %217 = vmatprep.subr.mxu0 0.0
  %218 = vmatpush1.msra.mxu0 0.0
  %219 = vmatprep.subr.mxu0 0.0
  %220 = vmatpush1.msra.mxu0 0.0
  %221 = vmatprep.subr.mxu0 0.0
  %222 = vmatpush1.msra.mxu0 0.0
  %223 = vmatprep.subr.mxu0 0.0
  %224 = vmatpush1.msra.mxu0 0.0
  %225 = vmatprep.mubr.f32.mxu0 0.0
  %226 = vmatmul.mubr.f32.gmra.mrb[0].mxu0 %v134
  %v227 = vpop.f32.mrb[0].mxu0
  %v228 = vadd.f32 0.0, %v227
  %v229 = vpop.f32.mrb[0].mxu0
  %230 = vmatprep.mubr.f32.mxu0 0.0
  %231 = vmatmul.mubr.f32.gmra.mrb[0].mxu0 %v137
  %v232 = vpop.f32.mrb[0].mxu0
  %v233 = vadd.f32 0.0, %v232
  %v234 = vpop.f32.mrb[0].mxu0
  %235 = vmatprep.mubr.f32.mxu0 0.0
  %236 = vmatmul.mubr.f32.gmra.mrb[0].mxu0 %v140
  %v237 = vpop.f32.mrb[0].mxu0
  %v238 = vadd.f32 0.0, %v237
  %v239 = vpop.f32.mrb[0].mxu0
  %240 = vmatprep.mubr.f32.mxu0 0.0
  %241 = vmatmul.mubr.f32.gmra.mrb[0].mxu0 %v143
  %v242 = vpop.f32.mrb[0].mxu0
  %v243 = vadd.f32 0.0, %v242
  %v244 = vpop.f32.mrb[0].mxu0
  %245 = vmatprep.mubr.f32.mxu0 0.0
  %246 = vmatmul.mubr.f32.gmra.mrb[0].mxu0 %v146
  %v247 = vpop.f32.mrb[0].mxu0
  %v248 = vadd.f32 0.0, %v247
  %v249 = vpop.f32.mrb[0].mxu0
  %250 = vmatprep.mubr.f32.mxu0 0.0
  %251 = vmatmul.mubr.f32.gmra.mrb[0].mxu0 %v149
  %v252 = vpop.f32.mrb[0].mxu0
  %v253 = vadd.f32 0.0, %v252
  %v254 = vpop.f32.mrb[0].mxu0
  %255 = vmatprep.mubr.f32.mxu0 0.0
  %256 = vmatmul.mubr.f32.gmra.mrb[0].mxu0 %v152
  %v257 = vpop.f32.mrb[0].mxu0
  %v258 = vadd.f32 0.0, %v257
  %v259 = vpop.f32.mrb[0].mxu0
  %260 = vmatprep.mubr.f32.mxu0 0.0
  %261 = vmatmul.mubr.f32.gmra.mrb[0].mxu0 %v155
  %v262 = vpop.f32.mrb[0].mxu0
  %v263 = vadd.f32 0.0, %v262
  %v264 = vpop.f32.mrb[0].mxu0
  %265 = vdwg.mxu0
  %v266 = vld [vmem:[%s1] sm:$0xff]
  %v267 = vld [vmem:[%s1 + $0x8] sm:$0xff]
  %v268 = vld [vmem:[%s1 + $0x10] sm:$0xff]
  %v269 = vld [vmem:[%s1 + $0x18] sm:$0xff]
  %v270 = vld [vmem:[%s1 + $0x20] sm:$0xff]
  %v271 = vld [vmem:[%s1 + $0x28] sm:$0xff]
  %v272 = vld [vmem:[%s1 + $0x30] sm:$0xff]
  %v273 = vld [vmem:[%s1 + $0x38] sm:$0xff]
  %vm274 = vcmask 523264
  %v276 = vsel %vm274, %v266, 0
  %v279 = vsel %vm274, %v267, 0
  %v282 = vsel %vm274, %v268, 0
  %v285 = vsel %vm274, %v269, 0
  %v288 = vsel %vm274, %v270, 0
  %v291 = vsel %vm274, %v271, 0
  %v294 = vsel %vm274, %v272, 0
  %v297 = vsel %vm274, %v273, 0
  %299 = vmatprep.subr.mxu0 0.0
  %300 = vmatpush1.msra.mxu0 %v228
  %301 = vmatprep.subr.mxu0 0.0
  %302 = vmatpush1.msra.mxu0 %v233
  %303 = vmatprep.subr.mxu0 0.0
  %304 = vmatpush1.msra.mxu0 %v238
  %305 = vmatprep.subr.mxu0 0.0
  %306 = vmatpush1.msra.mxu0 %v243
  %307 = vmatprep.subr.mxu0 0.0
  %308 = vmatpush1.msra.mxu0 %v248
  %309 = vmatprep.subr.mxu0 0.0
  %310 = vmatpush1.msra.mxu0 %v253
  %311 = vmatprep.subr.mxu0 0.0
  %312 = vmatpush1.msra.mxu0 %v258
  %313 = vmatprep.subr.mxu0 0.0
  %314 = vmatpush1.msra.mxu0 %v263
  %315 = vmatprep.subr.mxu0 0.0
  %316 = vmatpush1.msra.mxu0 0.0
  %317 = vmatprep.subr.mxu0 0.0
  %318 = vmatpush1.msra.mxu0 0.0
  %319 = vmatprep.subr.mxu0 0.0
  %320 = vmatpush1.msra.mxu0 0.0
  %321 = vmatprep.subr.mxu0 0.0
  %322 = vmatpush1.msra.mxu0 0.0
  %323 = vmatprep.subr.mxu0 0.0
  %324 = vmatpush1.msra.mxu0 0.0
  %325 = vmatprep.subr.mxu0 0.0
  %326 = vmatpush1.msra.mxu0 0.0
  %327 = vmatprep.subr.mxu0 0.0
  %328 = vmatpush1.msra.mxu0 0.0
  %329 = vmatprep.subr.mxu0 0.0
  %330 = vmatpush1.msra.mxu0 0.0
  %331 = vmatprep.subr.mxu0 0.0
  %332 = vmatpush1.msra.mxu0 0.0
  %333 = vmatprep.subr.mxu0 0.0
  %334 = vmatpush1.msra.mxu0 0.0
  %335 = vmatprep.subr.mxu0 0.0
  %336 = vmatpush1.msra.mxu0 0.0
  %337 = vmatprep.subr.mxu0 0.0
  %338 = vmatpush1.msra.mxu0 0.0
  %339 = vmatprep.subr.mxu0 0.0
  %340 = vmatpush1.msra.mxu0 0.0
  %341 = vmatprep.subr.mxu0 0.0
  %342 = vmatpush1.msra.mxu0 0.0
  %343 = vmatprep.subr.mxu0 0.0
  %344 = vmatpush1.msra.mxu0 0.0
  %345 = vmatprep.subr.mxu0 0.0
  %346 = vmatpush1.msra.mxu0 0.0
  %347 = vmatprep.subr.mxu0 0.0
  %348 = vmatpush1.msra.mxu0 0.0
  %349 = vmatprep.subr.mxu0 0.0
  %350 = vmatpush1.msra.mxu0 0.0
  %351 = vmatprep.subr.mxu0 0.0
  %352 = vmatpush1.msra.mxu0 0.0
  %353 = vmatprep.subr.mxu0 0.0
  %354 = vmatpush1.msra.mxu0 0.0
  %355 = vmatprep.subr.mxu0 0.0
  %356 = vmatpush1.msra.mxu0 0.0
  %357 = vmatprep.subr.mxu0 0.0
  %358 = vmatpush1.msra.mxu0 0.0
  %359 = vmatprep.subr.mxu0 0.0
  %360 = vmatpush1.msra.mxu0 0.0
  %361 = vmatprep.subr.mxu0 0.0
  %362 = vmatpush1.msra.mxu0 0.0
  %363 = vmatprep.mubr.f32.mxu0 0.0
  %364 = vmatmul.mubr.f32.gmra.mrb[0].mxu0 %v276
  %v365 = vpop.f32.mrb[0].mxu0
  %v366 = vadd.f32 0.0, %v365
  %v367 = vpop.f32.mrb[0].mxu0
  %368 = vmatprep.mubr.f32.mxu0 0.0
  %369 = vmatmul.mubr.f32.gmra.mrb[0].mxu0 %v279
  %v370 = vpop.f32.mrb[0].mxu0
  %v371 = vadd.f32 0.0, %v370
  %v372 = vpop.f32.mrb[0].mxu0
  %373 = vmatprep.mubr.f32.mxu0 0.0
  %374 = vmatmul.mubr.f32.gmra.mrb[0].mxu0 %v282
  %v375 = vpop.f32.mrb[0].mxu0
  %v376 = vadd.f32 0.0, %v375
  %v377 = vpop.f32.mrb[0].mxu0
  %378 = vmatprep.mubr.f32.mxu0 0.0
  %379 = vmatmul.mubr.f32.gmra.mrb[0].mxu0 %v285
  %v380 = vpop.f32.mrb[0].mxu0
  %v381 = vadd.f32 0.0, %v380
  %v382 = vpop.f32.mrb[0].mxu0
  %383 = vmatprep.mubr.f32.mxu0 0.0
  %384 = vmatmul.mubr.f32.gmra.mrb[0].mxu0 %v288
  %v385 = vpop.f32.mrb[0].mxu0
  %v386 = vadd.f32 0.0, %v385
  %v387 = vpop.f32.mrb[0].mxu0
  %388 = vmatprep.mubr.f32.mxu0 0.0
  %389 = vmatmul.mubr.f32.gmra.mrb[0].mxu0 %v291
  %v390 = vpop.f32.mrb[0].mxu0
  %v391 = vadd.f32 0.0, %v390
  %v392 = vpop.f32.mrb[0].mxu0
  %393 = vmatprep.mubr.f32.mxu0 0.0
  %394 = vmatmul.mubr.f32.gmra.mrb[0].mxu0 %v294
  %v395 = vpop.f32.mrb[0].mxu0
  %v396 = vadd.f32 0.0, %v395
  %v397 = vpop.f32.mrb[0].mxu0
  %398 = vmatprep.mubr.f32.mxu0 0.0
  %399 = vmatmul.mubr.f32.gmra.mrb[0].mxu0 %v297
  %v400 = vpop.f32.mrb[0].mxu0
  %v401 = vadd.f32 0.0, %v400
  %v402 = vpop.f32.mrb[0].mxu0
  %403 = vdwg.mxu0
  %412 = vrot.lane.b32.xlu0 %v366, 32
  %v413 = vpop.permute.xlu0 %412
  %414 = vrot.lane.b32.xlu0 %v371, 32
  %v415 = vpop.permute.xlu0 %414
  %416 = vrot.lane.b32.xlu0 %v376, 32
  %v417 = vpop.permute.xlu0 %416
  %418 = vrot.lane.b32.xlu0 %v381, 32
  %v419 = vpop.permute.xlu0 %418
  %420 = vrot.lane.b32.xlu0 %v386, 32
  %v421 = vpop.permute.xlu0 %420
  %422 = vrot.lane.b32.xlu0 %v391, 32
  %v423 = vpop.permute.xlu0 %422
  %424 = vrot.lane.b32.xlu0 %v396, 32
  %v425 = vpop.permute.xlu0 %424
  %426 = vrot.lane.b32.xlu0 %v401, 32
  %v427 = vpop.permute.xlu0 %426
  %vm436 = vcmask 261120
  %v437 = vsel %vm436, %v228, %v413
  %v438 = vsel %vm436, %v233, %v415
  %v439 = vsel %vm436, %v238, %v417
  %v440 = vsel %vm436, %v243, %v419
  %v441 = vsel %vm436, %v248, %v421
  %v442 = vsel %vm436, %v253, %v423
  %v443 = vsel %vm436, %v258, %v425
  %v444 = vsel %vm436, %v263, %v427
  %v445 = vld [vmem:[%s4] sm:$0xff]
  %v446 = vld [vmem:[%s4 + $0x8] sm:$0xff]
  %v447 = vld [vmem:[%s4 + $0x10] sm:$0xff]
  %v448 = vld [vmem:[%s4 + $0x18] sm:$0xff]
  %v449 = vld [vmem:[%s3] sm:$0xff]
  %v450 = vld [vmem:[%s3 + $0x8] sm:$0xff]
  %v451 = vld [vmem:[%s3 + $0x10] sm:$0xff]
  %v452 = vld [vmem:[%s3 + $0x18] sm:$0xff]
  %v453 = vld [vmem:[%s3 + $0x20] sm:$0xff]
  %v454 = vld [vmem:[%s3 + $0x28] sm:$0xff]
  %v455 = vld [vmem:[%s3 + $0x30] sm:$0xff]
  %v456 = vld [vmem:[%s3 + $0x38] sm:$0xff]
  %v457 = vld [vmem:[%s5] sm:$0x1]
  %v459 = vlaneseq
  %v460 = vshrl.u32 %v459, 7
  %v461 = vsub.s32 0, %v460
  %v462 = vrot.slane %v457, %v461
  %v465 = vsel %vm274, %v437, 0
  %v468 = vsel %vm274, %v438, 0
  %v471 = vsel %vm274, %v439, 0
  %v474 = vsel %vm274, %v440, 0
  %v477 = vsel %vm274, %v441, 0
  %v480 = vsel %vm274, %v442, 0
  %v483 = vsel %vm274, %v443, 0
  %v486 = vsel %vm274, %v444, 0
  %488 = vmatprep.subr.mxu0 0.0
  %489 = vmatpush1.msra.mxu0 %v449
  %490 = vmatprep.subr.mxu0 0.0
  %491 = vmatpush1.msra.mxu0 %v450
  %492 = vmatprep.subr.mxu0 0.0
  %493 = vmatpush1.msra.mxu0 %v451
  %494 = vmatprep.subr.mxu0 0.0
  %495 = vmatpush1.msra.mxu0 %v452
  %496 = vmatprep.subr.mxu0 0.0
  %497 = vmatpush1.msra.mxu0 %v453
  %498 = vmatprep.subr.mxu0 0.0
  %499 = vmatpush1.msra.mxu0 %v454
  %500 = vmatprep.subr.mxu0 0.0
  %501 = vmatpush1.msra.mxu0 %v455
  %502 = vmatprep.subr.mxu0 0.0
  %503 = vmatpush1.msra.mxu0 %v456
  %504 = vmatprep.subr.mxu0 0.0
  %505 = vmatpush1.msra.mxu0 0.0
  %506 = vmatprep.subr.mxu0 0.0
  %507 = vmatpush1.msra.mxu0 0.0
  %508 = vmatprep.subr.mxu0 0.0
  %509 = vmatpush1.msra.mxu0 0.0
  %510 = vmatprep.subr.mxu0 0.0
  %511 = vmatpush1.msra.mxu0 0.0
  %512 = vmatprep.subr.mxu0 0.0
  %513 = vmatpush1.msra.mxu0 0.0
  %514 = vmatprep.subr.mxu0 0.0
  %515 = vmatpush1.msra.mxu0 0.0
  %516 = vmatprep.subr.mxu0 0.0
  %517 = vmatpush1.msra.mxu0 0.0
  %518 = vmatprep.subr.mxu0 0.0
  %519 = vmatpush1.msra.mxu0 0.0
  %520 = vmatprep.subr.mxu0 0.0
  %521 = vmatpush1.msra.mxu0 0.0
  %522 = vmatprep.subr.mxu0 0.0
  %523 = vmatpush1.msra.mxu0 0.0
  %524 = vmatprep.subr.mxu0 0.0
  %525 = vmatpush1.msra.mxu0 0.0
  %526 = vmatprep.subr.mxu0 0.0
  %527 = vmatpush1.msra.mxu0 0.0
  %528 = vmatprep.subr.mxu0 0.0
  %529 = vmatpush1.msra.mxu0 0.0
  %530 = vmatprep.subr.mxu0 0.0
  %531 = vmatpush1.msra.mxu0 0.0
  %532 = vmatprep.subr.mxu0 0.0
  %533 = vmatpush1.msra.mxu0 0.0
  %534 = vmatprep.subr.mxu0 0.0
  %535 = vmatpush1.msra.mxu0 0.0
  %536 = vmatprep.subr.mxu0 0.0
  %537 = vmatpush1.msra.mxu0 0.0
  %538 = vmatprep.subr.mxu0 0.0
  %539 = vmatpush1.msra.mxu0 0.0
  %540 = vmatprep.subr.mxu0 0.0
  %541 = vmatpush1.msra.mxu0 0.0
  %542 = vmatprep.subr.mxu0 0.0
  %543 = vmatpush1.msra.mxu0 0.0
  %544 = vmatprep.subr.mxu0 0.0
  %545 = vmatpush1.msra.mxu0 0.0
  %546 = vmatprep.subr.mxu0 0.0
  %547 = vmatpush1.msra.mxu0 0.0
  %548 = vmatprep.subr.mxu0 0.0
  %549 = vmatpush1.msra.mxu0 0.0
  %550 = vmatprep.subr.mxu0 0.0
  %551 = vmatpush1.msra.mxu0 0.0
  %552 = vmatprep.mubr.f32.mxu0 0.0
  %553 = vmatmul.mubr.f32.gmra.mrb[0].mxu0 %v465
  %v554 = vpop.f32.mrb[0].mxu0
  %v555 = vadd.f32 %v462, %v554
  %v556 = vpop.f32.mrb[0].mxu0
  %557 = vmatprep.mubr.f32.mxu0 0.0
  %558 = vmatmul.mubr.f32.gmra.mrb[0].mxu0 %v468
  %v559 = vpop.f32.mrb[0].mxu0
  %v560 = vadd.f32 %v462, %v559
  %v561 = vpop.f32.mrb[0].mxu0
  %562 = vmatprep.mubr.f32.mxu0 0.0
  %563 = vmatmul.mubr.f32.gmra.mrb[0].mxu0 %v471
  %v564 = vpop.f32.mrb[0].mxu0
  %v565 = vadd.f32 %v462, %v564
  %v566 = vpop.f32.mrb[0].mxu0
  %567 = vmatprep.mubr.f32.mxu0 0.0
  %568 = vmatmul.mubr.f32.gmra.mrb[0].mxu0 %v474
  %v569 = vpop.f32.mrb[0].mxu0
  %v570 = vadd.f32 %v462, %v569
  %v571 = vpop.f32.mrb[0].mxu0
  %572 = vmatprep.mubr.f32.mxu0 0.0
  %573 = vmatmul.mubr.f32.gmra.mrb[0].mxu0 %v477
  %v574 = vpop.f32.mrb[0].mxu0
  %v575 = vadd.f32 %v462, %v574
  %v576 = vpop.f32.mrb[0].mxu0
  %577 = vmatprep.mubr.f32.mxu0 0.0
  %578 = vmatmul.mubr.f32.gmra.mrb[0].mxu0 %v480
  %v579 = vpop.f32.mrb[0].mxu0
  %v580 = vadd.f32 %v462, %v579
  %v581 = vpop.f32.mrb[0].mxu0
  %582 = vmatprep.mubr.f32.mxu0 0.0
  %583 = vmatmul.mubr.f32.gmra.mrb[0].mxu0 %v483
  %v584 = vpop.f32.mrb[0].mxu0
  %v585 = vadd.f32 %v462, %v584
  %v586 = vpop.f32.mrb[0].mxu0
  %587 = vmatprep.mubr.f32.mxu0 0.0
  %588 = vmatmul.mubr.f32.gmra.mrb[0].mxu0 %v486
  %v589 = vpop.f32.mrb[0].mxu0
  %v590 = vadd.f32 %v462, %v589
  %v591 = vpop.f32.mrb[0].mxu0
  %592 = vdwg.mxu0
  %v594 = vsel %vm436, 0.0, 0
  %596 = vmatprep.subr.mxu0 0.0
  %597 = vmatpush1.msra.mxu0 %v445
  %598 = vmatprep.subr.mxu0 0.0
  %599 = vmatpush1.msra.mxu0 %v446
  %600 = vmatprep.subr.mxu0 0.0
  %601 = vmatpush1.msra.mxu0 %v447
  %602 = vmatprep.subr.mxu0 0.0
  %603 = vmatpush1.msra.mxu0 %v448
  %604 = vmatprep.subr.mxu0 0.0
  %605 = vmatpush1.msra.mxu0 0.0
  %606 = vmatprep.subr.mxu0 0.0
  %607 = vmatpush1.msra.mxu0 0.0
  %608 = vmatprep.subr.mxu0 0.0
  %609 = vmatpush1.msra.mxu0 0.0
  %610 = vmatprep.subr.mxu0 0.0
  %611 = vmatpush1.msra.mxu0 0.0
  %612 = vmatprep.subr.mxu0 0.0
  %613 = vmatpush1.msra.mxu0 0.0
  %614 = vmatprep.subr.mxu0 0.0
  %615 = vmatpush1.msra.mxu0 0.0
  %616 = vmatprep.subr.mxu0 0.0
  %617 = vmatpush1.msra.mxu0 0.0
  %618 = vmatprep.subr.mxu0 0.0
  %619 = vmatpush1.msra.mxu0 0.0
  %620 = vmatprep.subr.mxu0 0.0
  %621 = vmatpush1.msra.mxu0 0.0
  %622 = vmatprep.subr.mxu0 0.0
  %623 = vmatpush1.msra.mxu0 0.0
  %624 = vmatprep.subr.mxu0 0.0
  %625 = vmatpush1.msra.mxu0 0.0
  %626 = vmatprep.subr.mxu0 0.0
  %627 = vmatpush1.msra.mxu0 0.0
  %628 = vmatprep.subr.mxu0 0.0
  %629 = vmatpush1.msra.mxu0 0.0
  %630 = vmatprep.subr.mxu0 0.0
  %631 = vmatpush1.msra.mxu0 0.0
  %632 = vmatprep.subr.mxu0 0.0
  %633 = vmatpush1.msra.mxu0 0.0
  %634 = vmatprep.subr.mxu0 0.0
  %635 = vmatpush1.msra.mxu0 0.0
  %636 = vmatprep.subr.mxu0 0.0
  %637 = vmatpush1.msra.mxu0 0.0
  %638 = vmatprep.subr.mxu0 0.0
  %639 = vmatpush1.msra.mxu0 0.0
  %640 = vmatprep.subr.mxu0 0.0
  %641 = vmatpush1.msra.mxu0 0.0
  %642 = vmatprep.subr.mxu0 0.0
  %643 = vmatpush1.msra.mxu0 0.0
  %644 = vmatprep.subr.mxu0 0.0
  %645 = vmatpush1.msra.mxu0 0.0
  %646 = vmatprep.subr.mxu0 0.0
  %647 = vmatpush1.msra.mxu0 0.0
  %648 = vmatprep.subr.mxu0 0.0
  %649 = vmatpush1.msra.mxu0 0.0
  %650 = vmatprep.subr.mxu0 0.0
  %651 = vmatpush1.msra.mxu0 0.0
  %652 = vmatprep.subr.mxu0 0.0
  %653 = vmatpush1.msra.mxu0 0.0
  %654 = vmatprep.subr.mxu0 0.0
  %655 = vmatpush1.msra.mxu0 0.0
  %656 = vmatprep.subr.mxu0 0.0
  %657 = vmatpush1.msra.mxu0 0.0
  %658 = vmatprep.subr.mxu0 0.0
  %659 = vmatpush1.msra.mxu0 0.0
  %660 = vmatprep.mubr.f32.mxu0 0.0
  %661 = vmatmul.mubr.f32.gmra.mrb[0].mxu0 %v594
  %v662 = vpop.f32.mrb[0].mxu0
  %v663 = vadd.f32 0.0, %v662
  %v664 = vpop.f32.mrb[0].mxu0
  %665 = vdwg.mxu0
  %v666 = vadd.f32 %v555, %v663
  %v667 = vxor.u32 %v666, 2147483648
  %v668 = vmul.f32 %v667, 1.442695
  %v669 = vpow.pop %v668
  %v670 = vadd.f32 %v669, 1.0
  %v671 = vrcp.pop %v670
  %v672 = vmul.f32 1.0, %v671
  %v673 = vtanh.pop %v666
  %v674 = vmul.f32 %v672, 0.0
  %676 = vrot.lane.b32.xlu0 %v673, 32
  %v677 = vpop.permute.xlu0 %676
  %v679 = vmul.f32 %v672, %v677
  %681 = vrot.lane.b32.xlu0 %v679, 32
  %v682 = vpop.permute.xlu0 %681
  %v684 = vadd.f32 %v674, %v682
  %v685 = vtanh.pop %v684
  %687 = vrot.lane.b32.xlu0 %v685, 32
  %v688 = vpop.permute.xlu0 %687
  %v690 = vmul.f32 %v672, %v688
  %692 = vrot.lane.b32.xlu0 %v690, 64
  %v693 = vpop.permute.xlu0 %692
  %695 = vst.msk [vmem:[#allocation2] sm:$0xff] %vm436, %v693
  %v696 = vsel %vm436, %v693, 0
  %698 = vmatprep.subr.mxu0 0.0
  %699 = vmatpush1.msra.mxu0 %v445
  %700 = vmatprep.subr.mxu0 0.0
  %701 = vmatpush1.msra.mxu0 %v446
  %702 = vmatprep.subr.mxu0 0.0
  %703 = vmatpush1.msra.mxu0 %v447
  %704 = vmatprep.subr.mxu0 0.0
  %705 = vmatpush1.msra.mxu0 %v448
  %706 = vmatprep.subr.mxu0 0.0
  %707 = vmatpush1.msra.mxu0 0.0
  %708 = vmatprep.subr.mxu0 0.0
  %709 = vmatpush1.msra.mxu0 0.0
  %710 = vmatprep.subr.mxu0 0.0
  %711 = vmatpush1.msra.mxu0 0.0
  %712 = vmatprep.subr.mxu0 0.0
  %713 = vmatpush1.msra.mxu0 0.0
  %714 = vmatprep.subr.mxu0 0.0
  %715 = vmatpush1.msra.mxu0 0.0
  %716 = vmatprep.subr.mxu0 0.0
  %717 = vmatpush1.msra.mxu0 0.0
  %718 = vmatprep.subr.mxu0 0.0
  %719 = vmatpush1.msra.mxu0 0.0
  %720 = vmatprep.subr.mxu0 0.0
  %721 = vmatpush1.msra.mxu0 0.0
  %722 = vmatprep.subr.mxu0 0.0
  %723 = vmatpush1.msra.mxu0 0.0
  %724 = vmatprep.subr.mxu0 0.0
  %725 = vmatpush1.msra.mxu0 0.0
  %726 = vmatprep.subr.mxu0 0.0
  %727 = vmatpush1.msra.mxu0 0.0
  %728 = vmatprep.subr.mxu0 0.0
  %729 = vmatpush1.msra.mxu0 0.0
  %730 = vmatprep.subr.mxu0 0.0
  %731 = vmatpush1.msra.mxu0 0.0
  %732 = vmatprep.subr.mxu0 0.0
  %733 = vmatpush1.msra.mxu0 0.0
  %734 = vmatprep.subr.mxu0 0.0
  %735 = vmatpush1.msra.mxu0 0.0
  %736 = vmatprep.subr.mxu0 0.0
  %737 = vmatpush1.msra.mxu0 0.0
  %738 = vmatprep.subr.mxu0 0.0
  %739 = vmatpush1.msra.mxu0 0.0
  %740 = vmatprep.subr.mxu0 0.0
  %741 = vmatpush1.msra.mxu0 0.0
  %742 = vmatprep.subr.mxu0 0.0
  %743 = vmatpush1.msra.mxu0 0.0
  %744 = vmatprep.subr.mxu0 0.0
  %745 = vmatpush1.msra.mxu0 0.0
  %746 = vmatprep.subr.mxu0 0.0
  %747 = vmatpush1.msra.mxu0 0.0
  %748 = vmatprep.subr.mxu0 0.0
  %749 = vmatpush1.msra.mxu0 0.0
  %750 = vmatprep.subr.mxu0 0.0
  %751 = vmatpush1.msra.mxu0 0.0
  %752 = vmatprep.subr.mxu0 0.0
  %753 = vmatpush1.msra.mxu0 0.0
  %754 = vmatprep.subr.mxu0 0.0
  %755 = vmatpush1.msra.mxu0 0.0
  %756 = vmatprep.subr.mxu0 0.0
  %757 = vmatpush1.msra.mxu0 0.0
  %758 = vmatprep.subr.mxu0 0.0
  %759 = vmatpush1.msra.mxu0 0.0
  %760 = vmatprep.subr.mxu0 0.0
  %761 = vmatpush1.msra.mxu0 0.0
  %762 = vmatprep.mubr.f32.mxu0 0.0
  %763 = vmatmul.mubr.f32.gmra.mrb[0].mxu0 %v696
  %v764 = vpop.f32.mrb[0].mxu0
  %v765 = vadd.f32 0.0, %v764
  %v766 = vpop.f32.mrb[0].mxu0
  %767 = vdwg.mxu0
  %v768 = vadd.f32 %v560, %v765
  %v769 = vxor.u32 %v768, 2147483648
  %v770 = vmul.f32 %v769, 1.442695
  %v771 = vpow.pop %v770
  %v772 = vadd.f32 %v771, 1.0
  %v773 = vrcp.pop %v772
  %v774 = vmul.f32 1.0, %v773
  %v775 = vtanh.pop %v768
  %v776 = vmul.f32 %v774, %v684
  %778 = vrot.lane.b32.xlu0 %v775, 32
  %v779 = vpop.permute.xlu0 %778
  %v781 = vmul.f32 %v774, %v779
  %783 = vrot.lane.b32.xlu0 %v781, 32
  %v784 = vpop.permute.xlu0 %783
  %v786 = vadd.f32 %v776, %v784
  %v787 = vtanh.pop %v786
  %789 = vrot.lane.b32.xlu0 %v787, 32
  %v790 = vpop.permute.xlu0 %789
  %v792 = vmul.f32 %v774, %v790
  %794 = vrot.lane.b32.xlu0 %v792, 64
  %v795 = vpop.permute.xlu0 %794
  %797 = vst.msk [vmem:[#allocation2 + $0x8] sm:$0xff] %vm436, %v795
  %v798 = vsel %vm436, %v795, 0
  %800 = vmatprep.subr.mxu0 0.0
  %801 = vmatpush1.msra.mxu0 %v445
  %802 = vmatprep.subr.mxu0 0.0
  %803 = vmatpush1.msra.mxu0 %v446
  %804 = vmatprep.subr.mxu0 0.0
  %805 = vmatpush1.msra.mxu0 %v447
  %806 = vmatprep.subr.mxu0 0.0
  %807 = vmatpush1.msra.mxu0 %v448
  %808 = vmatprep.subr.mxu0 0.0
  %809 = vmatpush1.msra.mxu0 0.0
  %810 = vmatprep.subr.mxu0 0.0
  %811 = vmatpush1.msra.mxu0 0.0
  %812 = vmatprep.subr.mxu0 0.0
  %813 = vmatpush1.msra.mxu0 0.0
  %814 = vmatprep.subr.mxu0 0.0
  %815 = vmatpush1.msra.mxu0 0.0
  %816 = vmatprep.subr.mxu0 0.0
  %817 = vmatpush1.msra.mxu0 0.0
  %818 = vmatprep.subr.mxu0 0.0
  %819 = vmatpush1.msra.mxu0 0.0
  %820 = vmatprep.subr.mxu0 0.0
  %821 = vmatpush1.msra.mxu0 0.0
  %822 = vmatprep.subr.mxu0 0.0
  %823 = vmatpush1.msra.mxu0 0.0
  %824 = vmatprep.subr.mxu0 0.0
  %825 = vmatpush1.msra.mxu0 0.0
  %826 = vmatprep.subr.mxu0 0.0
  %827 = vmatpush1.msra.mxu0 0.0
  %828 = vmatprep.subr.mxu0 0.0
  %829 = vmatpush1.msra.mxu0 0.0
  %830 = vmatprep.subr.mxu0 0.0
  %831 = vmatpush1.msra.mxu0 0.0
  %832 = vmatprep.subr.mxu0 0.0
  %833 = vmatpush1.msra.mxu0 0.0
  %834 = vmatprep.subr.mxu0 0.0
  %835 = vmatpush1.msra.mxu0 0.0
  %836 = vmatprep.subr.mxu0 0.0
  %837 = vmatpush1.msra.mxu0 0.0
  %838 = vmatprep.subr.mxu0 0.0
  %839 = vmatpush1.msra.mxu0 0.0
  %840 = vmatprep.subr.mxu0 0.0
  %841 = vmatpush1.msra.mxu0 0.0
  %842 = vmatprep.subr.mxu0 0.0
  %843 = vmatpush1.msra.mxu0 0.0
  %844 = vmatprep.subr.mxu0 0.0
  %845 = vmatpush1.msra.mxu0 0.0
  %846 = vmatprep.subr.mxu0 0.0
  %847 = vmatpush1.msra.mxu0 0.0
  %848 = vmatprep.subr.mxu0 0.0
  %849 = vmatpush1.msra.mxu0 0.0
  %850 = vmatprep.subr.mxu0 0.0
  %851 = vmatpush1.msra.mxu0 0.0
  %852 = vmatprep.subr.mxu0 0.0
  %853 = vmatpush1.msra.mxu0 0.0
  %854 = vmatprep.subr.mxu0 0.0
  %855 = vmatpush1.msra.mxu0 0.0
  %856 = vmatprep.subr.mxu0 0.0
  %857 = vmatpush1.msra.mxu0 0.0
  %858 = vmatprep.subr.mxu0 0.0
  %859 = vmatpush1.msra.mxu0 0.0
  %860 = vmatprep.subr.mxu0 0.0
  %861 = vmatpush1.msra.mxu0 0.0
  %862 = vmatprep.subr.mxu0 0.0
  %863 = vmatpush1.msra.mxu0 0.0
  %864 = vmatprep.mubr.f32.mxu0 0.0
  %865 = vmatmul.mubr.f32.gmra.mrb[0].mxu0 %v798
  %v866 = vpop.f32.mrb[0].mxu0
  %v867 = vadd.f32 0.0, %v866
  %v868 = vpop.f32.mrb[0].mxu0
  %869 = vdwg.mxu0
  %v870 = vadd.f32 %v565, %v867
  %v871 = vxor.u32 %v870, 2147483648
  %v872 = vmul.f32 %v871, 1.442695
  %v873 = vpow.pop %v872
  %v874 = vadd.f32 %v873, 1.0
  %v875 = vrcp.pop %v874
  %v876 = vmul.f32 1.0, %v875
  %v877 = vtanh.pop %v870
  %v878 = vmul.f32 %v876, %v786
  %880 = vrot.lane.b32.xlu0 %v877, 32
  %v881 = vpop.permute.xlu0 %880
  %v883 = vmul.f32 %v876, %v881
  %885 = vrot.lane.b32.xlu0 %v883, 32
  %v886 = vpop.permute.xlu0 %885
  %v888 = vadd.f32 %v878, %v886
  %v889 = vtanh.pop %v888
  %891 = vrot.lane.b32.xlu0 %v889, 32
  %v892 = vpop.permute.xlu0 %891
  %v894 = vmul.f32 %v876, %v892
  %896 = vrot.lane.b32.xlu0 %v894, 64
  %v897 = vpop.permute.xlu0 %896
  %899 = vst.msk [vmem:[#allocation2 + $0x10] sm:$0xff] %vm436, %v897
  %v900 = vsel %vm436, %v897, 0
  %902 = vmatprep.subr.mxu0 0.0
  %903 = vmatpush1.msra.mxu0 %v445
  %904 = vmatprep.subr.mxu0 0.0
  %905 = vmatpush1.msra.mxu0 %v446
  %906 = vmatprep.subr.mxu0 0.0
  %907 = vmatpush1.msra.mxu0 %v447
  %908 = vmatprep.subr.mxu0 0.0
  %909 = vmatpush1.msra.mxu0 %v448
  %910 = vmatprep.subr.mxu0 0.0
  %911 = vmatpush1.msra.mxu0 0.0
  %912 = vmatprep.subr.mxu0 0.0
  %913 = vmatpush1.msra.mxu0 0.0
  %914 = vmatprep.subr.mxu0 0.0
  %915 = vmatpush1.msra.mxu0 0.0
  %916 = vmatprep.subr.mxu0 0.0
  %917 = vmatpush1.msra.mxu0 0.0
  %918 = vmatprep.subr.mxu0 0.0
  %919 = vmatpush1.msra.mxu0 0.0
  %920 = vmatprep.subr.mxu0 0.0
  %921 = vmatpush1.msra.mxu0 0.0
  %922 = vmatprep.subr.mxu0 0.0
  %923 = vmatpush1.msra.mxu0 0.0
  %924 = vmatprep.subr.mxu0 0.0
  %925 = vmatpush1.msra.mxu0 0.0
  %926 = vmatprep.subr.mxu0 0.0
  %927 = vmatpush1.msra.mxu0 0.0
  %928 = vmatprep.subr.mxu0 0.0
  %929 = vmatpush1.msra.mxu0 0.0
  %930 = vmatprep.subr.mxu0 0.0
  %931 = vmatpush1.msra.mxu0 0.0
  %932 = vmatprep.subr.mxu0 0.0
  %933 = vmatpush1.msra.mxu0 0.0
  %934 = vmatprep.subr.mxu0 0.0
  %935 = vmatpush1.msra.mxu0 0.0
  %936 = vmatprep.subr.mxu0 0.0
  %937 = vmatpush1.msra.mxu0 0.0
  %938 = vmatprep.subr.mxu0 0.0
  %939 = vmatpush1.msra.mxu0 0.0
  %940 = vmatprep.subr.mxu0 0.0
  %941 = vmatpush1.msra.mxu0 0.0
  %942 = vmatprep.subr.mxu0 0.0
  %943 = vmatpush1.msra.mxu0 0.0
  %944 = vmatprep.subr.mxu0 0.0
  %945 = vmatpush1.msra.mxu0 0.0
  %946 = vmatprep.subr.mxu0 0.0
  %947 = vmatpush1.msra.mxu0 0.0
  %948 = vmatprep.subr.mxu0 0.0
  %949 = vmatpush1.msra.mxu0 0.0
  %950 = vmatprep.subr.mxu0 0.0
  %951 = vmatpush1.msra.mxu0 0.0
  %952 = vmatprep.subr.mxu0 0.0
  %953 = vmatpush1.msra.mxu0 0.0
  %954 = vmatprep.subr.mxu0 0.0
  %955 = vmatpush1.msra.mxu0 0.0
  %956 = vmatprep.subr.mxu0 0.0
  %957 = vmatpush1.msra.mxu0 0.0
  %958 = vmatprep.subr.mxu0 0.0
  %959 = vmatpush1.msra.mxu0 0.0
  %960 = vmatprep.subr.mxu0 0.0
  %961 = vmatpush1.msra.mxu0 0.0
  %962 = vmatprep.subr.mxu0 0.0
  %963 = vmatpush1.msra.mxu0 0.0
  %964 = vmatprep.subr.mxu0 0.0
  %965 = vmatpush1.msra.mxu0 0.0
  %966 = vmatprep.mubr.f32.mxu0 0.0
  %967 = vmatmul.mubr.f32.gmra.mrb[0].mxu0 %v900
  %v968 = vpop.f32.mrb[0].mxu0
  %v969 = vadd.f32 0.0, %v968
  %v970 = vpop.f32.mrb[0].mxu0
  %971 = vdwg.mxu0
  %v972 = vadd.f32 %v570, %v969
  %v973 = vxor.u32 %v972, 2147483648
  %v974 = vmul.f32 %v973, 1.442695
  %v975 = vpow.pop %v974
  %v976 = vadd.f32 %v975, 1.0
  %v977 = vrcp.pop %v976
  %v978 = vmul.f32 1.0, %v977
  %v979 = vtanh.pop %v972
  %v980 = vmul.f32 %v978, %v888
  %982 = vrot.lane.b32.xlu0 %v979, 32
  %v983 = vpop.permute.xlu0 %982
  %v985 = vmul.f32 %v978, %v983
  %987 = vrot.lane.b32.xlu0 %v985, 32
  %v988 = vpop.permute.xlu0 %987
  %v990 = vadd.f32 %v980, %v988
  %v991 = vtanh.pop %v990
  %993 = vrot.lane.b32.xlu0 %v991, 32
  %v994 = vpop.permute.xlu0 %993
  %v996 = vmul.f32 %v978, %v994
  %998 = vrot.lane.b32.xlu0 %v996, 64
  %v999 = vpop.permute.xlu0 %998
  %1001 = vst.msk [vmem:[#allocation2 + $0x18] sm:$0xff] %vm436, %v999
  %v1002 = vsel %vm436, %v999, 0
  %1004 = vmatprep.subr.mxu0 0.0
  %1005 = vmatpush1.msra.mxu0 %v445
  %1006 = vmatprep.subr.mxu0 0.0
  %1007 = vmatpush1.msra.mxu0 %v446
  %1008 = vmatprep.subr.mxu0 0.0
  %1009 = vmatpush1.msra.mxu0 %v447
  %1010 = vmatprep.subr.mxu0 0.0
  %1011 = vmatpush1.msra.mxu0 %v448
  %1012 = vmatprep.subr.mxu0 0.0
  %1013 = vmatpush1.msra.mxu0 0.0
  %1014 = vmatprep.subr.mxu0 0.0
  %1015 = vmatpush1.msra.mxu0 0.0
  %1016 = vmatprep.subr.mxu0 0.0
  %1017 = vmatpush1.msra.mxu0 0.0
  %1018 = vmatprep.subr.mxu0 0.0
  %1019 = vmatpush1.msra.mxu0 0.0
  %1020 = vmatprep.subr.mxu0 0.0
  %1021 = vmatpush1.msra.mxu0 0.0
  %1022 = vmatprep.subr.mxu0 0.0
  %1023 = vmatpush1.msra.mxu0 0.0
  %1024 = vmatprep.subr.mxu0 0.0
  %1025 = vmatpush1.msra.mxu0 0.0
  %1026 = vmatprep.subr.mxu0 0.0
  %1027 = vmatpush1.msra.mxu0 0.0
  %1028 = vmatprep.subr.mxu0 0.0
  %1029 = vmatpush1.msra.mxu0 0.0
  %1030 = vmatprep.subr.mxu0 0.0
  %1031 = vmatpush1.msra.mxu0 0.0
  %1032 = vmatprep.subr.mxu0 0.0
  %1033 = vmatpush1.msra.mxu0 0.0
  %1034 = vmatprep.subr.mxu0 0.0
  %1035 = vmatpush1.msra.mxu0 0.0
  %1036 = vmatprep.subr.mxu0 0.0
  %1037 = vmatpush1.msra.mxu0 0.0
  %1038 = vmatprep.subr.mxu0 0.0
  %1039 = vmatpush1.msra.mxu0 0.0
  %1040 = vmatprep.subr.mxu0 0.0
  %1041 = vmatpush1.msra.mxu0 0.0
  %1042 = vmatprep.subr.mxu0 0.0
  %1043 = vmatpush1.msra.mxu0 0.0
  %1044 = vmatprep.subr.mxu0 0.0
  %1045 = vmatpush1.msra.mxu0 0.0
  %1046 = vmatprep.subr.mxu0 0.0
  %1047 = vmatpush1.msra.mxu0 0.0
  %1048 = vmatprep.subr.mxu0 0.0
  %1049 = vmatpush1.msra.mxu0 0.0
  %1050 = vmatprep.subr.mxu0 0.0
  %1051 = vmatpush1.msra.mxu0 0.0
  %1052 = vmatprep.subr.mxu0 0.0
  %1053 = vmatpush1.msra.mxu0 0.0
  %1054 = vmatprep.subr.mxu0 0.0
  %1055 = vmatpush1.msra.mxu0 0.0
  %1056 = vmatprep.subr.mxu0 0.0
  %1057 = vmatpush1.msra.mxu0 0.0
  %1058 = vmatprep.subr.mxu0 0.0
  %1059 = vmatpush1.msra.mxu0 0.0
  %1060 = vmatprep.subr.mxu0 0.0
  %1061 = vmatpush1.msra.mxu0 0.0
  %1062 = vmatprep.subr.mxu0 0.0
  %1063 = vmatpush1.msra.mxu0 0.0
  %1064 = vmatprep.subr.mxu0 0.0
  %1065 = vmatpush1.msra.mxu0 0.0
  %1066 = vmatprep.subr.mxu0 0.0
  %1067 = vmatpush1.msra.mxu0 0.0
  %1068 = vmatprep.mubr.f32.mxu0 0.0
  %1069 = vmatmul.mubr.f32.gmra.mrb[0].mxu0 %v1002
  %v1070 = vpop.f32.mrb[0].mxu0
  %v1071 = vadd.f32 0.0, %v1070
  %v1072 = vpop.f32.mrb[0].mxu0
  %1073 = vdwg.mxu0
  %v1074 = vadd.f32 %v575, %v1071
  %v1075 = vxor.u32 %v1074, 2147483648
  %v1076 = vmul.f32 %v1075, 1.442695
  %v1077 = vpow.pop %v1076
  %v1078 = vadd.f32 %v1077, 1.0
  %v1079 = vrcp.pop %v1078
  %v1080 = vmul.f32 1.0, %v1079
  %v1081 = vtanh.pop %v1074
  %v1082 = vmul.f32 %v1080, %v990
  %1084 = vrot.lane.b32.xlu0 %v1081, 32
  %v1085 = vpop.permute.xlu0 %1084
  %v1087 = vmul.f32 %v1080, %v1085
  %1089 = vrot.lane.b32.xlu0 %v1087, 32
  %v1090 = vpop.permute.xlu0 %1089
  %v1092 = vadd.f32 %v1082, %v1090
  %v1093 = vtanh.pop %v1092
  %1095 = vrot.lane.b32.xlu0 %v1093, 32
  %v1096 = vpop.permute.xlu0 %1095
  %v1098 = vmul.f32 %v1080, %v1096
  %1100 = vrot.lane.b32.xlu0 %v1098, 64
  %v1101 = vpop.permute.xlu0 %1100
  %1103 = vst.msk [vmem:[#allocation2 + $0x20] sm:$0xff] %vm436, %v1101
  %v1104 = vsel %vm436, %v1101, 0
  %1106 = vmatprep.subr.mxu0 0.0
  %1107 = vmatpush1.msra.mxu0 %v445
  %1108 = vmatprep.subr.mxu0 0.0
  %1109 = vmatpush1.msra.mxu0 %v446
  %1110 = vmatprep.subr.mxu0 0.0
  %1111 = vmatpush1.msra.mxu0 %v447
  %1112 = vmatprep.subr.mxu0 0.0
  %1113 = vmatpush1.msra.mxu0 %v448
  %1114 = vmatprep.subr.mxu0 0.0
  %1115 = vmatpush1.msra.mxu0 0.0
  %1116 = vmatprep.subr.mxu0 0.0
  %1117 = vmatpush1.msra.mxu0 0.0
  %1118 = vmatprep.subr.mxu0 0.0
  %1119 = vmatpush1.msra.mxu0 0.0
  %1120 = vmatprep.subr.mxu0 0.0
  %1121 = vmatpush1.msra.mxu0 0.0
  %1122 = vmatprep.subr.mxu0 0.0
  %1123 = vmatpush1.msra.mxu0 0.0
  %1124 = vmatprep.subr.mxu0 0.0
  %1125 = vmatpush1.msra.mxu0 0.0
  %1126 = vmatprep.subr.mxu0 0.0
  %1127 = vmatpush1.msra.mxu0 0.0
  %1128 = vmatprep.subr.mxu0 0.0
  %1129 = vmatpush1.msra.mxu0 0.0
  %1130 = vmatprep.subr.mxu0 0.0
  %1131 = vmatpush1.msra.mxu0 0.0
  %1132 = vmatprep.subr.mxu0 0.0
  %1133 = vmatpush1.msra.mxu0 0.0
  %1134 = vmatprep.subr.mxu0 0.0
  %1135 = vmatpush1.msra.mxu0 0.0
  %1136 = vmatprep.subr.mxu0 0.0
  %1137 = vmatpush1.msra.mxu0 0.0
  %1138 = vmatprep.subr.mxu0 0.0
  %1139 = vmatpush1.msra.mxu0 0.0
  %1140 = vmatprep.subr.mxu0 0.0
  %1141 = vmatpush1.msra.mxu0 0.0
  %1142 = vmatprep.subr.mxu0 0.0
  %1143 = vmatpush1.msra.mxu0 0.0
  %1144 = vmatprep.subr.mxu0 0.0
  %1145 = vmatpush1.msra.mxu0 0.0
  %1146 = vmatprep.subr.mxu0 0.0
  %1147 = vmatpush1.msra.mxu0 0.0
  %1148 = vmatprep.subr.mxu0 0.0
  %1149 = vmatpush1.msra.mxu0 0.0
  %1150 = vmatprep.subr.mxu0 0.0
  %1151 = vmatpush1.msra.mxu0 0.0
  %1152 = vmatprep.subr.mxu0 0.0
  %1153 = vmatpush1.msra.mxu0 0.0
  %1154 = vmatprep.subr.mxu0 0.0
  %1155 = vmatpush1.msra.mxu0 0.0
  %1156 = vmatprep.subr.mxu0 0.0
  %1157 = vmatpush1.msra.mxu0 0.0
  %1158 = vmatprep.subr.mxu0 0.0
  %1159 = vmatpush1.msra.mxu0 0.0
  %1160 = vmatprep.subr.mxu0 0.0
  %1161 = vmatpush1.msra.mxu0 0.0
  %1162 = vmatprep.subr.mxu0 0.0
  %1163 = vmatpush1.msra.mxu0 0.0
  %1164 = vmatprep.subr.mxu0 0.0
  %1165 = vmatpush1.msra.mxu0 0.0
  %1166 = vmatprep.subr.mxu0 0.0
  %1167 = vmatpush1.msra.mxu0 0.0
  %1168 = vmatprep.subr.mxu0 0.0
  %1169 = vmatpush1.msra.mxu0 0.0
  %1170 = vmatprep.mubr.f32.mxu0 0.0
  %1171 = vmatmul.mubr.f32.gmra.mrb[0].mxu0 %v1104
  %v1172 = vpop.f32.mrb[0].mxu0
  %v1173 = vadd.f32 0.0, %v1172
  %v1174 = vpop.f32.mrb[0].mxu0
  %1175 = vdwg.mxu0
  %v1176 = vadd.f32 %v580, %v1173
  %v1177 = vxor.u32 %v1176, 2147483648
  %v1178 = vmul.f32 %v1177, 1.442695
  %v1179 = vpow.pop %v1178
  %v1180 = vadd.f32 %v1179, 1.0
  %v1181 = vrcp.pop %v1180
  %v1182 = vmul.f32 1.0, %v1181
  %v1183 = vtanh.pop %v1176
  %v1184 = vmul.f32 %v1182, %v1092
  %1186 = vrot.lane.b32.xlu0 %v1183, 32
  %v1187 = vpop.permute.xlu0 %1186
  %v1189 = vmul.f32 %v1182, %v1187
  %1191 = vrot.lane.b32.xlu0 %v1189, 32
  %v1192 = vpop.permute.xlu0 %1191
  %v1194 = vadd.f32 %v1184, %v1192
  %v1195 = vtanh.pop %v1194
  %1197 = vrot.lane.b32.xlu0 %v1195, 32
  %v1198 = vpop.permute.xlu0 %1197
  %v1200 = vmul.f32 %v1182, %v1198
  %1202 = vrot.lane.b32.xlu0 %v1200, 64
  %v1203 = vpop.permute.xlu0 %1202
  %1205 = vst.msk [vmem:[#allocation2 + $0x28] sm:$0xff] %vm436, %v1203
  %v1206 = vsel %vm436, %v1203, 0
  %1208 = vmatprep.subr.mxu0 0.0
  %1209 = vmatpush1.msra.mxu0 %v445
  %1210 = vmatprep.subr.mxu0 0.0
  %1211 = vmatpush1.msra.mxu0 %v446
  %1212 = vmatprep.subr.mxu0 0.0
  %1213 = vmatpush1.msra.mxu0 %v447
  %1214 = vmatprep.subr.mxu0 0.0
  %1215 = vmatpush1.msra.mxu0 %v448
  %1216 = vmatprep.subr.mxu0 0.0
  %1217 = vmatpush1.msra.mxu0 0.0
  %1218 = vmatprep.subr.mxu0 0.0
  %1219 = vmatpush1.msra.mxu0 0.0
  %1220 = vmatprep.subr.mxu0 0.0
  %1221 = vmatpush1.msra.mxu0 0.0
  %1222 = vmatprep.subr.mxu0 0.0
  %1223 = vmatpush1.msra.mxu0 0.0
  %1224 = vmatprep.subr.mxu0 0.0
  %1225 = vmatpush1.msra.mxu0 0.0
  %1226 = vmatprep.subr.mxu0 0.0
  %1227 = vmatpush1.msra.mxu0 0.0
  %1228 = vmatprep.subr.mxu0 0.0
  %1229 = vmatpush1.msra.mxu0 0.0
  %1230 = vmatprep.subr.mxu0 0.0
  %1231 = vmatpush1.msra.mxu0 0.0
  %1232 = vmatprep.subr.mxu0 0.0
  %1233 = vmatpush1.msra.mxu0 0.0
  %1234 = vmatprep.subr.mxu0 0.0
  %1235 = vmatpush1.msra.mxu0 0.0
  %1236 = vmatprep.subr.mxu0 0.0
  %1237 = vmatpush1.msra.mxu0 0.0
  %1238 = vmatprep.subr.mxu0 0.0
  %1239 = vmatpush1.msra.mxu0 0.0
  %1240 = vmatprep.subr.mxu0 0.0
  %1241 = vmatpush1.msra.mxu0 0.0
  %1242 = vmatprep.subr.mxu0 0.0
  %1243 = vmatpush1.msra.mxu0 0.0
  %1244 = vmatprep.subr.mxu0 0.0
  %1245 = vmatpush1.msra.mxu0 0.0
  %1246 = vmatprep.subr.mxu0 0.0
  %1247 = vmatpush1.msra.mxu0 0.0
  %1248 = vmatprep.subr.mxu0 0.0
  %1249 = vmatpush1.msra.mxu0 0.0
  %1250 = vmatprep.subr.mxu0 0.0
  %1251 = vmatpush1.msra.mxu0 0.0
  %1252 = vmatprep.subr.mxu0 0.0
  %1253 = vmatpush1.msra.mxu0 0.0
  %1254 = vmatprep.subr.mxu0 0.0
  %1255 = vmatpush1.msra.mxu0 0.0
  %1256 = vmatprep.subr.mxu0 0.0
  %1257 = vmatpush1.msra.mxu0 0.0
  %1258 = vmatprep.subr.mxu0 0.0
  %1259 = vmatpush1.msra.mxu0 0.0
  %1260 = vmatprep.subr.mxu0 0.0
  %1261 = vmatpush1.msra.mxu0 0.0
  %1262 = vmatprep.subr.mxu0 0.0
  %1263 = vmatpush1.msra.mxu0 0.0
  %1264 = vmatprep.subr.mxu0 0.0
  %1265 = vmatpush1.msra.mxu0 0.0
  %1266 = vmatprep.subr.mxu0 0.0
  %1267 = vmatpush1.msra.mxu0 0.0
  %1268 = vmatprep.subr.mxu0 0.0
  %1269 = vmatpush1.msra.mxu0 0.0
  %1270 = vmatprep.subr.mxu0 0.0
  %1271 = vmatpush1.msra.mxu0 0.0
  %1272 = vmatprep.mubr.f32.mxu0 0.0
  %1273 = vmatmul.mubr.f32.gmra.mrb[0].mxu0 %v1206
  %v1274 = vpop.f32.mrb[0].mxu0
  %v1275 = vadd.f32 0.0, %v1274
  %v1276 = vpop.f32.mrb[0].mxu0
  %1277 = vdwg.mxu0
  %v1278 = vadd.f32 %v585, %v1275
  %v1279 = vxor.u32 %v1278, 2147483648
  %v1280 = vmul.f32 %v1279, 1.442695
  %v1281 = vpow.pop %v1280
  %v1282 = vadd.f32 %v1281, 1.0
  %v1283 = vrcp.pop %v1282
  %v1284 = vmul.f32 1.0, %v1283
  %v1285 = vtanh.pop %v1278
  %v1286 = vmul.f32 %v1284, %v1194
  %1288 = vrot.lane.b32.xlu0 %v1285, 32
  %v1289 = vpop.permute.xlu0 %1288
  %v1291 = vmul.f32 %v1284, %v1289
  %1293 = vrot.lane.b32.xlu0 %v1291, 32
  %v1294 = vpop.permute.xlu0 %1293
  %v1296 = vadd.f32 %v1286, %v1294
  %v1297 = vtanh.pop %v1296
  %1299 = vrot.lane.b32.xlu0 %v1297, 32
  %v1300 = vpop.permute.xlu0 %1299
  %v1302 = vmul.f32 %v1284, %v1300
  %1304 = vrot.lane.b32.xlu0 %v1302, 64
  %v1305 = vpop.permute.xlu0 %1304
  %1307 = vst.msk [vmem:[#allocation2 + $0x30] sm:$0xff] %vm436, %v1305
  %v1308 = vsel %vm436, %v1305, 0
  %1310 = vmatprep.subr.mxu0 0.0
  %1311 = vmatpush1.msra.mxu0 %v445
  %1312 = vmatprep.subr.mxu0 0.0
  %1313 = vmatpush1.msra.mxu0 %v446
  %1314 = vmatprep.subr.mxu0 0.0
  %1315 = vmatpush1.msra.mxu0 %v447
  %1316 = vmatprep.subr.mxu0 0.0
  %1317 = vmatpush1.msra.mxu0 %v448
  %1318 = vmatprep.subr.mxu0 0.0
  %1319 = vmatpush1.msra.mxu0 0.0
  %1320 = vmatprep.subr.mxu0 0.0
  %1321 = vmatpush1.msra.mxu0 0.0
  %1322 = vmatprep.subr.mxu0 0.0
  %1323 = vmatpush1.msra.mxu0 0.0
  %1324 = vmatprep.subr.mxu0 0.0
  %1325 = vmatpush1.msra.mxu0 0.0
  %1326 = vmatprep.subr.mxu0 0.0
  %1327 = vmatpush1.msra.mxu0 0.0
  %1328 = vmatprep.subr.mxu0 0.0
  %1329 = vmatpush1.msra.mxu0 0.0
  %1330 = vmatprep.subr.mxu0 0.0
  %1331 = vmatpush1.msra.mxu0 0.0
  %1332 = vmatprep.subr.mxu0 0.0
  %1333 = vmatpush1.msra.mxu0 0.0
  %1334 = vmatprep.subr.mxu0 0.0
  %1335 = vmatpush1.msra.mxu0 0.0
  %1336 = vmatprep.subr.mxu0 0.0
  %1337 = vmatpush1.msra.mxu0 0.0
  %1338 = vmatprep.subr.mxu0 0.0
  %1339 = vmatpush1.msra.mxu0 0.0
  %1340 = vmatprep.subr.mxu0 0.0
  %1341 = vmatpush1.msra.mxu0 0.0
  %1342 = vmatprep.subr.mxu0 0.0
  %1343 = vmatpush1.msra.mxu0 0.0
  %1344 = vmatprep.subr.mxu0 0.0
  %1345 = vmatpush1.msra.mxu0 0.0
  %1346 = vmatprep.subr.mxu0 0.0
  %1347 = vmatpush1.msra.mxu0 0.0
  %1348 = vmatprep.subr.mxu0 0.0
  %1349 = vmatpush1.msra.mxu0 0.0
  %1350 = vmatprep.subr.mxu0 0.0
  %1351 = vmatpush1.msra.mxu0 0.0
  %1352 = vmatprep.subr.mxu0 0.0
  %1353 = vmatpush1.msra.mxu0 0.0
  %1354 = vmatprep.subr.mxu0 0.0
  %1355 = vmatpush1.msra.mxu0 0.0
  %1356 = vmatprep.subr.mxu0 0.0
  %1357 = vmatpush1.msra.mxu0 0.0
  %1358 = vmatprep.subr.mxu0 0.0
  %1359 = vmatpush1.msra.mxu0 0.0
  %1360 = vmatprep.subr.mxu0 0.0
  %1361 = vmatpush1.msra.mxu0 0.0
  %1362 = vmatprep.subr.mxu0 0.0
  %1363 = vmatpush1.msra.mxu0 0.0
  %1364 = vmatprep.subr.mxu0 0.0
  %1365 = vmatpush1.msra.mxu0 0.0
  %1366 = vmatprep.subr.mxu0 0.0
  %1367 = vmatpush1.msra.mxu0 0.0
  %1368 = vmatprep.subr.mxu0 0.0
  %1369 = vmatpush1.msra.mxu0 0.0
  %1370 = vmatprep.subr.mxu0 0.0
  %1371 = vmatpush1.msra.mxu0 0.0
  %1372 = vmatprep.subr.mxu0 0.0
  %1373 = vmatpush1.msra.mxu0 0.0
  %1374 = vmatprep.mubr.f32.mxu0 0.0
  %1375 = vmatmul.mubr.f32.gmra.mrb[0].mxu0 %v1308
  %v1376 = vpop.f32.mrb[0].mxu0
  %v1377 = vadd.f32 0.0, %v1376
  %v1378 = vpop.f32.mrb[0].mxu0
  %1379 = vdwg.mxu0
  %v1380 = vadd.f32 %v590, %v1377
  %v1381 = vxor.u32 %v1380, 2147483648
  %v1382 = vmul.f32 %v1381, 1.442695
  %v1383 = vpow.pop %v1382
  %v1384 = vadd.f32 %v1383, 1.0
  %v1385 = vrcp.pop %v1384
  %v1386 = vmul.f32 1.0, %v1385
  %v1387 = vtanh.pop %v1380
  %v1388 = vmul.f32 %v1386, %v1296
  %1390 = vrot.lane.b32.xlu0 %v1387, 32
  %v1391 = vpop.permute.xlu0 %1390
  %v1393 = vmul.f32 %v1386, %v1391
  %1395 = vrot.lane.b32.xlu0 %v1393, 32
  %v1396 = vpop.permute.xlu0 %1395
  %v1398 = vadd.f32 %v1388, %v1396
  %v1399 = vtanh.pop %v1398
  %1401 = vrot.lane.b32.xlu0 %v1399, 32
  %v1402 = vpop.permute.xlu0 %1401
  %v1404 = vmul.f32 %v1386, %v1402
  %1406 = vrot.lane.b32.xlu0 %v1404, 64
  %v1407 = vpop.permute.xlu0 %1406
  %1409 = vst.msk [vmem:[#allocation2 + $0x38] sm:$0xff] %vm436, %v1407
  %v1410 = vld [vmem:[#allocation2] sm:$0xff]
  %v1411 = vld [vmem:[#allocation2 + $0x8] sm:$0xff]
  %v1412 = vld [vmem:[#allocation2 + $0x10] sm:$0xff]
  %v1413 = vld [vmem:[#allocation2 + $0x18] sm:$0xff]
  %v1414 = vld [vmem:[#allocation2 + $0x20] sm:$0xff]
  %v1415 = vld [vmem:[#allocation2 + $0x28] sm:$0xff]
  %v1416 = vld [vmem:[#allocation2 + $0x30] sm:$0xff]
  %v1417 = vld [vmem:[#allocation2 + $0x38] sm:$0xff]
  %1418 = vmatprep.subr.mxu0 0.0
  %1419 = vmatpush1.msra.mxu0 %v1410
  %1420 = vmatprep.subr.mxu0 0.0
  %1421 = vmatpush1.msra.mxu0 %v1411
  %1422 = vmatprep.subr.mxu0 0.0
  %1423 = vmatpush1.msra.mxu0 %v1412
  %1424 = vmatprep.subr.mxu0 0.0
  %1425 = vmatpush1.msra.mxu0 %v1413
  %1426 = vmatprep.subr.mxu0 0.0
  %1427 = vmatpush1.msra.mxu0 %v1414
  %1428 = vmatprep.subr.mxu0 0.0
  %1429 = vmatpush1.msra.mxu0 %v1415
  %1430 = vmatprep.subr.mxu0 0.0
  %1431 = vmatpush1.msra.mxu0 %v1416
  %1432 = vmatprep.subr.mxu0 0.0
  %1433 = vmatpush1.msra.mxu0 %v1417
  %1434 = vmatprep.subr.mxu0 0.0
  %1435 = vmatpush1.msra.mxu0 0.0
  %1436 = vmatprep.subr.mxu0 0.0
  %1437 = vmatpush1.msra.mxu0 0.0
  %1438 = vmatprep.subr.mxu0 0.0
  %1439 = vmatpush1.msra.mxu0 0.0
  %1440 = vmatprep.subr.mxu0 0.0
  %1441 = vmatpush1.msra.mxu0 0.0
  %1442 = vmatprep.subr.mxu0 0.0
  %1443 = vmatpush1.msra.mxu0 0.0
  %1444 = vmatprep.subr.mxu0 0.0
  %1445 = vmatpush1.msra.mxu0 0.0
  %1446 = vmatprep.subr.mxu0 0.0
  %1447 = vmatpush1.msra.mxu0 0.0
  %1448 = vmatprep.subr.mxu0 0.0
  %1449 = vmatpush1.msra.mxu0 0.0
  %1450 = vmatprep.subr.mxu0 0.0
  %1451 = vmatpush1.msra.mxu0 0.0
  %1452 = vmatprep.subr.mxu0 0.0
  %1453 = vmatpush1.msra.mxu0 0.0
  %1454 = vmatprep.subr.mxu0 0.0
  %1455 = vmatpush1.msra.mxu0 0.0
  %1456 = vmatprep.subr.mxu0 0.0
  %1457 = vmatpush1.msra.mxu0 0.0
  %1458 = vmatprep.subr.mxu0 0.0
  %1459 = vmatpush1.msra.mxu0 0.0
  %1460 = vmatprep.subr.mxu0 0.0
  %1461 = vmatpush1.msra.mxu0 0.0
  %1462 = vmatprep.subr.mxu0 0.0
  %1463 = vmatpush1.msra.mxu0 0.0
  %1464 = vmatprep.subr.mxu0 0.0
  %1465 = vmatpush1.msra.mxu0 0.0
  %1466 = vmatprep.subr.mxu0 0.0
  %1467 = vmatpush1.msra.mxu0 0.0
  %1468 = vmatprep.subr.mxu0 0.0
  %1469 = vmatpush1.msra.mxu0 0.0
  %1470 = vmatprep.subr.mxu0 0.0
  %1471 = vmatpush1.msra.mxu0 0.0
  %1472 = vmatprep.subr.mxu0 0.0
  %1473 = vmatpush1.msra.mxu0 0.0
  %1474 = vmatprep.subr.mxu0 0.0
  %1475 = vmatpush1.msra.mxu0 0.0
  %1476 = vmatprep.subr.mxu0 0.0
  %1477 = vmatpush1.msra.mxu0 0.0
  %1478 = vmatprep.subr.mxu0 0.0
  %1479 = vmatpush1.msra.mxu0 0.0
  %1480 = vmatprep.subr.mxu0 0.0
  %1481 = vmatpush1.msra.mxu0 0.0
  %1482 = vmatprep.mubr.f32.mxu0 0.0
  %1483 = vmatmul.mubr.f32.gmra.mrb[0].mxu0 %v276
  %v1484 = vpop.f32.mrb[0].mxu0
  %v1485 = vadd.f32 0.0, %v1484
  %v1486 = vpop.f32.mrb[0].mxu0
  %1487 = vmatprep.mubr.f32.mxu0 0.0
  %1488 = vmatmul.mubr.f32.gmra.mrb[0].mxu0 %v279
  %v1489 = vpop.f32.mrb[0].mxu0
  %v1490 = vadd.f32 0.0, %v1489
  %v1491 = vpop.f32.mrb[0].mxu0
  %1492 = vmatprep.mubr.f32.mxu0 0.0
  %1493 = vmatmul.mubr.f32.gmra.mrb[0].mxu0 %v282
  %v1494 = vpop.f32.mrb[0].mxu0
  %v1495 = vadd.f32 0.0, %v1494
  %v1496 = vpop.f32.mrb[0].mxu0
  %1497 = vmatprep.mubr.f32.mxu0 0.0
  %1498 = vmatmul.mubr.f32.gmra.mrb[0].mxu0 %v285
  %v1499 = vpop.f32.mrb[0].mxu0
  %v1500 = vadd.f32 0.0, %v1499
  %v1501 = vpop.f32.mrb[0].mxu0
  %1502 = vmatprep.mubr.f32.mxu0 0.0
  %1503 = vmatmul.mubr.f32.gmra.mrb[0].mxu0 %v288
  %v1504 = vpop.f32.mrb[0].mxu0
  %v1505 = vadd.f32 0.0, %v1504
  %v1506 = vpop.f32.mrb[0].mxu0
  %1507 = vmatprep.mubr.f32.mxu0 0.0
  %1508 = vmatmul.mubr.f32.gmra.mrb[0].mxu0 %v291
  %v1509 = vpop.f32.mrb[0].mxu0
  %v1510 = vadd.f32 0.0, %v1509
  %v1511 = vpop.f32.mrb[0].mxu0
  %1512 = vmatprep.mubr.f32.mxu0 0.0
  %1513 = vmatmul.mubr.f32.gmra.mrb[0].mxu0 %v294
  %v1514 = vpop.f32.mrb[0].mxu0
  %v1515 = vadd.f32 0.0, %v1514
  %v1516 = vpop.f32.mrb[0].mxu0
  %1517 = vmatprep.mubr.f32.mxu0 0.0
  %1518 = vmatmul.mubr.f32.gmra.mrb[0].mxu0 %v297
  %v1519 = vpop.f32.mrb[0].mxu0
  %v1520 = vadd.f32 0.0, %v1519
  %v1521 = vpop.f32.mrb[0].mxu0
  %1522 = vdwg.mxu0
  %vm1523 = vcmp.lt.s32.totalorder %v70, 16
  %v1524 = vsel %vm1523, %v1410, %v1485
  %v1525 = vsel %vm1523, %v1411, %v1490
  %v1526 = vsel %vm1523, %v1412, %v1495
  %v1527 = vsel %vm1523, %v1413, %v1500
  %v1528 = vsel %vm1523, %v1414, %v1505
  %v1529 = vsel %vm1523, %v1415, %v1510
  %v1530 = vsel %vm1523, %v1416, %v1515
  %v1531 = vsel %vm1523, %v1417, %v1520
  %v1532 = vsel %vm1523, %v1485, %v1410
  %v1533 = vsel %vm1523, %v1490, %v1411
  %v1534 = vsel %vm1523, %v1495, %v1412
  %v1535 = vsel %vm1523, %v1500, %v1413
  %v1536 = vsel %vm1523, %v1505, %v1414
  %v1537 = vsel %vm1523, %v1510, %v1415
  %v1538 = vsel %vm1523, %v1515, %v1416
  %v1539 = vsel %vm1523, %v1520, %v1417
  %v1540 = vld [vmem:[%s7] sm:$0xff]
  %v1541 = vld [vmem:[%s7 + $0x8] sm:$0xff]
  %v1542 = vld [vmem:[%s7 + $0x10] sm:$0xff]
  %v1543 = vld [vmem:[%s7 + $0x18] sm:$0xff]
  %v1544 = vld [vmem:[%s9] sm:$0x1]
  %1553 = vrot.lane.b32.xlu0 %v1532, 32
  %v1554 = vpop.permute.xlu0 %1553
  %1555 = vrot.lane.b32.xlu0 %v1533, 32
  %v1556 = vpop.permute.xlu0 %1555
  %1557 = vrot.lane.b32.xlu0 %v1534, 32
  %v1558 = vpop.permute.xlu0 %1557
  %1559 = vrot.lane.b32.xlu0 %v1535, 32
  %v1560 = vpop.permute.xlu0 %1559
  %1561 = vrot.lane.b32.xlu0 %v1536, 32
  %v1562 = vpop.permute.xlu0 %1561
  %1563 = vrot.lane.b32.xlu0 %v1537, 32
  %v1564 = vpop.permute.xlu0 %1563
  %1565 = vrot.lane.b32.xlu0 %v1538, 32
  %v1566 = vpop.permute.xlu0 %1565
  %1567 = vrot.lane.b32.xlu0 %v1539, 32
  %v1568 = vpop.permute.xlu0 %1567
  %v1577 = vsel %vm436, %v1524, %v1554
  %v1578 = vsel %vm436, %v1525, %v1556
  %v1579 = vsel %vm436, %v1526, %v1558
  %v1580 = vsel %vm436, %v1527, %v1560
  %v1581 = vsel %vm436, %v1528, %v1562
  %v1582 = vsel %vm436, %v1529, %v1564
  %v1583 = vsel %vm436, %v1530, %v1566
  %v1584 = vsel %vm436, %v1531, %v1568
  %v1585 = vld [vmem:[%s6] sm:$0xff]
  %v1586 = vld [vmem:[%s6 + $0x8] sm:$0xff]
  %v1587 = vld [vmem:[%s6 + $0x10] sm:$0xff]
  %v1588 = vld [vmem:[%s6 + $0x18] sm:$0xff]
  %v1589 = vld [vmem:[%s6 + $0x20] sm:$0xff]
  %v1590 = vld [vmem:[%s6 + $0x28] sm:$0xff]
  %v1591 = vld [vmem:[%s6 + $0x30] sm:$0xff]
  %v1592 = vld [vmem:[%s6 + $0x38] sm:$0xff]
  %v1593 = vld [vmem:[%s8] sm:$0x1]
  %v1595 = vlaneseq
  %v1596 = vshrl.u32 %v1595, 7
  %v1597 = vsub.s32 0, %v1596
  %v1598 = vrot.slane %v1593, %v1597
  %v1601 = vsel %vm274, %v1577, 0
  %v1604 = vsel %vm274, %v1578, 0
  %v1607 = vsel %vm274, %v1579, 0
  %v1610 = vsel %vm274, %v1580, 0
  %v1613 = vsel %vm274, %v1581, 0
  %v1616 = vsel %vm274, %v1582, 0
  %v1619 = vsel %vm274, %v1583, 0
  %v1622 = vsel %vm274, %v1584, 0
  %1624 = vmatprep.subr.mxu0 0.0
  %1625 = vmatpush1.msra.mxu0 %v1585
  %1626 = vmatprep.subr.mxu0 0.0
  %1627 = vmatpush1.msra.mxu0 %v1586
  %1628 = vmatprep.subr.mxu0 0.0
  %1629 = vmatpush1.msra.mxu0 %v1587
  %1630 = vmatprep.subr.mxu0 0.0
  %1631 = vmatpush1.msra.mxu0 %v1588
  %1632 = vmatprep.subr.mxu0 0.0
  %1633 = vmatpush1.msra.mxu0 %v1589
  %1634 = vmatprep.subr.mxu0 0.0
  %1635 = vmatpush1.msra.mxu0 %v1590
  %1636 = vmatprep.subr.mxu0 0.0
  %1637 = vmatpush1.msra.mxu0 %v1591
  %1638 = vmatprep.subr.mxu0 0.0
  %1639 = vmatpush1.msra.mxu0 %v1592
  %1640 = vmatprep.subr.mxu0 0.0
  %1641 = vmatpush1.msra.mxu0 0.0
  %1642 = vmatprep.subr.mxu0 0.0
  %1643 = vmatpush1.msra.mxu0 0.0
  %1644 = vmatprep.subr.mxu0 0.0
  %1645 = vmatpush1.msra.mxu0 0.0
  %1646 = vmatprep.subr.mxu0 0.0
  %1647 = vmatpush1.msra.mxu0 0.0
  %1648 = vmatprep.subr.mxu0 0.0
  %1649 = vmatpush1.msra.mxu0 0.0
  %1650 = vmatprep.subr.mxu0 0.0
  %1651 = vmatpush1.msra.mxu0 0.0
  %1652 = vmatprep.subr.mxu0 0.0
  %1653 = vmatpush1.msra.mxu0 0.0
  %1654 = vmatprep.subr.mxu0 0.0
  %1655 = vmatpush1.msra.mxu0 0.0
  %1656 = vmatprep.subr.mxu0 0.0
  %1657 = vmatpush1.msra.mxu0 0.0
  %1658 = vmatprep.subr.mxu0 0.0
  %1659 = vmatpush1.msra.mxu0 0.0
  %1660 = vmatprep.subr.mxu0 0.0
  %1661 = vmatpush1.msra.mxu0 0.0
  %1662 = vmatprep.subr.mxu0 0.0
  %1663 = vmatpush1.msra.mxu0 0.0
  %1664 = vmatprep.subr.mxu0 0.0
  %1665 = vmatpush1.msra.mxu0 0.0
  %1666 = vmatprep.subr.mxu0 0.0
  %1667 = vmatpush1.msra.mxu0 0.0
  %1668 = vmatprep.subr.mxu0 0.0
  %1669 = vmatpush1.msra.mxu0 0.0
  %1670 = vmatprep.subr.mxu0 0.0
  %1671 = vmatpush1.msra.mxu0 0.0
  %1672 = vmatprep.subr.mxu0 0.0
  %1673 = vmatpush1.msra.mxu0 0.0
  %1674 = vmatprep.subr.mxu0 0.0
  %1675 = vmatpush1.msra.mxu0 0.0
  %1676 = vmatprep.subr.mxu0 0.0
  %1677 = vmatpush1.msra.mxu0 0.0
  %1678 = vmatprep.subr.mxu0 0.0
  %1679 = vmatpush1.msra.mxu0 0.0
  %1680 = vmatprep.subr.mxu0 0.0
  %1681 = vmatpush1.msra.mxu0 0.0
  %1682 = vmatprep.subr.mxu0 0.0
  %1683 = vmatpush1.msra.mxu0 0.0
  %1684 = vmatprep.subr.mxu0 0.0
  %1685 = vmatpush1.msra.mxu0 0.0
  %1686 = vmatprep.subr.mxu0 0.0
  %1687 = vmatpush1.msra.mxu0 0.0
  %1688 = vmatprep.mubr.f32.mxu0 0.0
  %1689 = vmatmul.mubr.f32.gmra.mrb[0].mxu0 %v1601
  %v1690 = vpop.f32.mrb[0].mxu0
  %v1691 = vadd.f32 %v1598, %v1690
  %v1692 = vpop.f32.mrb[0].mxu0
  %1693 = vmatprep.mubr.f32.mxu0 0.0
  %1694 = vmatmul.mubr.f32.gmra.mrb[0].mxu0 %v1604
  %v1695 = vpop.f32.mrb[0].mxu0
  %v1696 = vadd.f32 %v1598, %v1695
  %v1697 = vpop.f32.mrb[0].mxu0
  %1698 = vmatprep.mubr.f32.mxu0 0.0
  %1699 = vmatmul.mubr.f32.gmra.mrb[0].mxu0 %v1607
  %v1700 = vpop.f32.mrb[0].mxu0
  %v1701 = vadd.f32 %v1598, %v1700
  %v1702 = vpop.f32.mrb[0].mxu0
  %1703 = vmatprep.mubr.f32.mxu0 0.0
  %1704 = vmatmul.mubr.f32.gmra.mrb[0].mxu0 %v1610
  %v1705 = vpop.f32.mrb[0].mxu0
  %v1706 = vadd.f32 %v1598, %v1705
  %v1707 = vpop.f32.mrb[0].mxu0
  %1708 = vmatprep.mubr.f32.mxu0 0.0
  %1709 = vmatmul.mubr.f32.gmra.mrb[0].mxu0 %v1613
  %v1710 = vpop.f32.mrb[0].mxu0
  %v1711 = vadd.f32 %v1598, %v1710
  %v1712 = vpop.f32.mrb[0].mxu0
  %1713 = vmatprep.mubr.f32.mxu0 0.0
  %1714 = vmatmul.mubr.f32.gmra.mrb[0].mxu0 %v1616
  %v1715 = vpop.f32.mrb[0].mxu0
  %v1716 = vadd.f32 %v1598, %v1715
  %v1717 = vpop.f32.mrb[0].mxu0
  %1718 = vmatprep.mubr.f32.mxu0 0.0
  %1719 = vmatmul.mubr.f32.gmra.mrb[0].mxu0 %v1619
  %v1720 = vpop.f32.mrb[0].mxu0
  %v1721 = vadd.f32 %v1598, %v1720
  %v1722 = vpop.f32.mrb[0].mxu0
  %1723 = vmatprep.mubr.f32.mxu0 0.0
  %1724 = vmatmul.mubr.f32.gmra.mrb[0].mxu0 %v1622
  %v1725 = vpop.f32.mrb[0].mxu0
  %v1726 = vadd.f32 %v1598, %v1725
  %v1727 = vpop.f32.mrb[0].mxu0
  %1728 = vdwg.mxu0
  %v1730 = vlaneseq
  %v1731 = vshrl.u32 %v1730, 7
  %v1732 = vsub.s32 0, %v1731
  %v1733 = vrot.slane %v1544, %v1732
  %1735 = vmatprep.subr.mxu0 0.0
  %1736 = vmatpush1.msra.mxu0 %v1540
  %1737 = vmatprep.subr.mxu0 0.0
  %1738 = vmatpush1.msra.mxu0 %v1541
  %1739 = vmatprep.subr.mxu0 0.0
  %1740 = vmatpush1.msra.mxu0 %v1542
  %1741 = vmatprep.subr.mxu0 0.0
  %1742 = vmatpush1.msra.mxu0 %v1543
  %1743 = vmatprep.subr.mxu0 0.0
  %1744 = vmatpush1.msra.mxu0 0.0
  %1745 = vmatprep.subr.mxu0 0.0
  %1746 = vmatpush1.msra.mxu0 0.0
  %1747 = vmatprep.subr.mxu0 0.0
  %1748 = vmatpush1.msra.mxu0 0.0
  %1749 = vmatprep.subr.mxu0 0.0
  %1750 = vmatpush1.msra.mxu0 0.0
  %1751 = vmatprep.subr.mxu0 0.0
  %1752 = vmatpush1.msra.mxu0 0.0
  %1753 = vmatprep.subr.mxu0 0.0
  %1754 = vmatpush1.msra.mxu0 0.0
  %1755 = vmatprep.subr.mxu0 0.0
  %1756 = vmatpush1.msra.mxu0 0.0
  %1757 = vmatprep.subr.mxu0 0.0
  %1758 = vmatpush1.msra.mxu0 0.0
  %1759 = vmatprep.subr.mxu0 0.0
  %1760 = vmatpush1.msra.mxu0 0.0
  %1761 = vmatprep.subr.mxu0 0.0
  %1762 = vmatpush1.msra.mxu0 0.0
  %1763 = vmatprep.subr.mxu0 0.0
  %1764 = vmatpush1.msra.mxu0 0.0
  %1765 = vmatprep.subr.mxu0 0.0
  %1766 = vmatpush1.msra.mxu0 0.0
  %1767 = vmatprep.subr.mxu0 0.0
  %1768 = vmatpush1.msra.mxu0 0.0
  %1769 = vmatprep.subr.mxu0 0.0
  %1770 = vmatpush1.msra.mxu0 0.0
  %1771 = vmatprep.subr.mxu0 0.0
  %1772 = vmatpush1.msra.mxu0 0.0
  %1773 = vmatprep.subr.mxu0 0.0
  %1774 = vmatpush1.msra.mxu0 0.0
  %1775 = vmatprep.subr.mxu0 0.0
  %1776 = vmatpush1.msra.mxu0 0.0
  %1777 = vmatprep.subr.mxu0 0.0
  %1778 = vmatpush1.msra.mxu0 0.0
  %1779 = vmatprep.subr.mxu0 0.0
  %1780 = vmatpush1.msra.mxu0 0.0
  %1781 = vmatprep.subr.mxu0 0.0
  %1782 = vmatpush1.msra.mxu0 0.0
  %1783 = vmatprep.subr.mxu0 0.0
  %1784 = vmatpush1.msra.mxu0 0.0
  %1785 = vmatprep.subr.mxu0 0.0
  %1786 = vmatpush1.msra.mxu0 0.0
  %1787 = vmatprep.subr.mxu0 0.0
  %1788 = vmatpush1.msra.mxu0 0.0
  %1789 = vmatprep.subr.mxu0 0.0
  %1790 = vmatpush1.msra.mxu0 0.0
  %1791 = vmatprep.subr.mxu0 0.0
  %1792 = vmatpush1.msra.mxu0 0.0
  %1793 = vmatprep.subr.mxu0 0.0
  %1794 = vmatpush1.msra.mxu0 0.0
  %1795 = vmatprep.subr.mxu0 0.0
  %1796 = vmatpush1.msra.mxu0 0.0
  %1797 = vmatprep.subr.mxu0 0.0
  %1798 = vmatpush1.msra.mxu0 0.0
  %1799 = vmatprep.mubr.f32.mxu0 0.0
  %1800 = vmatmul.mubr.f32.gmra.mrb[0].mxu0 %v594
  %v1801 = vpop.f32.mrb[0].mxu0
  %v1802 = vadd.f32 %v1733, %v1801
  %v1803 = vpop.f32.mrb[0].mxu0
  %1804 = vdwg.mxu0
  %v1805 = vadd.f32 %v1691, %v1802
  %v1806 = vxor.u32 %v1805, 2147483648
  %v1807 = vmul.f32 %v1806, 1.442695
  %v1808 = vpow.pop %v1807
  %v1809 = vadd.f32 %v1808, 1.0
  %v1810 = vrcp.pop %v1809
  %v1811 = vmul.f32 1.0, %v1810
  %1813 = vrot.lane.b32.xlu0 %v1802, 64
  %v1814 = vpop.permute.xlu0 %1813
  %v1816 = vmul.f32 %v1811, %v1814
  %1818 = vrot.lane.b32.xlu0 %v1816, 64
  %v1819 = vpop.permute.xlu0 %1818
  %v1821 = vadd.f32 %v1691, %v1819
  %v1822 = vtanh.pop %v1821
  %v1823 = vsub.f32 1.0, %v1811
  %1825 = vrot.lane.b32.xlu0 %v1822, 96
  %v1826 = vpop.permute.xlu0 %1825
  %v1828 = vmul.f32 %v1823, %v1826
  %v1829 = vmul.f32 %v1811, 0.0
  %v1830 = vadd.f32 %v1828, %v1829
  %1832 = vrot.lane.b32.xlu0 %v1830, 96
  %v1833 = vpop.permute.xlu0 %1832
  %1835 = vst.msk [vmem:[#allocation3] sm:$0xff] %vm436, %v1833
  %v1836 = vsel %vm436, %v1833, 0
  %1838 = vmatprep.subr.mxu0 0.0
  %1839 = vmatpush1.msra.mxu0 %v1540
  %1840 = vmatprep.subr.mxu0 0.0
  %1841 = vmatpush1.msra.mxu0 %v1541
  %1842 = vmatprep.subr.mxu0 0.0
  %1843 = vmatpush1.msra.mxu0 %v1542
  %1844 = vmatprep.subr.mxu0 0.0
  %1845 = vmatpush1.msra.mxu0 %v1543
  %1846 = vmatprep.subr.mxu0 0.0
  %1847 = vmatpush1.msra.mxu0 0.0
  %1848 = vmatprep.subr.mxu0 0.0
  %1849 = vmatpush1.msra.mxu0 0.0
  %1850 = vmatprep.subr.mxu0 0.0
  %1851 = vmatpush1.msra.mxu0 0.0
  %1852 = vmatprep.subr.mxu0 0.0
  %1853 = vmatpush1.msra.mxu0 0.0
  %1854 = vmatprep.subr.mxu0 0.0
  %1855 = vmatpush1.msra.mxu0 0.0
  %1856 = vmatprep.subr.mxu0 0.0
  %1857 = vmatpush1.msra.mxu0 0.0
  %1858 = vmatprep.subr.mxu0 0.0
  %1859 = vmatpush1.msra.mxu0 0.0
  %1860 = vmatprep.subr.mxu0 0.0
  %1861 = vmatpush1.msra.mxu0 0.0
  %1862 = vmatprep.subr.mxu0 0.0
  %1863 = vmatpush1.msra.mxu0 0.0
  %1864 = vmatprep.subr.mxu0 0.0
  %1865 = vmatpush1.msra.mxu0 0.0
  %1866 = vmatprep.subr.mxu0 0.0
  %1867 = vmatpush1.msra.mxu0 0.0
  %1868 = vmatprep.subr.mxu0 0.0
  %1869 = vmatpush1.msra.mxu0 0.0
  %1870 = vmatprep.subr.mxu0 0.0
  %1871 = vmatpush1.msra.mxu0 0.0
  %1872 = vmatprep.subr.mxu0 0.0
  %1873 = vmatpush1.msra.mxu0 0.0
  %1874 = vmatprep.subr.mxu0 0.0
  %1875 = vmatpush1.msra.mxu0 0.0
  %1876 = vmatprep.subr.mxu0 0.0
  %1877 = vmatpush1.msra.mxu0 0.0
  %1878 = vmatprep.subr.mxu0 0.0
  %1879 = vmatpush1.msra.mxu0 0.0
  %1880 = vmatprep.subr.mxu0 0.0
  %1881 = vmatpush1.msra.mxu0 0.0
  %1882 = vmatprep.subr.mxu0 0.0
  %1883 = vmatpush1.msra.mxu0 0.0
  %1884 = vmatprep.subr.mxu0 0.0
  %1885 = vmatpush1.msra.mxu0 0.0
  %1886 = vmatprep.subr.mxu0 0.0
  %1887 = vmatpush1.msra.mxu0 0.0
  %1888 = vmatprep.subr.mxu0 0.0
  %1889 = vmatpush1.msra.mxu0 0.0
  %1890 = vmatprep.subr.mxu0 0.0
  %1891 = vmatpush1.msra.mxu0 0.0
  %1892 = vmatprep.subr.mxu0 0.0
  %1893 = vmatpush1.msra.mxu0 0.0
  %1894 = vmatprep.subr.mxu0 0.0
  %1895 = vmatpush1.msra.mxu0 0.0
  %1896 = vmatprep.subr.mxu0 0.0
  %1897 = vmatpush1.msra.mxu0 0.0
  %1898 = vmatprep.subr.mxu0 0.0
  %1899 = vmatpush1.msra.mxu0 0.0
  %1900 = vmatprep.subr.mxu0 0.0
  %1901 = vmatpush1.msra.mxu0 0.0
  %1902 = vmatprep.mubr.f32.mxu0 0.0
  %1903 = vmatmul.mubr.f32.gmra.mrb[0].mxu0 %v1836
  %v1904 = vpop.f32.mrb[0].mxu0
  %v1905 = vadd.f32 %v1733, %v1904
  %v1906 = vpop.f32.mrb[0].mxu0
  %1907 = vdwg.mxu0
  %v1908 = vadd.f32 %v1696, %v1905
  %v1909 = vxor.u32 %v1908, 2147483648
  %v1910 = vmul.f32 %v1909, 1.442695
  %v1911 = vpow.pop %v1910
  %v1912 = vadd.f32 %v1911, 1.0
  %v1913 = vrcp.pop %v1912
  %v1914 = vmul.f32 1.0, %v1913
  %1916 = vrot.lane.b32.xlu0 %v1905, 64
  %v1917 = vpop.permute.xlu0 %1916
  %v1919 = vmul.f32 %v1914, %v1917
  %1921 = vrot.lane.b32.xlu0 %v1919, 64
  %v1922 = vpop.permute.xlu0 %1921
  %v1924 = vadd.f32 %v1696, %v1922
  %v1925 = vtanh.pop %v1924
  %v1926 = vsub.f32 1.0, %v1914
  %1928 = vrot.lane.b32.xlu0 %v1925, 96
  %v1929 = vpop.permute.xlu0 %1928
  %v1931 = vmul.f32 %v1926, %v1929
  %v1932 = vmul.f32 %v1914, %v1830
  %v1933 = vadd.f32 %v1931, %v1932
  %1935 = vrot.lane.b32.xlu0 %v1933, 96
  %v1936 = vpop.permute.xlu0 %1935
  %1938 = vst.msk [vmem:[#allocation3 + $0x8] sm:$0xff] %vm436, %v1936
  %v1939 = vsel %vm436, %v1936, 0
  %1941 = vmatprep.subr.mxu0 0.0
  %1942 = vmatpush1.msra.mxu0 %v1540
  %1943 = vmatprep.subr.mxu0 0.0
  %1944 = vmatpush1.msra.mxu0 %v1541
  %1945 = vmatprep.subr.mxu0 0.0
  %1946 = vmatpush1.msra.mxu0 %v1542
  %1947 = vmatprep.subr.mxu0 0.0
  %1948 = vmatpush1.msra.mxu0 %v1543
  %1949 = vmatprep.subr.mxu0 0.0
  %1950 = vmatpush1.msra.mxu0 0.0
  %1951 = vmatprep.subr.mxu0 0.0
  %1952 = vmatpush1.msra.mxu0 0.0
  %1953 = vmatprep.subr.mxu0 0.0
  %1954 = vmatpush1.msra.mxu0 0.0
  %1955 = vmatprep.subr.mxu0 0.0
  %1956 = vmatpush1.msra.mxu0 0.0
  %1957 = vmatprep.subr.mxu0 0.0
  %1958 = vmatpush1.msra.mxu0 0.0
  %1959 = vmatprep.subr.mxu0 0.0
  %1960 = vmatpush1.msra.mxu0 0.0
  %1961 = vmatprep.subr.mxu0 0.0
  %1962 = vmatpush1.msra.mxu0 0.0
  %1963 = vmatprep.subr.mxu0 0.0
  %1964 = vmatpush1.msra.mxu0 0.0
  %1965 = vmatprep.subr.mxu0 0.0
  %1966 = vmatpush1.msra.mxu0 0.0
  %1967 = vmatprep.subr.mxu0 0.0
  %1968 = vmatpush1.msra.mxu0 0.0
  %1969 = vmatprep.subr.mxu0 0.0
  %1970 = vmatpush1.msra.mxu0 0.0
  %1971 = vmatprep.subr.mxu0 0.0
  %1972 = vmatpush1.msra.mxu0 0.0
  %1973 = vmatprep.subr.mxu0 0.0
  %1974 = vmatpush1.msra.mxu0 0.0
  %1975 = vmatprep.subr.mxu0 0.0
  %1976 = vmatpush1.msra.mxu0 0.0
  %1977 = vmatprep.subr.mxu0 0.0
  %1978 = vmatpush1.msra.mxu0 0.0
  %1979 = vmatprep.subr.mxu0 0.0
  %1980 = vmatpush1.msra.mxu0 0.0
  %1981 = vmatprep.subr.mxu0 0.0
  %1982 = vmatpush1.msra.mxu0 0.0
  %1983 = vmatprep.subr.mxu0 0.0
  %1984 = vmatpush1.msra.mxu0 0.0
  %1985 = vmatprep.subr.mxu0 0.0
  %1986 = vmatpush1.msra.mxu0 0.0
  %1987 = vmatprep.subr.mxu0 0.0
  %1988 = vmatpush1.msra.mxu0 0.0
  %1989 = vmatprep.subr.mxu0 0.0
  %1990 = vmatpush1.msra.mxu0 0.0
  %1991 = vmatprep.subr.mxu0 0.0
  %1992 = vmatpush1.msra.mxu0 0.0
  %1993 = vmatprep.subr.mxu0 0.0
  %1994 = vmatpush1.msra.mxu0 0.0
  %1995 = vmatprep.subr.mxu0 0.0
  %1996 = vmatpush1.msra.mxu0 0.0
  %1997 = vmatprep.subr.mxu0 0.0
  %1998 = vmatpush1.msra.mxu0 0.0
  %1999 = vmatprep.subr.mxu0 0.0
  %2000 = vmatpush1.msra.mxu0 0.0
  %2001 = vmatprep.subr.mxu0 0.0
  %2002 = vmatpush1.msra.mxu0 0.0
  %2003 = vmatprep.subr.mxu0 0.0
  %2004 = vmatpush1.msra.mxu0 0.0
  %2005 = vmatprep.mubr.f32.mxu0 0.0
  %2006 = vmatmul.mubr.f32.gmra.mrb[0].mxu0 %v1939
  %v2007 = vpop.f32.mrb[0].mxu0
  %v2008 = vadd.f32 %v1733, %v2007
  %v2009 = vpop.f32.mrb[0].mxu0
  %2010 = vdwg.mxu0
  %v2011 = vadd.f32 %v1701, %v2008
  %v2012 = vxor.u32 %v2011, 2147483648
  %v2013 = vmul.f32 %v2012, 1.442695
  %v2014 = vpow.pop %v2013
  %v2015 = vadd.f32 %v2014, 1.0
  %v2016 = vrcp.pop %v2015
  %v2017 = vmul.f32 1.0, %v2016
  %2019 = vrot.lane.b32.xlu0 %v2008, 64
  %v2020 = vpop.permute.xlu0 %2019
  %v2022 = vmul.f32 %v2017, %v2020
  %2024 = vrot.lane.b32.xlu0 %v2022, 64
  %v2025 = vpop.permute.xlu0 %2024
  %v2027 = vadd.f32 %v1701, %v2025
  %v2028 = vtanh.pop %v2027
  %v2029 = vsub.f32 1.0, %v2017
  %2031 = vrot.lane.b32.xlu0 %v2028, 96
  %v2032 = vpop.permute.xlu0 %2031
  %v2034 = vmul.f32 %v2029, %v2032
  %v2035 = vmul.f32 %v2017, %v1933
  %v2036 = vadd.f32 %v2034, %v2035
  %2038 = vrot.lane.b32.xlu0 %v2036, 96
  %v2039 = vpop.permute.xlu0 %2038
  %2041 = vst.msk [vmem:[#allocation3 + $0x10] sm:$0xff] %vm436, %v2039
  %v2042 = vsel %vm436, %v2039, 0
  %2044 = vmatprep.subr.mxu0 0.0
  %2045 = vmatpush1.msra.mxu0 %v1540
  %2046 = vmatprep.subr.mxu0 0.0
  %2047 = vmatpush1.msra.mxu0 %v1541
  %2048 = vmatprep.subr.mxu0 0.0
  %2049 = vmatpush1.msra.mxu0 %v1542
  %2050 = vmatprep.subr.mxu0 0.0
  %2051 = vmatpush1.msra.mxu0 %v1543
  %2052 = vmatprep.subr.mxu0 0.0
  %2053 = vmatpush1.msra.mxu0 0.0
  %2054 = vmatprep.subr.mxu0 0.0
  %2055 = vmatpush1.msra.mxu0 0.0
  %2056 = vmatprep.subr.mxu0 0.0
  %2057 = vmatpush1.msra.mxu0 0.0
  %2058 = vmatprep.subr.mxu0 0.0
  %2059 = vmatpush1.msra.mxu0 0.0
  %2060 = vmatprep.subr.mxu0 0.0
  %2061 = vmatpush1.msra.mxu0 0.0
  %2062 = vmatprep.subr.mxu0 0.0
  %2063 = vmatpush1.msra.mxu0 0.0
  %2064 = vmatprep.subr.mxu0 0.0
  %2065 = vmatpush1.msra.mxu0 0.0
  %2066 = vmatprep.subr.mxu0 0.0
  %2067 = vmatpush1.msra.mxu0 0.0
  %2068 = vmatprep.subr.mxu0 0.0
  %2069 = vmatpush1.msra.mxu0 0.0
  %2070 = vmatprep.subr.mxu0 0.0
  %2071 = vmatpush1.msra.mxu0 0.0
  %2072 = vmatprep.subr.mxu0 0.0
  %2073 = vmatpush1.msra.mxu0 0.0
  %2074 = vmatprep.subr.mxu0 0.0
  %2075 = vmatpush1.msra.mxu0 0.0
  %2076 = vmatprep.subr.mxu0 0.0
  %2077 = vmatpush1.msra.mxu0 0.0
  %2078 = vmatprep.subr.mxu0 0.0
  %2079 = vmatpush1.msra.mxu0 0.0
  %2080 = vmatprep.subr.mxu0 0.0
  %2081 = vmatpush1.msra.mxu0 0.0
  %2082 = vmatprep.subr.mxu0 0.0
  %2083 = vmatpush1.msra.mxu0 0.0
  %2084 = vmatprep.subr.mxu0 0.0
  %2085 = vmatpush1.msra.mxu0 0.0
  %2086 = vmatprep.subr.mxu0 0.0
  %2087 = vmatpush1.msra.mxu0 0.0
  %2088 = vmatprep.subr.mxu0 0.0
  %2089 = vmatpush1.msra.mxu0 0.0
  %2090 = vmatprep.subr.mxu0 0.0
  %2091 = vmatpush1.msra.mxu0 0.0
  %2092 = vmatprep.subr.mxu0 0.0
  %2093 = vmatpush1.msra.mxu0 0.0
  %2094 = vmatprep.subr.mxu0 0.0
  %2095 = vmatpush1.msra.mxu0 0.0
  %2096 = vmatprep.subr.mxu0 0.0
  %2097 = vmatpush1.msra.mxu0 0.0
  %2098 = vmatprep.subr.mxu0 0.0
  %2099 = vmatpush1.msra.mxu0 0.0
  %2100 = vmatprep.subr.mxu0 0.0
  %2101 = vmatpush1.msra.mxu0 0.0
  %2102 = vmatprep.subr.mxu0 0.0
  %2103 = vmatpush1.msra.mxu0 0.0
  %2104 = vmatprep.subr.mxu0 0.0
  %2105 = vmatpush1.msra.mxu0 0.0
  %2106 = vmatprep.subr.mxu0 0.0
  %2107 = vmatpush1.msra.mxu0 0.0
  %2108 = vmatprep.mubr.f32.mxu0 0.0
  %2109 = vmatmul.mubr.f32.gmra.mrb[0].mxu0 %v2042
  %v2110 = vpop.f32.mrb[0].mxu0
  %v2111 = vadd.f32 %v1733, %v2110
  %v2112 = vpop.f32.mrb[0].mxu0
  %2113 = vdwg.mxu0
  %v2114 = vadd.f32 %v1706, %v2111
  %v2115 = vxor.u32 %v2114, 2147483648
  %v2116 = vmul.f32 %v2115, 1.442695
  %v2117 = vpow.pop %v2116
  %v2118 = vadd.f32 %v2117, 1.0
  %v2119 = vrcp.pop %v2118
  %v2120 = vmul.f32 1.0, %v2119
  %2122 = vrot.lane.b32.xlu0 %v2111, 64
  %v2123 = vpop.permute.xlu0 %2122
  %v2125 = vmul.f32 %v2120, %v2123
  %2127 = vrot.lane.b32.xlu0 %v2125, 64
  %v2128 = vpop.permute.xlu0 %2127
  %v2130 = vadd.f32 %v1706, %v2128
  %v2131 = vtanh.pop %v2130
  %v2132 = vsub.f32 1.0, %v2120
  %2134 = vrot.lane.b32.xlu0 %v2131, 96
  %v2135 = vpop.permute.xlu0 %2134
  %v2137 = vmul.f32 %v2132, %v2135
  %v2138 = vmul.f32 %v2120, %v2036
  %v2139 = vadd.f32 %v2137, %v2138
  %2141 = vrot.lane.b32.xlu0 %v2139, 96
  %v2142 = vpop.permute.xlu0 %2141
  %2144 = vst.msk [vmem:[#allocation3 + $0x18] sm:$0xff] %vm436, %v2142
  %v2145 = vsel %vm436, %v2142, 0
  %2147 = vmatprep.subr.mxu0 0.0
  %2148 = vmatpush1.msra.mxu0 %v1540
  %2149 = vmatprep.subr.mxu0 0.0
  %2150 = vmatpush1.msra.mxu0 %v1541
  %2151 = vmatprep.subr.mxu0 0.0
  %2152 = vmatpush1.msra.mxu0 %v1542
  %2153 = vmatprep.subr.mxu0 0.0
  %2154 = vmatpush1.msra.mxu0 %v1543
  %2155 = vmatprep.subr.mxu0 0.0
  %2156 = vmatpush1.msra.mxu0 0.0
  %2157 = vmatprep.subr.mxu0 0.0
  %2158 = vmatpush1.msra.mxu0 0.0
  %2159 = vmatprep.subr.mxu0 0.0
  %2160 = vmatpush1.msra.mxu0 0.0
  %2161 = vmatprep.subr.mxu0 0.0
  %2162 = vmatpush1.msra.mxu0 0.0
  %2163 = vmatprep.subr.mxu0 0.0
  %2164 = vmatpush1.msra.mxu0 0.0
  %2165 = vmatprep.subr.mxu0 0.0
  %2166 = vmatpush1.msra.mxu0 0.0
  %2167 = vmatprep.subr.mxu0 0.0
  %2168 = vmatpush1.msra.mxu0 0.0
  %2169 = vmatprep.subr.mxu0 0.0
  %2170 = vmatpush1.msra.mxu0 0.0
  %2171 = vmatprep.subr.mxu0 0.0
  %2172 = vmatpush1.msra.mxu0 0.0
  %2173 = vmatprep.subr.mxu0 0.0
  %2174 = vmatpush1.msra.mxu0 0.0
  %2175 = vmatprep.subr.mxu0 0.0
  %2176 = vmatpush1.msra.mxu0 0.0
  %2177 = vmatprep.subr.mxu0 0.0
  %2178 = vmatpush1.msra.mxu0 0.0
  %2179 = vmatprep.subr.mxu0 0.0
  %2180 = vmatpush1.msra.mxu0 0.0
  %2181 = vmatprep.subr.mxu0 0.0
  %2182 = vmatpush1.msra.mxu0 0.0
  %2183 = vmatprep.subr.mxu0 0.0
  %2184 = vmatpush1.msra.mxu0 0.0
  %2185 = vmatprep.subr.mxu0 0.0
  %2186 = vmatpush1.msra.mxu0 0.0
  %2187 = vmatprep.subr.mxu0 0.0
  %2188 = vmatpush1.msra.mxu0 0.0
  %2189 = vmatprep.subr.mxu0 0.0
  %2190 = vmatpush1.msra.mxu0 0.0
  %2191 = vmatprep.subr.mxu0 0.0
  %2192 = vmatpush1.msra.mxu0 0.0
  %2193 = vmatprep.subr.mxu0 0.0
  %2194 = vmatpush1.msra.mxu0 0.0
  %2195 = vmatprep.subr.mxu0 0.0
  %2196 = vmatpush1.msra.mxu0 0.0
  %2197 = vmatprep.subr.mxu0 0.0
  %2198 = vmatpush1.msra.mxu0 0.0
  %2199 = vmatprep.subr.mxu0 0.0
  %2200 = vmatpush1.msra.mxu0 0.0
  %2201 = vmatprep.subr.mxu0 0.0
  %2202 = vmatpush1.msra.mxu0 0.0
  %2203 = vmatprep.subr.mxu0 0.0
  %2204 = vmatpush1.msra.mxu0 0.0
  %2205 = vmatprep.subr.mxu0 0.0
  %2206 = vmatpush1.msra.mxu0 0.0
  %2207 = vmatprep.subr.mxu0 0.0
  %2208 = vmatpush1.msra.mxu0 0.0
  %2209 = vmatprep.subr.mxu0 0.0
  %2210 = vmatpush1.msra.mxu0 0.0
  %2211 = vmatprep.mubr.f32.mxu0 0.0
  %2212 = vmatmul.mubr.f32.gmra.mrb[0].mxu0 %v2145
  %v2213 = vpop.f32.mrb[0].mxu0
  %v2214 = vadd.f32 %v1733, %v2213
  %v2215 = vpop.f32.mrb[0].mxu0
  %2216 = vdwg.mxu0
  %v2217 = vadd.f32 %v1711, %v2214
  %v2218 = vxor.u32 %v2217, 2147483648
  %v2219 = vmul.f32 %v2218, 1.442695
  %v2220 = vpow.pop %v2219
  %v2221 = vadd.f32 %v2220, 1.0
  %v2222 = vrcp.pop %v2221
  %v2223 = vmul.f32 1.0, %v2222
  %2225 = vrot.lane.b32.xlu0 %v2214, 64
  %v2226 = vpop.permute.xlu0 %2225
  %v2228 = vmul.f32 %v2223, %v2226
  %2230 = vrot.lane.b32.xlu0 %v2228, 64
  %v2231 = vpop.permute.xlu0 %2230
  %v2233 = vadd.f32 %v1711, %v2231
  %v2234 = vtanh.pop %v2233
  %v2235 = vsub.f32 1.0, %v2223
  %2237 = vrot.lane.b32.xlu0 %v2234, 96
  %v2238 = vpop.permute.xlu0 %2237
  %v2240 = vmul.f32 %v2235, %v2238
  %v2241 = vmul.f32 %v2223, %v2139
  %v2242 = vadd.f32 %v2240, %v2241
  %2244 = vrot.lane.b32.xlu0 %v2242, 96
  %v2245 = vpop.permute.xlu0 %2244
  %2247 = vst.msk [vmem:[#allocation3 + $0x20] sm:$0xff] %vm436, %v2245
  %v2248 = vsel %vm436, %v2245, 0
  %2250 = vmatprep.subr.mxu0 0.0
  %2251 = vmatpush1.msra.mxu0 %v1540
  %2252 = vmatprep.subr.mxu0 0.0
  %2253 = vmatpush1.msra.mxu0 %v1541
  %2254 = vmatprep.subr.mxu0 0.0
  %2255 = vmatpush1.msra.mxu0 %v1542
  %2256 = vmatprep.subr.mxu0 0.0
  %2257 = vmatpush1.msra.mxu0 %v1543
  %2258 = vmatprep.subr.mxu0 0.0
  %2259 = vmatpush1.msra.mxu0 0.0
  %2260 = vmatprep.subr.mxu0 0.0
  %2261 = vmatpush1.msra.mxu0 0.0
  %2262 = vmatprep.subr.mxu0 0.0
  %2263 = vmatpush1.msra.mxu0 0.0
  %2264 = vmatprep.subr.mxu0 0.0
  %2265 = vmatpush1.msra.mxu0 0.0
  %2266 = vmatprep.subr.mxu0 0.0
  %2267 = vmatpush1.msra.mxu0 0.0
  %2268 = vmatprep.subr.mxu0 0.0
  %2269 = vmatpush1.msra.mxu0 0.0
  %2270 = vmatprep.subr.mxu0 0.0
  %2271 = vmatpush1.msra.mxu0 0.0
  %2272 = vmatprep.subr.mxu0 0.0
  %2273 = vmatpush1.msra.mxu0 0.0
  %2274 = vmatprep.subr.mxu0 0.0
  %2275 = vmatpush1.msra.mxu0 0.0
  %2276 = vmatprep.subr.mxu0 0.0
  %2277 = vmatpush1.msra.mxu0 0.0
  %2278 = vmatprep.subr.mxu0 0.0
  %2279 = vmatpush1.msra.mxu0 0.0
  %2280 = vmatprep.subr.mxu0 0.0
  %2281 = vmatpush1.msra.mxu0 0.0
  %2282 = vmatprep.subr.mxu0 0.0
  %2283 = vmatpush1.msra.mxu0 0.0
  %2284 = vmatprep.subr.mxu0 0.0
  %2285 = vmatpush1.msra.mxu0 0.0
  %2286 = vmatprep.subr.mxu0 0.0
  %2287 = vmatpush1.msra.mxu0 0.0
  %2288 = vmatprep.subr.mxu0 0.0
  %2289 = vmatpush1.msra.mxu0 0.0
  %2290 = vmatprep.subr.mxu0 0.0
  %2291 = vmatpush1.msra.mxu0 0.0
  %2292 = vmatprep.subr.mxu0 0.0
  %2293 = vmatpush1.msra.mxu0 0.0
  %2294 = vmatprep.subr.mxu0 0.0
  %2295 = vmatpush1.msra.mxu0 0.0
  %2296 = vmatprep.subr.mxu0 0.0
  %2297 = vmatpush1.msra.mxu0 0.0
  %2298 = vmatprep.subr.mxu0 0.0
  %2299 = vmatpush1.msra.mxu0 0.0
  %2300 = vmatprep.subr.mxu0 0.0
  %2301 = vmatpush1.msra.mxu0 0.0
  %2302 = vmatprep.subr.mxu0 0.0
  %2303 = vmatpush1.msra.mxu0 0.0
  %2304 = vmatprep.subr.mxu0 0.0
  %2305 = vmatpush1.msra.mxu0 0.0
  %2306 = vmatprep.subr.mxu0 0.0
  %2307 = vmatpush1.msra.mxu0 0.0
  %2308 = vmatprep.subr.mxu0 0.0
  %2309 = vmatpush1.msra.mxu0 0.0
  %2310 = vmatprep.subr.mxu0 0.0
  %2311 = vmatpush1.msra.mxu0 0.0
  %2312 = vmatprep.subr.mxu0 0.0
  %2313 = vmatpush1.msra.mxu0 0.0
  %2314 = vmatprep.mubr.f32.mxu0 0.0
  %2315 = vmatmul.mubr.f32.gmra.mrb[0].mxu0 %v2248
  %v2316 = vpop.f32.mrb[0].mxu0
  %v2317 = vadd.f32 %v1733, %v2316
  %v2318 = vpop.f32.mrb[0].mxu0
  %2319 = vdwg.mxu0
  %v2320 = vadd.f32 %v1716, %v2317
  %v2321 = vxor.u32 %v2320, 2147483648
  %v2322 = vmul.f32 %v2321, 1.442695
  %v2323 = vpow.pop %v2322
  %v2324 = vadd.f32 %v2323, 1.0
  %v2325 = vrcp.pop %v2324
  %v2326 = vmul.f32 1.0, %v2325
  %2328 = vrot.lane.b32.xlu0 %v2317, 64
  %v2329 = vpop.permute.xlu0 %2328
  %v2331 = vmul.f32 %v2326, %v2329
  %2333 = vrot.lane.b32.xlu0 %v2331, 64
  %v2334 = vpop.permute.xlu0 %2333
  %v2336 = vadd.f32 %v1716, %v2334
  %v2337 = vtanh.pop %v2336
  %v2338 = vsub.f32 1.0, %v2326
  %2340 = vrot.lane.b32.xlu0 %v2337, 96
  %v2341 = vpop.permute.xlu0 %2340
  %v2343 = vmul.f32 %v2338, %v2341
  %v2344 = vmul.f32 %v2326, %v2242
  %v2345 = vadd.f32 %v2343, %v2344
  %2347 = vrot.lane.b32.xlu0 %v2345, 96
  %v2348 = vpop.permute.xlu0 %2347
  %2350 = vst.msk [vmem:[#allocation3 + $0x28] sm:$0xff] %vm436, %v2348
  %v2351 = vsel %vm436, %v2348, 0
  %2353 = vmatprep.subr.mxu0 0.0
  %2354 = vmatpush1.msra.mxu0 %v1540
  %2355 = vmatprep.subr.mxu0 0.0
  %2356 = vmatpush1.msra.mxu0 %v1541
  %2357 = vmatprep.subr.mxu0 0.0
  %2358 = vmatpush1.msra.mxu0 %v1542
  %2359 = vmatprep.subr.mxu0 0.0
  %2360 = vmatpush1.msra.mxu0 %v1543
  %2361 = vmatprep.subr.mxu0 0.0
  %2362 = vmatpush1.msra.mxu0 0.0
  %2363 = vmatprep.subr.mxu0 0.0
  %2364 = vmatpush1.msra.mxu0 0.0
  %2365 = vmatprep.subr.mxu0 0.0
  %2366 = vmatpush1.msra.mxu0 0.0
  %2367 = vmatprep.subr.mxu0 0.0
  %2368 = vmatpush1.msra.mxu0 0.0
  %2369 = vmatprep.subr.mxu0 0.0
  %2370 = vmatpush1.msra.mxu0 0.0
  %2371 = vmatprep.subr.mxu0 0.0
  %2372 = vmatpush1.msra.mxu0 0.0
  %2373 = vmatprep.subr.mxu0 0.0
  %2374 = vmatpush1.msra.mxu0 0.0
  %2375 = vmatprep.subr.mxu0 0.0
  %2376 = vmatpush1.msra.mxu0 0.0
  %2377 = vmatprep.subr.mxu0 0.0
  %2378 = vmatpush1.msra.mxu0 0.0
  %2379 = vmatprep.subr.mxu0 0.0
  %2380 = vmatpush1.msra.mxu0 0.0
  %2381 = vmatprep.subr.mxu0 0.0
  %2382 = vmatpush1.msra.mxu0 0.0
  %2383 = vmatprep.subr.mxu0 0.0
  %2384 = vmatpush1.msra.mxu0 0.0
  %2385 = vmatprep.subr.mxu0 0.0
  %2386 = vmatpush1.msra.mxu0 0.0
  %2387 = vmatprep.subr.mxu0 0.0
  %2388 = vmatpush1.msra.mxu0 0.0
  %2389 = vmatprep.subr.mxu0 0.0
  %2390 = vmatpush1.msra.mxu0 0.0
  %2391 = vmatprep.subr.mxu0 0.0
  %2392 = vmatpush1.msra.mxu0 0.0
  %2393 = vmatprep.subr.mxu0 0.0
  %2394 = vmatpush1.msra.mxu0 0.0
  %2395 = vmatprep.subr.mxu0 0.0
  %2396 = vmatpush1.msra.mxu0 0.0
  %2397 = vmatprep.subr.mxu0 0.0
  %2398 = vmatpush1.msra.mxu0 0.0
  %2399 = vmatprep.subr.mxu0 0.0
  %2400 = vmatpush1.msra.mxu0 0.0
  %2401 = vmatprep.subr.mxu0 0.0
  %2402 = vmatpush1.msra.mxu0 0.0
  %2403 = vmatprep.subr.mxu0 0.0
  %2404 = vmatpush1.msra.mxu0 0.0
  %2405 = vmatprep.subr.mxu0 0.0
  %2406 = vmatpush1.msra.mxu0 0.0
  %2407 = vmatprep.subr.mxu0 0.0
  %2408 = vmatpush1.msra.mxu0 0.0
  %2409 = vmatprep.subr.mxu0 0.0
  %2410 = vmatpush1.msra.mxu0 0.0
  %2411 = vmatprep.subr.mxu0 0.0
  %2412 = vmatpush1.msra.mxu0 0.0
  %2413 = vmatprep.subr.mxu0 0.0
  %2414 = vmatpush1.msra.mxu0 0.0
  %2415 = vmatprep.subr.mxu0 0.0
  %2416 = vmatpush1.msra.mxu0 0.0
  %2417 = vmatprep.mubr.f32.mxu0 0.0
  %2418 = vmatmul.mubr.f32.gmra.mrb[0].mxu0 %v2351
  %v2419 = vpop.f32.mrb[0].mxu0
  %v2420 = vadd.f32 %v1733, %v2419
  %v2421 = vpop.f32.mrb[0].mxu0
  %2422 = vdwg.mxu0
  %v2423 = vadd.f32 %v1721, %v2420
  %v2424 = vxor.u32 %v2423, 2147483648
  %v2425 = vmul.f32 %v2424, 1.442695
  %v2426 = vpow.pop %v2425
  %v2427 = vadd.f32 %v2426, 1.0
  %v2428 = vrcp.pop %v2427
  %v2429 = vmul.f32 1.0, %v2428
  %2431 = vrot.lane.b32.xlu0 %v2420, 64
  %v2432 = vpop.permute.xlu0 %2431
  %v2434 = vmul.f32 %v2429, %v2432
  %2436 = vrot.lane.b32.xlu0 %v2434, 64
  %v2437 = vpop.permute.xlu0 %2436
  %v2439 = vadd.f32 %v1721, %v2437
  %v2440 = vtanh.pop %v2439
  %v2441 = vsub.f32 1.0, %v2429
  %2443 = vrot.lane.b32.xlu0 %v2440, 96
  %v2444 = vpop.permute.xlu0 %2443
  %v2446 = vmul.f32 %v2441, %v2444
  %v2447 = vmul.f32 %v2429, %v2345
  %v2448 = vadd.f32 %v2446, %v2447
  %2450 = vrot.lane.b32.xlu0 %v2448, 96
  %v2451 = vpop.permute.xlu0 %2450
  %2453 = vst.msk [vmem:[#allocation3 + $0x30] sm:$0xff] %vm436, %v2451
  %v2454 = vsel %vm436, %v2451, 0
  %2456 = vmatprep.subr.mxu0 0.0
  %2457 = vmatpush1.msra.mxu0 %v1540
  %2458 = vmatprep.subr.mxu0 0.0
  %2459 = vmatpush1.msra.mxu0 %v1541
  %2460 = vmatprep.subr.mxu0 0.0
  %2461 = vmatpush1.msra.mxu0 %v1542
  %2462 = vmatprep.subr.mxu0 0.0
  %2463 = vmatpush1.msra.mxu0 %v1543
  %2464 = vmatprep.subr.mxu0 0.0
  %2465 = vmatpush1.msra.mxu0 0.0
  %2466 = vmatprep.subr.mxu0 0.0
  %2467 = vmatpush1.msra.mxu0 0.0
  %2468 = vmatprep.subr.mxu0 0.0
  %2469 = vmatpush1.msra.mxu0 0.0
  %2470 = vmatprep.subr.mxu0 0.0
  %2471 = vmatpush1.msra.mxu0 0.0
  %2472 = vmatprep.subr.mxu0 0.0
  %2473 = vmatpush1.msra.mxu0 0.0
  %2474 = vmatprep.subr.mxu0 0.0
  %2475 = vmatpush1.msra.mxu0 0.0
  %2476 = vmatprep.subr.mxu0 0.0
  %2477 = vmatpush1.msra.mxu0 0.0
  %2478 = vmatprep.subr.mxu0 0.0
  %2479 = vmatpush1.msra.mxu0 0.0
  %2480 = vmatprep.subr.mxu0 0.0
  %2481 = vmatpush1.msra.mxu0 0.0
  %2482 = vmatprep.subr.mxu0 0.0
  %2483 = vmatpush1.msra.mxu0 0.0
  %2484 = vmatprep.subr.mxu0 0.0
  %2485 = vmatpush1.msra.mxu0 0.0
  %2486 = vmatprep.subr.mxu0 0.0
  %2487 = vmatpush1.msra.mxu0 0.0
  %2488 = vmatprep.subr.mxu0 0.0
  %2489 = vmatpush1.msra.mxu0 0.0
  %2490 = vmatprep.subr.mxu0 0.0
  %2491 = vmatpush1.msra.mxu0 0.0
  %2492 = vmatprep.subr.mxu0 0.0
  %2493 = vmatpush1.msra.mxu0 0.0
  %2494 = vmatprep.subr.mxu0 0.0
  %2495 = vmatpush1.msra.mxu0 0.0
  %2496 = vmatprep.subr.mxu0 0.0
  %2497 = vmatpush1.msra.mxu0 0.0
  %2498 = vmatprep.subr.mxu0 0.0
  %2499 = vmatpush1.msra.mxu0 0.0
  %2500 = vmatprep.subr.mxu0 0.0
  %2501 = vmatpush1.msra.mxu0 0.0
  %2502 = vmatprep.subr.mxu0 0.0
  %2503 = vmatpush1.msra.mxu0 0.0
  %2504 = vmatprep.subr.mxu0 0.0
  %2505 = vmatpush1.msra.mxu0 0.0
  %2506 = vmatprep.subr.mxu0 0.0
  %2507 = vmatpush1.msra.mxu0 0.0
  %2508 = vmatprep.subr.mxu0 0.0
  %2509 = vmatpush1.msra.mxu0 0.0
  %2510 = vmatprep.subr.mxu0 0.0
  %2511 = vmatpush1.msra.mxu0 0.0
  %2512 = vmatprep.subr.mxu0 0.0
  %2513 = vmatpush1.msra.mxu0 0.0
  %2514 = vmatprep.subr.mxu0 0.0
  %2515 = vmatpush1.msra.mxu0 0.0
  %2516 = vmatprep.subr.mxu0 0.0
  %2517 = vmatpush1.msra.mxu0 0.0
  %2518 = vmatprep.subr.mxu0 0.0
  %2519 = vmatpush1.msra.mxu0 0.0
  %2520 = vmatprep.mubr.f32.mxu0 0.0
  %2521 = vmatmul.mubr.f32.gmra.mrb[0].mxu0 %v2454
  %v2522 = vpop.f32.mrb[0].mxu0
  %v2523 = vadd.f32 %v1733, %v2522
  %v2524 = vpop.f32.mrb[0].mxu0
  %2525 = vdwg.mxu0
  %v2526 = vadd.f32 %v1726, %v2523
  %v2527 = vxor.u32 %v2526, 2147483648
  %v2528 = vmul.f32 %v2527, 1.442695
  %v2529 = vpow.pop %v2528
  %v2530 = vadd.f32 %v2529, 1.0
  %v2531 = vrcp.pop %v2530
  %v2532 = vmul.f32 1.0, %v2531
  %2534 = vrot.lane.b32.xlu0 %v2523, 64
  %v2535 = vpop.permute.xlu0 %2534
  %v2537 = vmul.f32 %v2532, %v2535
  %2539 = vrot.lane.b32.xlu0 %v2537, 64
  %v2540 = vpop.permute.xlu0 %2539
  %v2542 = vadd.f32 %v1726, %v2540
  %v2543 = vtanh.pop %v2542
  %v2544 = vsub.f32 1.0, %v2532
  %2546 = vrot.lane.b32.xlu0 %v2543, 96
  %v2547 = vpop.permute.xlu0 %2546
  %v2549 = vmul.f32 %v2544, %v2547
  %v2550 = vmul.f32 %v2532, %v2448
  %v2551 = vadd.f32 %v2549, %v2550
  %2553 = vrot.lane.b32.xlu0 %v2551, 96
  %v2554 = vpop.permute.xlu0 %2553
  %2556 = vst.msk [vmem:[#allocation3 + $0x38] sm:$0xff] %vm436, %v2554
  %v2557 = vld [vmem:[#allocation3] sm:$0xff]
  %v2558 = vld [vmem:[#allocation3 + $0x8] sm:$0xff]
  %v2559 = vld [vmem:[#allocation3 + $0x10] sm:$0xff]
  %v2560 = vld [vmem:[#allocation3 + $0x18] sm:$0xff]
  %v2561 = vld [vmem:[#allocation3 + $0x20] sm:$0xff]
  %v2562 = vld [vmem:[#allocation3 + $0x28] sm:$0xff]
  %v2563 = vld [vmem:[#allocation3 + $0x30] sm:$0xff]
  %v2564 = vld [vmem:[#allocation3 + $0x38] sm:$0xff]
  %2565 = vmatprep.subr.mxu0 0.0
  %2566 = vmatpush1.msra.mxu0 %v2557
  %2567 = vmatprep.subr.mxu0 0.0
  %2568 = vmatpush1.msra.mxu0 %v2558
  %2569 = vmatprep.subr.mxu0 0.0
  %2570 = vmatpush1.msra.mxu0 %v2559
  %2571 = vmatprep.subr.mxu0 0.0
  %2572 = vmatpush1.msra.mxu0 %v2560
  %2573 = vmatprep.subr.mxu0 0.0
  %2574 = vmatpush1.msra.mxu0 %v2561
  %2575 = vmatprep.subr.mxu0 0.0
  %2576 = vmatpush1.msra.mxu0 %v2562
  %2577 = vmatprep.subr.mxu0 0.0
  %2578 = vmatpush1.msra.mxu0 %v2563
  %2579 = vmatprep.subr.mxu0 0.0
  %2580 = vmatpush1.msra.mxu0 %v2564
  %2581 = vmatprep.subr.mxu0 0.0
  %2582 = vmatpush1.msra.mxu0 0.0
  %2583 = vmatprep.subr.mxu0 0.0
  %2584 = vmatpush1.msra.mxu0 0.0
  %2585 = vmatprep.subr.mxu0 0.0
  %2586 = vmatpush1.msra.mxu0 0.0
  %2587 = vmatprep.subr.mxu0 0.0
  %2588 = vmatpush1.msra.mxu0 0.0
  %2589 = vmatprep.subr.mxu0 0.0
  %2590 = vmatpush1.msra.mxu0 0.0
  %2591 = vmatprep.subr.mxu0 0.0
  %2592 = vmatpush1.msra.mxu0 0.0
  %2593 = vmatprep.subr.mxu0 0.0
  %2594 = vmatpush1.msra.mxu0 0.0
  %2595 = vmatprep.subr.mxu0 0.0
  %2596 = vmatpush1.msra.mxu0 0.0
  %2597 = vmatprep.subr.mxu0 0.0
  %2598 = vmatpush1.msra.mxu0 0.0
  %2599 = vmatprep.subr.mxu0 0.0
  %2600 = vmatpush1.msra.mxu0 0.0
  %2601 = vmatprep.subr.mxu0 0.0
  %2602 = vmatpush1.msra.mxu0 0.0
  %2603 = vmatprep.subr.mxu0 0.0
  %2604 = vmatpush1.msra.mxu0 0.0
  %2605 = vmatprep.subr.mxu0 0.0
  %2606 = vmatpush1.msra.mxu0 0.0
  %2607 = vmatprep.subr.mxu0 0.0
  %2608 = vmatpush1.msra.mxu0 0.0
  %2609 = vmatprep.subr.mxu0 0.0
  %2610 = vmatpush1.msra.mxu0 0.0
  %2611 = vmatprep.subr.mxu0 0.0
  %2612 = vmatpush1.msra.mxu0 0.0
  %2613 = vmatprep.subr.mxu0 0.0
  %2614 = vmatpush1.msra.mxu0 0.0
  %2615 = vmatprep.subr.mxu0 0.0
  %2616 = vmatpush1.msra.mxu0 0.0
  %2617 = vmatprep.subr.mxu0 0.0
  %2618 = vmatpush1.msra.mxu0 0.0
  %2619 = vmatprep.subr.mxu0 0.0
  %2620 = vmatpush1.msra.mxu0 0.0
  %2621 = vmatprep.subr.mxu0 0.0
  %2622 = vmatpush1.msra.mxu0 0.0
  %2623 = vmatprep.subr.mxu0 0.0
  %2624 = vmatpush1.msra.mxu0 0.0
  %2625 = vmatprep.subr.mxu0 0.0
  %2626 = vmatpush1.msra.mxu0 0.0
  %2627 = vmatprep.subr.mxu0 0.0
  %2628 = vmatpush1.msra.mxu0 0.0
  %2629 = vmatprep.mubr.f32.mxu0 0.0
  %2630 = vmatmul.mubr.f32.gmra.mrb[0].mxu0 %v276
  %v2631 = vpop.f32.mrb[0].mxu0
  %v2632 = vadd.f32 0.0, %v2631
  %v2633 = vpop.f32.mrb[0].mxu0
  %2634 = vmatprep.mubr.f32.mxu0 0.0
  %2635 = vmatmul.mubr.f32.gmra.mrb[0].mxu0 %v279
  %v2636 = vpop.f32.mrb[0].mxu0
  %v2637 = vadd.f32 0.0, %v2636
  %v2638 = vpop.f32.mrb[0].mxu0
  %2639 = vmatprep.mubr.f32.mxu0 0.0
  %2640 = vmatmul.mubr.f32.gmra.mrb[0].mxu0 %v282
  %v2641 = vpop.f32.mrb[0].mxu0
  %v2642 = vadd.f32 0.0, %v2641
  %v2643 = vpop.f32.mrb[0].mxu0
  %2644 = vmatprep.mubr.f32.mxu0 0.0
  %2645 = vmatmul.mubr.f32.gmra.mrb[0].mxu0 %v285
  %v2646 = vpop.f32.mrb[0].mxu0
  %v2647 = vadd.f32 0.0, %v2646
  %v2648 = vpop.f32.mrb[0].mxu0
  %2649 = vmatprep.mubr.f32.mxu0 0.0
  %2650 = vmatmul.mubr.f32.gmra.mrb[0].mxu0 %v288
  %v2651 = vpop.f32.mrb[0].mxu0
  %v2652 = vadd.f32 0.0, %v2651
  %v2653 = vpop.f32.mrb[0].mxu0
  %2654 = vmatprep.mubr.f32.mxu0 0.0
  %2655 = vmatmul.mubr.f32.gmra.mrb[0].mxu0 %v291
  %v2656 = vpop.f32.mrb[0].mxu0
  %v2657 = vadd.f32 0.0, %v2656
  %v2658 = vpop.f32.mrb[0].mxu0
  %2659 = vmatprep.mubr.f32.mxu0 0.0
  %2660 = vmatmul.mubr.f32.gmra.mrb[0].mxu0 %v294
  %v2661 = vpop.f32.mrb[0].mxu0
  %v2662 = vadd.f32 0.0, %v2661
  %v2663 = vpop.f32.mrb[0].mxu0
  %2664 = vmatprep.mubr.f32.mxu0 0.0
  %2665 = vmatmul.mubr.f32.gmra.mrb[0].mxu0 %v297
  %v2666 = vpop.f32.mrb[0].mxu0
  %v2667 = vadd.f32 0.0, %v2666
  %v2668 = vpop.f32.mrb[0].mxu0
  %2669 = vdwg.mxu0
  %v2670 = vsel %vm1523, %v2557, %v2632
  %v2671 = vsel %vm1523, %v2558, %v2637
  %v2672 = vsel %vm1523, %v2559, %v2642
  %v2673 = vsel %vm1523, %v2560, %v2647
  %v2674 = vsel %vm1523, %v2561, %v2652
  %v2675 = vsel %vm1523, %v2562, %v2657
  %v2676 = vsel %vm1523, %v2563, %v2662
  %v2677 = vsel %vm1523, %v2564, %v2667
  %2686 = vrot.lane.b32.xlu0 %v2670, 32
  %v2687 = vpop.permute.xlu0 %2686
  %2688 = vrot.lane.b32.xlu0 %v2671, 32
  %v2689 = vpop.permute.xlu0 %2688
  %2690 = vrot.lane.b32.xlu0 %v2672, 32
  %v2691 = vpop.permute.xlu0 %2690
  %2692 = vrot.lane.b32.xlu0 %v2673, 32
  %v2693 = vpop.permute.xlu0 %2692
  %2694 = vrot.lane.b32.xlu0 %v2674, 32
  %v2695 = vpop.permute.xlu0 %2694
  %2696 = vrot.lane.b32.xlu0 %v2675, 32
  %v2697 = vpop.permute.xlu0 %2696
  %2698 = vrot.lane.b32.xlu0 %v2676, 32
  %v2699 = vpop.permute.xlu0 %2698
  %2700 = vrot.lane.b32.xlu0 %v2677, 32
  %v2701 = vpop.permute.xlu0 %2700
  %v2710 = vsel %vm436, %v1524, %v2687
  %v2711 = vsel %vm436, %v1525, %v2689
  %v2712 = vsel %vm436, %v1526, %v2691
  %v2713 = vsel %vm436, %v1527, %v2693
  %v2714 = vsel %vm436, %v1528, %v2695
  %v2715 = vsel %vm436, %v1529, %v2697
  %v2716 = vsel %vm436, %v1530, %v2699
  %v2717 = vsel %vm436, %v1531, %v2701
  %v2718 = vld [vmem:[%s10] sm:$0xff]
  %v2719 = vld [vmem:[%s10 + $0x8] sm:$0xff]
  %v2720 = vld [vmem:[%s10 + $0x10] sm:$0xff]
  %v2721 = vld [vmem:[%s10 + $0x18] sm:$0xff]
  %v2722 = vld [vmem:[%s10 + $0x20] sm:$0xff]
  %v2723 = vld [vmem:[%s10 + $0x28] sm:$0xff]
  %v2724 = vld [vmem:[%s10 + $0x30] sm:$0xff]
  %v2725 = vld [vmem:[%s10 + $0x38] sm:$0xff]
  %v2726 = vld [vmem:[%s11] sm:$0xff]
  %v2727 = vld [vmem:[%s11 + $0x8] sm:$0xff]
  %v2728 = vld [vmem:[%s11 + $0x10] sm:$0xff]
  %v2729 = vld [vmem:[%s11 + $0x18] sm:$0xff]
  %v2730 = vld [vmem:[%s11 + $0x20] sm:$0xff]
  %v2731 = vld [vmem:[%s11 + $0x28] sm:$0xff]
  %v2732 = vld [vmem:[%s11 + $0x30] sm:$0xff]
  %v2733 = vld [vmem:[%s11 + $0x38] sm:$0xff]
  %v2735 = vsel %vm274, %v2710, 0
  %v2738 = vsel %vm274, %v2711, 0
  %v2741 = vsel %vm274, %v2712, 0
  %v2744 = vsel %vm274, %v2713, 0
  %v2747 = vsel %vm274, %v2714, 0
  %v2750 = vsel %vm274, %v2715, 0
  %v2753 = vsel %vm274, %v2716, 0
  %v2756 = vsel %vm274, %v2717, 0
  %2758 = vmatprep.subr.mxu0 0.0
  %2759 = vmatpush1.msra.mxu0 %v2718
  %2760 = vmatprep.subr.mxu0 0.0
  %2761 = vmatpush1.msra.mxu0 %v2719
  %2762 = vmatprep.subr.mxu0 0.0
  %2763 = vmatpush1.msra.mxu0 %v2720
  %2764 = vmatprep.subr.mxu0 0.0
  %2765 = vmatpush1.msra.mxu0 %v2721
  %2766 = vmatprep.subr.mxu0 0.0
  %2767 = vmatpush1.msra.mxu0 %v2722
  %2768 = vmatprep.subr.mxu0 0.0
  %2769 = vmatpush1.msra.mxu0 %v2723
  %2770 = vmatprep.subr.mxu0 0.0
  %2771 = vmatpush1.msra.mxu0 %v2724
  %2772 = vmatprep.subr.mxu0 0.0
  %2773 = vmatpush1.msra.mxu0 %v2725
  %2774 = vmatprep.subr.mxu0 0.0
  %2775 = vmatpush1.msra.mxu0 0.0
  %2776 = vmatprep.subr.mxu0 0.0
  %2777 = vmatpush1.msra.mxu0 0.0
  %2778 = vmatprep.subr.mxu0 0.0
  %2779 = vmatpush1.msra.mxu0 0.0
  %2780 = vmatprep.subr.mxu0 0.0
  %2781 = vmatpush1.msra.mxu0 0.0
  %2782 = vmatprep.subr.mxu0 0.0
  %2783 = vmatpush1.msra.mxu0 0.0
  %2784 = vmatprep.subr.mxu0 0.0
  %2785 = vmatpush1.msra.mxu0 0.0
  %2786 = vmatprep.subr.mxu0 0.0
  %2787 = vmatpush1.msra.mxu0 0.0
  %2788 = vmatprep.subr.mxu0 0.0
  %2789 = vmatpush1.msra.mxu0 0.0
  %2790 = vmatprep.subr.mxu0 0.0
  %2791 = vmatpush1.msra.mxu0 0.0
  %2792 = vmatprep.subr.mxu0 0.0
  %2793 = vmatpush1.msra.mxu0 0.0
  %2794 = vmatprep.subr.mxu0 0.0
  %2795 = vmatpush1.msra.mxu0 0.0
  %2796 = vmatprep.subr.mxu0 0.0
  %2797 = vmatpush1.msra.mxu0 0.0
  %2798 = vmatprep.subr.mxu0 0.0
  %2799 = vmatpush1.msra.mxu0 0.0
  %2800 = vmatprep.subr.mxu0 0.0
  %2801 = vmatpush1.msra.mxu0 0.0
  %2802 = vmatprep.subr.mxu0 0.0
  %2803 = vmatpush1.msra.mxu0 0.0
  %2804 = vmatprep.subr.mxu0 0.0
  %2805 = vmatpush1.msra.mxu0 0.0
  %2806 = vmatprep.subr.mxu0 0.0
  %2807 = vmatpush1.msra.mxu0 0.0
  %2808 = vmatprep.subr.mxu0 0.0
  %2809 = vmatpush1.msra.mxu0 0.0
  %2810 = vmatprep.subr.mxu0 0.0
  %2811 = vmatpush1.msra.mxu0 0.0
  %2812 = vmatprep.subr.mxu0 0.0
  %2813 = vmatpush1.msra.mxu0 0.0
  %2814 = vmatprep.subr.mxu0 0.0
  %2815 = vmatpush1.msra.mxu0 0.0
  %2816 = vmatprep.subr.mxu0 0.0
  %2817 = vmatpush1.msra.mxu0 0.0
  %2818 = vmatprep.subr.mxu0 0.0
  %2819 = vmatpush1.msra.mxu0 0.0
  %2820 = vmatprep.subr.mxu0 0.0
  %2821 = vmatpush1.msra.mxu0 0.0
  %2822 = vmatprep.mubr.f32.mxu0 0.0
  %2823 = vmatmul.mubr.f32.gmra.mrb[0].mxu0 %v2735
  %v2824 = vpop.f32.mrb[0].mxu0
  %v2825 = vadd.f32 %v2726, %v2824
  %v2826 = vpop.f32.mrb[0].mxu0
  %2827 = vmatprep.mubr.f32.mxu0 0.0
  %2828 = vmatmul.mubr.f32.gmra.mrb[0].mxu0 %v2738
  %v2829 = vpop.f32.mrb[0].mxu0
  %v2830 = vadd.f32 %v2727, %v2829
  %v2831 = vpop.f32.mrb[0].mxu0
  %2832 = vmatprep.mubr.f32.mxu0 0.0
  %2833 = vmatmul.mubr.f32.gmra.mrb[0].mxu0 %v2741
  %v2834 = vpop.f32.mrb[0].mxu0
  %v2835 = vadd.f32 %v2728, %v2834
  %v2836 = vpop.f32.mrb[0].mxu0
  %2837 = vmatprep.mubr.f32.mxu0 0.0
  %2838 = vmatmul.mubr.f32.gmra.mrb[0].mxu0 %v2744
  %v2839 = vpop.f32.mrb[0].mxu0
  %v2840 = vadd.f32 %v2729, %v2839
  %v2841 = vpop.f32.mrb[0].mxu0
  %2842 = vmatprep.mubr.f32.mxu0 0.0
  %2843 = vmatmul.mubr.f32.gmra.mrb[0].mxu0 %v2747
  %v2844 = vpop.f32.mrb[0].mxu0
  %v2845 = vadd.f32 %v2730, %v2844
  %v2846 = vpop.f32.mrb[0].mxu0
  %2847 = vmatprep.mubr.f32.mxu0 0.0
  %2848 = vmatmul.mubr.f32.gmra.mrb[0].mxu0 %v2750
  %v2849 = vpop.f32.mrb[0].mxu0
  %v2850 = vadd.f32 %v2731, %v2849
  %v2851 = vpop.f32.mrb[0].mxu0
  %2852 = vmatprep.mubr.f32.mxu0 0.0
  %2853 = vmatmul.mubr.f32.gmra.mrb[0].mxu0 %v2753
  %v2854 = vpop.f32.mrb[0].mxu0
  %v2855 = vadd.f32 %v2732, %v2854
  %v2856 = vpop.f32.mrb[0].mxu0
  %2857 = vmatprep.mubr.f32.mxu0 0.0
  %2858 = vmatmul.mubr.f32.gmra.mrb[0].mxu0 %v2756
  %v2859 = vpop.f32.mrb[0].mxu0
  %v2860 = vadd.f32 %v2733, %v2859
  %v2861 = vpop.f32.mrb[0].mxu0
  %2862 = vdwg.mxu0
  %v2863 = vtanh.pop %v2825
  %v2864 = vtanh.pop %v2830
  %v2865 = vtanh.pop %v2835
  %v2866 = vtanh.pop %v2840
  %v2867 = vtanh.pop %v2845
  %v2868 = vtanh.pop %v2850
  %v2869 = vtanh.pop %v2855
  %v2870 = vtanh.pop %v2860
  %v2871 = vmul.f32 %v2863, 1.442695
  %v2872 = vpow.pop %v2871
  %v2873 = vmul.f32 %v2864, 1.442695
  %v2874 = vpow.pop %v2873
  %v2875 = vmul.f32 %v2865, 1.442695
  %v2876 = vpow.pop %v2875
  %v2877 = vmul.f32 %v2866, 1.442695
  %v2878 = vpow.pop %v2877
  %v2879 = vmul.f32 %v2867, 1.442695
  %v2880 = vpow.pop %v2879
  %v2881 = vmul.f32 %v2868, 1.442695
  %v2882 = vpow.pop %v2881
  %v2883 = vmul.f32 %v2869, 1.442695
  %v2884 = vpow.pop %v2883
  %v2885 = vmul.f32 %v2870, 1.442695
  %v2886 = vpow.pop %v2885
  %v2887 = vadd.f32 %v2872, %v2874
  %v2888 = vadd.f32 %v2887, %v2876
  %v2889 = vadd.f32 %v2888, %v2878
  %v2890 = vadd.f32 %v2889, %v2880
  %v2891 = vadd.f32 %v2890, %v2882
  %v2892 = vadd.f32 %v2891, %v2884
  %v2893 = vadd.f32 %v2892, %v2886
  %v2894 = vrcp.pop %v2893
  %v2895 = vmul.f32 %v2872, %v2894
  %v2896 = vmul.f32 %v2874, %v2894
  %v2897 = vmul.f32 %v2876, %v2894
  %v2898 = vmul.f32 %v2878, %v2894
  %v2899 = vmul.f32 %v2880, %v2894
  %v2900 = vmul.f32 %v2882, %v2894
  %v2901 = vmul.f32 %v2884, %v2894
  %v2902 = vmul.f32 %v2886, %v2894
  %v2903 = vadd.f32 %v2895, 1e-10
  %v2904 = vadd.f32 %v2896, 1e-10
  %v2905 = vadd.f32 %v2897, 1e-10
  %v2906 = vadd.f32 %v2898, 1e-10
  %v2907 = vadd.f32 %v2899, 1e-10
  %v2908 = vadd.f32 %v2900, 1e-10
  %v2909 = vadd.f32 %v2901, 1e-10
  %v2910 = vadd.f32 %v2902, 1e-10
  %2912 = vset.pattern.permute.xlu0 0
  %2913 = vperm.xlu0 %2912, %v2903
  %v2914 = vpop.permute.xlu0 %2913
  %2917 = vset.pattern.permute.xlu0 0
  %2918 = vperm.xlu0 %2917, %v2904
  %v2919 = vpop.permute.xlu0 %2918
  %2922 = vset.pattern.permute.xlu0 0
  %2923 = vperm.xlu0 %2922, %v2905
  %v2924 = vpop.permute.xlu0 %2923
  %2927 = vset.pattern.permute.xlu0 0
  %2928 = vperm.xlu0 %2927, %v2906
  %v2929 = vpop.permute.xlu0 %2928
  %2932 = vset.pattern.permute.xlu0 0
  %2933 = vperm.xlu0 %2932, %v2907
  %v2934 = vpop.permute.xlu0 %2933
  %2937 = vset.pattern.permute.xlu0 0
  %2938 = vperm.xlu0 %2937, %v2908
  %v2939 = vpop.permute.xlu0 %2938
  %2942 = vset.pattern.permute.xlu0 0
  %2943 = vperm.xlu0 %2942, %v2909
  %v2944 = vpop.permute.xlu0 %2943
  %2947 = vset.pattern.permute.xlu0 0
  %2948 = vperm.xlu0 %2947, %v2910
  %v2949 = vpop.permute.xlu0 %2948
  %v2951 = vmul.f32 %v1524, %v2914
  %v2952 = vmul.f32 %v1525, %v2919
  %v2953 = vmul.f32 %v1526, %v2924
  %v2954 = vmul.f32 %v1527, %v2929
  %v2955 = vmul.f32 %v1528, %v2934
  %v2956 = vmul.f32 %v1529, %v2939
  %v2957 = vmul.f32 %v1530, %v2944
  %v2958 = vmul.f32 %v1531, %v2949
  %2959 = vset.pattern.permute.xlu0 1
  %2960 = vperm.xlu0 %2959, %v2903
  %v2961 = vpop.permute.xlu0 %2960
  %2963 = vset.pattern.permute.xlu0 1
  %2964 = vperm.xlu0 %2963, %v2904
  %v2965 = vpop.permute.xlu0 %2964
  %2967 = vset.pattern.permute.xlu0 1
  %2968 = vperm.xlu0 %2967, %v2905
  %v2969 = vpop.permute.xlu0 %2968
  %2971 = vset.pattern.permute.xlu0 1
  %2972 = vperm.xlu0 %2971, %v2906
  %v2973 = vpop.permute.xlu0 %2972
  %2975 = vset.pattern.permute.xlu0 1
  %2976 = vperm.xlu0 %2975, %v2907
  %v2977 = vpop.permute.xlu0 %2976
  %2979 = vset.pattern.permute.xlu0 1
  %2980 = vperm.xlu0 %2979, %v2908
  %v2981 = vpop.permute.xlu0 %2980
  %2983 = vset.pattern.permute.xlu0 1
  %2984 = vperm.xlu0 %2983, %v2909
  %v2985 = vpop.permute.xlu0 %2984
  %2987 = vset.pattern.permute.xlu0 1
  %2988 = vperm.xlu0 %2987, %v2910
  %v2989 = vpop.permute.xlu0 %2988
  %v2991 = vmul.f32 %v2670, %v2961
  %v2992 = vmul.f32 %v2671, %v2965
  %v2993 = vmul.f32 %v2672, %v2969
  %v2994 = vmul.f32 %v2673, %v2973
  %v2995 = vmul.f32 %v2674, %v2977
  %v2996 = vmul.f32 %v2675, %v2981
  %v2997 = vmul.f32 %v2676, %v2985
  %v2998 = vmul.f32 %v2677, %v2989
  %3007 = vrot.lane.b32.xlu0 %v2991, 32
  %v3008 = vpop.permute.xlu0 %3007
  %3009 = vrot.lane.b32.xlu0 %v2992, 32
  %v3010 = vpop.permute.xlu0 %3009
  %3011 = vrot.lane.b32.xlu0 %v2993, 32
  %v3012 = vpop.permute.xlu0 %3011
  %3013 = vrot.lane.b32.xlu0 %v2994, 32
  %v3014 = vpop.permute.xlu0 %3013
  %3015 = vrot.lane.b32.xlu0 %v2995, 32
  %v3016 = vpop.permute.xlu0 %3015
  %3017 = vrot.lane.b32.xlu0 %v2996, 32
  %v3018 = vpop.permute.xlu0 %3017
  %3019 = vrot.lane.b32.xlu0 %v2997, 32
  %v3020 = vpop.permute.xlu0 %3019
  %3021 = vrot.lane.b32.xlu0 %v2998, 32
  %v3022 = vpop.permute.xlu0 %3021
  %v3031 = vsel %vm436, %v2951, %v3008
  %v3032 = vsel %vm436, %v2952, %v3010
  %v3033 = vsel %vm436, %v2953, %v3012
  %v3034 = vsel %vm436, %v2954, %v3014
  %v3035 = vsel %vm436, %v2955, %v3016
  %v3036 = vsel %vm436, %v2956, %v3018
  %v3037 = vsel %vm436, %v2957, %v3020
  %v3038 = vsel %vm436, %v2958, %v3022
  %v3039 = vadd.f32 %v3031, %v3032
  %v3040 = vadd.f32 %v2670, %v2671
  %v3041 = vmax.f32 %v2670, %v2671
  %v3042 = vadd.f32 %v3039, %v3033
  %v3043 = vadd.f32 %v3040, %v2672
  %v3044 = vmax.f32 %v3041, %v2672
  %v3045 = vadd.f32 %v3042, %v3034
  %v3046 = vadd.f32 %v3043, %v2673
  %v3047 = vmax.f32 %v3044, %v2673
  %v3048 = vadd.f32 %v3045, %v3035
  %v3049 = vadd.f32 %v3046, %v2674
  %v3050 = vmax.f32 %v3047, %v2674
  %v3051 = vadd.f32 %v3048, %v3036
  %v3052 = vadd.f32 %v3049, %v2675
  %v3053 = vmax.f32 %v3050, %v2675
  %v3054 = vadd.f32 %v3051, %v3037
  %v3055 = vadd.f32 %v3052, %v2676
  %v3056 = vmax.f32 %v3053, %v2676
  %v3057 = vadd.f32 %v3054, %v3038
  %v3058 = vadd.f32 %v3055, %v2677
  %v3059 = vmax.f32 %v3056, %v2677
  %v3060 = vmul.f32 %v3058, 0.125
  %3062 = vrot.lane.b32.xlu0 %v3060, 64
  %v3063 = vpop.permute.xlu0 %3062
  %3066 = vrot.lane.b32.xlu0 %v3059, 96
  %v3067 = vpop.permute.xlu0 %3066
  %v3069 = vsel %vm274, %v3057, %v3063
  %vm3070 = vcmask 785408
  %v3071 = vsel %vm3070, %v3069, %v3067
  %v3072 = vld [vmem:[%s12] sm:$0xff]
  %v3073 = vld [vmem:[%s12 + $0x8] sm:$0xff]
  %v3074 = vld [vmem:[%s12 + $0x10] sm:$0xff]
  %v3075 = vld [vmem:[%s12 + $0x18] sm:$0xff]
  %v3076 = vld [vmem:[%s12 + $0x20] sm:$0xff]
  %v3077 = vld [vmem:[%s12 + $0x28] sm:$0xff]
  %v3078 = vld [vmem:[%s12 + $0x30] sm:$0xff]
  %v3079 = vld [vmem:[%s12 + $0x38] sm:$0xff]
  %v3080 = vld [vmem:[%s12 + $0x40] sm:$0xff]
  %v3081 = vld [vmem:[%s12 + $0x48] sm:$0xff]
  %v3082 = vld [vmem:[%s12 + $0x50] sm:$0xff]
  %v3083 = vld [vmem:[%s12 + $0x58] sm:$0xff]
  %v3084 = vld [vmem:[%s12 + $0x60] sm:$0xff]
  %v3085 = vld [vmem:[%s12 + $0x68] sm:$0xff]
  %v3086 = vld [vmem:[%s12 + $0x70] sm:$0xff]
  %v3087 = vld [vmem:[%s12 + $0x78] sm:$0xff]
  %v3088 = vld [vmem:[%s13] sm:$0x1]
  %v3090 = vlaneseq
  %v3091 = vshrl.u32 %v3090, 7
  %v3092 = vsub.s32 0, %v3091
  %v3093 = vrot.slane %v3088, %v3092
  %3095 = vmatprep.subr.mxu0 0.0
  %3096 = vmatpush1.msra.mxu0 %v3072
  %3097 = vmatprep.subr.mxu0 0.0
  %3098 = vmatpush1.msra.mxu0 %v3073
  %3099 = vmatprep.subr.mxu0 0.0
  %3100 = vmatpush1.msra.mxu0 %v3074
  %3101 = vmatprep.subr.mxu0 0.0
  %3102 = vmatpush1.msra.mxu0 %v3075
  %3103 = vmatprep.subr.mxu0 0.0
  %3104 = vmatpush1.msra.mxu0 %v3076
  %3105 = vmatprep.subr.mxu0 0.0
  %3106 = vmatpush1.msra.mxu0 %v3077
  %3107 = vmatprep.subr.mxu0 0.0
  %3108 = vmatpush1.msra.mxu0 %v3078
  %3109 = vmatprep.subr.mxu0 0.0
  %3110 = vmatpush1.msra.mxu0 %v3079
  %3111 = vmatprep.subr.mxu0 0.0
  %3112 = vmatpush1.msra.mxu0 %v3080
  %3113 = vmatprep.subr.mxu0 0.0
  %3114 = vmatpush1.msra.mxu0 %v3081
  %3115 = vmatprep.subr.mxu0 0.0
  %3116 = vmatpush1.msra.mxu0 %v3082
  %3117 = vmatprep.subr.mxu0 0.0
  %3118 = vmatpush1.msra.mxu0 %v3083
  %3119 = vmatprep.subr.mxu0 0.0
  %3120 = vmatpush1.msra.mxu0 %v3084
  %3121 = vmatprep.subr.mxu0 0.0
  %3122 = vmatpush1.msra.mxu0 %v3085
  %3123 = vmatprep.subr.mxu0 0.0
  %3124 = vmatpush1.msra.mxu0 %v3086
  %3125 = vmatprep.subr.mxu0 0.0
  %3126 = vmatpush1.msra.mxu0 %v3087
  %3127 = vmatprep.subr.mxu0 0.0
  %3128 = vmatpush1.msra.mxu0 0.0
  %3129 = vmatprep.subr.mxu0 0.0
  %3130 = vmatpush1.msra.mxu0 0.0
  %3131 = vmatprep.subr.mxu0 0.0
  %3132 = vmatpush1.msra.mxu0 0.0
  %3133 = vmatprep.subr.mxu0 0.0
  %3134 = vmatpush1.msra.mxu0 0.0
  %3135 = vmatprep.subr.mxu0 0.0
  %3136 = vmatpush1.msra.mxu0 0.0
  %3137 = vmatprep.subr.mxu0 0.0
  %3138 = vmatpush1.msra.mxu0 0.0
  %3139 = vmatprep.subr.mxu0 0.0
  %3140 = vmatpush1.msra.mxu0 0.0
  %3141 = vmatprep.subr.mxu0 0.0
  %3142 = vmatpush1.msra.mxu0 0.0
  %3143 = vmatprep.subr.mxu0 0.0
  %3144 = vmatpush1.msra.mxu0 0.0
  %3145 = vmatprep.subr.mxu0 0.0
  %3146 = vmatpush1.msra.mxu0 0.0
  %3147 = vmatprep.subr.mxu0 0.0
  %3148 = vmatpush1.msra.mxu0 0.0
  %3149 = vmatprep.subr.mxu0 0.0
  %3150 = vmatpush1.msra.mxu0 0.0
  %3151 = vmatprep.subr.mxu0 0.0
  %3152 = vmatpush1.msra.mxu0 0.0
  %3153 = vmatprep.subr.mxu0 0.0
  %3154 = vmatpush1.msra.mxu0 0.0
  %3155 = vmatprep.subr.mxu0 0.0
  %3156 = vmatpush1.msra.mxu0 0.0
  %3157 = vmatprep.subr.mxu0 0.0
  %3158 = vmatpush1.msra.mxu0 0.0
  %3159 = vmatprep.mubr.f32.mxu0 0.0
  %3160 = vmatmul.mubr.f32.gmra.mrb[0].mxu0 %v3071
  %v3161 = vpop.f32.mrb[0].mxu0
  %v3162 = vadd.f32 %v3093, %v3161
  %v3163 = vpop.f32.mrb[0].mxu0
  %3164 = vdwg.mxu0
  %v3165 = vmax.f32 %v3162, 0.0
  %v3166 = vld [vmem:[%s14] sm:$0x1]
  %v3168 = vlaneseq
  %v3169 = vshrl.u32 %v3168, 7
  %v3170 = vsub.s32 0, %v3169
  %v3171 = vrot.slane %v3166, %v3170
  %v3173 = vmul.f32 %v3165, %v3171
  %v3174 = vld [vmem:[%s15] sm:$0x1]
  %v3176 = vlaneseq
  %v3177 = vshrl.u32 %v3176, 7
  %v3178 = vsub.s32 0, %v3177
  %v3179 = vrot.slane %v3174, %v3178
  %v3181 = vadd.f32 %v3173, %v3179
  %v3182 = vld [vmem:[%s16] sm:$0xff]
  %v3183 = vld [vmem:[%s16 + $0x8] sm:$0xff]
  %v3184 = vld [vmem:[#allocation4] sm:$0x1]
  %v3186 = vlaneseq
  %v3187 = vshrl.u32 %v3186, 7
  %v3188 = vsub.s32 0, %v3187
  %v3189 = vrot.slane %v3184, %v3188
  %vm3191 = vcmask 130048
  %v3193 = vsel %vm3191, %v3181, 0
  %3195 = vmatprep.subr.mxu0 0.0
  %3196 = vmatpush1.msra.mxu0 %v3182
  %3197 = vmatprep.subr.mxu0 0.0
  %3198 = vmatpush1.msra.mxu0 %v3183
  %3199 = vmatprep.subr.mxu0 0.0
  %3200 = vmatpush1.msra.mxu0 0.0
  %3201 = vmatprep.subr.mxu0 0.0
  %3202 = vmatpush1.msra.mxu0 0.0
  %3203 = vmatprep.subr.mxu0 0.0
  %3204 = vmatpush1.msra.mxu0 0.0
  %3205 = vmatprep.subr.mxu0 0.0
  %3206 = vmatpush1.msra.mxu0 0.0
  %3207 = vmatprep.subr.mxu0 0.0
  %3208 = vmatpush1.msra.mxu0 0.0
  %3209 = vmatprep.subr.mxu0 0.0
  %3210 = vmatpush1.msra.mxu0 0.0
  %3211 = vmatprep.subr.mxu0 0.0
  %3212 = vmatpush1.msra.mxu0 0.0
  %3213 = vmatprep.subr.mxu0 0.0
  %3214 = vmatpush1.msra.mxu0 0.0
  %3215 = vmatprep.subr.mxu0 0.0
  %3216 = vmatpush1.msra.mxu0 0.0
  %3217 = vmatprep.subr.mxu0 0.0
  %3218 = vmatpush1.msra.mxu0 0.0
  %3219 = vmatprep.subr.mxu0 0.0
  %3220 = vmatpush1.msra.mxu0 0.0
  %3221 = vmatprep.subr.mxu0 0.0
  %3222 = vmatpush1.msra.mxu0 0.0
  %3223 = vmatprep.subr.mxu0 0.0
  %3224 = vmatpush1.msra.mxu0 0.0
  %3225 = vmatprep.subr.mxu0 0.0
  %3226 = vmatpush1.msra.mxu0 0.0
  %3227 = vmatprep.subr.mxu0 0.0
  %3228 = vmatpush1.msra.mxu0 0.0
  %3229 = vmatprep.subr.mxu0 0.0
  %3230 = vmatpush1.msra.mxu0 0.0
  %3231 = vmatprep.subr.mxu0 0.0
  %3232 = vmatpush1.msra.mxu0 0.0
  %3233 = vmatprep.subr.mxu0 0.0
  %3234 = vmatpush1.msra.mxu0 0.0
  %3235 = vmatprep.subr.mxu0 0.0
  %3236 = vmatpush1.msra.mxu0 0.0
  %3237 = vmatprep.subr.mxu0 0.0
  %3238 = vmatpush1.msra.mxu0 0.0
  %3239 = vmatprep.subr.mxu0 0.0
  %3240 = vmatpush1.msra.mxu0 0.0
  %3241 = vmatprep.subr.mxu0 0.0
  %3242 = vmatpush1.msra.mxu0 0.0
  %3243 = vmatprep.subr.mxu0 0.0
  %3244 = vmatpush1.msra.mxu0 0.0
  %3245 = vmatprep.subr.mxu0 0.0
  %3246 = vmatpush1.msra.mxu0 0.0
  %3247 = vmatprep.subr.mxu0 0.0
  %3248 = vmatpush1.msra.mxu0 0.0
  %3249 = vmatprep.subr.mxu0 0.0
  %3250 = vmatpush1.msra.mxu0 0.0
  %3251 = vmatprep.subr.mxu0 0.0
  %3252 = vmatpush1.msra.mxu0 0.0
  %3253 = vmatprep.subr.mxu0 0.0
  %3254 = vmatpush1.msra.mxu0 0.0
  %3255 = vmatprep.subr.mxu0 0.0
  %3256 = vmatpush1.msra.mxu0 0.0
  %3257 = vmatprep.subr.mxu0 0.0
  %3258 = vmatpush1.msra.mxu0 0.0
  %3259 = vmatprep.mubr.f32.mxu0 0.0
  %3260 = vmatmul.mubr.f32.gmra.mrb[0].mxu0 %v3193
  %v3261 = vpop.f32.mrb[0].mxu0
  %v3262 = vadd.f32 %v3189, %v3261
  %v3263 = vpop.f32.mrb[0].mxu0
  %3264 = vdwg.mxu0
  %vm3265 = vcmask 7168
  %3266 = vst.msk [vmem:[%s18] sm:$0xff] %vm3265, %v3262
  // Predicated region
  $region74: #{forward.1} parent=0 // pred_check
    _
  $region75: #{forward.1} parent=0 // pred_check_branch
    %3268 = sbr.rel (0) target = $region77
  $region76: #{forward.1} parent=0 // pred_region
    _
  $region77: #{forward.1} parent=0 // pred_fallthru
    _
  // Predicated region
  $region78: #{forward.1} parent=0 // pred_check
    _
  $region79: #{forward.1} parent=0 // pred_check_branch
    %3270 = sbr.rel (0) target = $region81
  $region80: #{forward.1} parent=0 // pred_region
    _
  $region81: #{forward.1} parent=0 // pred_fallthru
    _

</llo_original>
